<compile_context>
chip_gen: v5e
topology: v5e:2x2
jax: 0.10.0
libtpu: 0.0.40
codegen_flags: <defaults>
</compile_context>

<pallas_src>
import functools

import jax
import jax.numpy as jnp
from jax.experimental import pallas as pl
from jax.experimental.pallas import tpu as pltpu


def _round_up(x, m):
    return ((x + m - 1) // m) * m


def biaffine_kernel(x1_ref, x2_ref, w_ref, b_ref, s_ref, o_ref, *, out_features):
    """Fused biaffine + sigmoid for one batch tile.

    x1_ref: (TB, in1)             activations (f32 or bf16, MXU operand)
    x2_ref: (TB, d2_pad)          f32, [input2 | 1 (if bias[1]) | zeros]
    w_ref : (in1, out*d2_pad)     weight (f32 or bf16, MXU operand)
    b_ref : (1, out*d2_pad)       f32 bias row (x1-ones column folded out of U)
    s_ref : (out*d2_pad, out)     f32 0/1 block-selection matrix (lane reduce)
    o_ref : (TB, out)             f32 output
    """
    # MXU: affine = x1 @ W, f32 accumulation regardless of operand dtype.
    t = jnp.dot(x1_ref[...], w_ref[...], preferred_element_type=jnp.float32)
    t = t + b_ref[...]                                        # VPU broadcast add
    # Replicate x2 across the out_features lane blocks (whole-vreg copies:
    # each piece is exactly 128-lane aligned), then weight the affine terms.
    x2 = x2_ref[...]                                          # (TB, d2_pad) f32
    x2_tiled = jnp.concatenate([x2] * out_features, axis=1)   # (TB, out*d2_pad)
    p = t * x2_tiled                                          # VPU
    # MXU: reduce each 128-lane block o down to score[:, o] via the 0/1 selector
    # (avoids the 3-D reshape relayout and the XLU cross-lane reduce).
    score = jnp.dot(p, s_ref[...], preferred_element_type=jnp.float32)
    o_ref[...] = jax.nn.sigmoid(score)                        # EUP


def biaffine_forward(input1, input2, U, out_features, bias=(True, True, True),
                     *, block_b=256, mxu_dtype=jnp.float32):
    """Pallas implementation of Biaffine.forward.

    input1: (B, in1_features) f32
    input2: (B, in2_features) f32
    U     : (out_features * (in2_features + bias[1]), in1_features + bias[0]) f32
            (== torch self.linear.weight)
    returns (B, out_features) f32
    """
    f32 = jnp.float32
    B, in1 = input1.shape
    _, in2 = input2.shape
    d1p = in1 + int(bias[0])
    d2p = in2 + int(bias[1])
    assert U.shape == (out_features * d2p, d1p), U.shape
    # TODO(synk): bias[2] only pads the unused `input3` (feeding the unused
    # linear_1/linear_2); it has no effect on the forward output, so it is
    # intentionally not computed.

    d2_pad = _round_up(d2p, 128)
    n = out_features * d2_pad

    # U[o*d2p + j, i]  ->  U2[i, o*d2_pad + j]   (zero-padded for j >= d2p)
    u_r = U.astype(f32).reshape(out_features, d2p, d1p)
    u_r = jnp.pad(u_r, ((0, 0), (0, d2_pad - d2p), (0, 0)))
    u2 = jnp.transpose(u_r, (2, 0, 1)).reshape(d1p, n)
    if bias[0]:
        w = u2[:in1]                  # (in1, n)   rows for real x1 features
        b_row = u2[in1:in1 + 1]       # (1, n)     x1-ones column folded to a bias row
    else:
        w = u2                        # (in1, n)   (d1p == in1)
        b_row = jnp.zeros((1, n), f32)

    x1 = input1.astype(mxu_dtype)
    w = w.astype(mxu_dtype)
    b_row = b_row.astype(f32)

    # x2 padded to a 128-lane-aligned width: [input2 | 1 (bias[1]) | zeros].
    parts = [input2.astype(f32)]
    if bias[1]:
        parts.append(jnp.ones((B, 1), f32))
    if d2_pad > d2p:
        parts.append(jnp.zeros((B, d2_pad - d2p), f32))
    x2p = jnp.concatenate(parts, axis=1)                      # (B, d2_pad)

    # Constant 0/1 selector: sel[o*d2_pad + j, o'] = (o == o').
    sel = jnp.repeat(jnp.eye(out_features, dtype=f32), d2_pad, axis=0)  # (n, out)

    tb = B if B <= block_b else block_b
    grid = (pl.cdiv(B, tb),)

    kernel = functools.partial(biaffine_kernel, out_features=out_features)

    return pl.pallas_call(
        kernel,
        out_shape=jax.ShapeDtypeStruct((B, out_features), f32),
        grid=grid,
        in_specs=[
            pl.BlockSpec((tb, in1), lambda i: (i, 0)),         # x1 tile (pipelined)
            pl.BlockSpec((tb, d2_pad), lambda i: (i, 0)),      # x2 tile (pipelined)
            pl.BlockSpec((in1, n), lambda i: (0, 0)),          # weight, VMEM-resident
            pl.BlockSpec((1, n), lambda i: (0, 0)),            # bias row, VMEM-resident
            pl.BlockSpec((n, out_features), lambda i: (0, 0)), # selector, VMEM-resident
        ],
        out_specs=pl.BlockSpec((tb, out_features), lambda i: (i, 0)),
        compiler_params=pltpu.CompilerParams(
            dimension_semantics=("parallel",)),
    )(x1, x2p, w, b_row, sel)


def biaffine_reference(input1, input2, U, out_features, bias=(True, True, True)):
    """Pure-JAX reference mirroring the PyTorch forward exactly."""
    B, _ = input1.shape
    x1 = input1
    x2 = input2
    if bias[0]:
        x1 = jnp.concatenate([x1, jnp.ones((B, 1), jnp.float32)], axis=1)
    if bias[1]:
        x2 = jnp.concatenate([x2, jnp.ones((B, 1), jnp.float32)], axis=1)
    d2p = x2.shape[1]
    affine = x1 @ U.T                               # (B, out*d2p)
    affine = affine.reshape(B, out_features, d2p)   # view(B, out, dim2)
    score = jnp.einsum("boj,bj->bo", affine, x2)    # transpose(bmm(affine, x2^T))
    return jax.nn.sigmoid(score)


if __name__ == "__main__":
    # Small shapes consistent with the module (vectors per batch element); a
    # batch big enough to exercise the multi-step pipelined grid (2 steps).
    B = 512
    in1_features = 32
    in2_features = 32
    out_features = 8
    bias = (True, True, True)

    key = jax.random.PRNGKey(0)
    k1, k2, k3 = jax.random.split(key, 3)

    input1 = jax.random.normal(k1, (B, in1_features), dtype=jnp.float32)
    input2 = jax.random.normal(k2, (B, in2_features), dtype=jnp.float32)

    # Parameter shape from __init__.  NOTE: reset_parameters() zero-inits U
    # (trivial all-0.5 output); use deterministic random values instead so the
    # kernel is exercised.  linear_1 / linear_2 weights are unused in forward.
    linear_input_size = in1_features + int(bias[0])
    linear_output_size = out_features * (in2_features + int(bias[1]))
    U = 0.1 * jax.random.normal(
        k3, (linear_output_size, linear_input_size), dtype=jnp.float32)

    ref = biaffine_reference(input1, input2, U, out_features, bias)

    # f32 path (exact vs reference).
    out = jax.block_until_ready(
        biaffine_forward(input1, input2, U, out_features, bias, block_b=256))
    assert out.shape == (B, out_features), out.shape
    assert jnp.allclose(out, ref, atol=1e-5, rtol=1e-5), ("f32 mismatch", out, ref)

    # bf16 MXU operands (v5e/v6e HBM-traffic optimization); f32 accumulation,
    # f32 elementwise / reduction matmul / sigmoid.  Looser tolerance for the
    # bf16 matmul inputs.
    out_bf16 = jax.block_until_ready(
        biaffine_forward(input1, input2, U, out_features, bias,
                         block_b=256, mxu_dtype=jnp.bfloat16))
    assert jnp.allclose(out_bf16, ref, atol=3e-2, rtol=0.0), ("bf16 mismatch",)

    print("KERNEL_OK")
</pallas_src>

<mosaic_0001>
module attributes {stable_mosaic.version = 11 : i64} {
  func.func @biaffine_kernel(%arg0: i32, %arg1: memref<256x32xf32, #tpu.memory_space<vmem>>, %arg2: memref<256x128xf32, #tpu.memory_space<vmem>>, %arg3: memref<32x1024xf32, #tpu.memory_space<vmem>>, %arg4: memref<1x1024xf32, #tpu.memory_space<vmem>>, %arg5: memref<1024x8xf32, #tpu.memory_space<vmem>>, %arg6: memref<256x8xf32, #tpu.memory_space<vmem>>) attributes {dimension_semantics = [#tpu.dimension_semantics<parallel>], iteration_bounds = array<i64: 2>, scalar_prefetch = 0 : i64, scratch_operands = 0 : i64, tpu.core_type = #tpu.core_type<tc>, window_params = [{transform_indices = @transform_0, window_bounds = array<i64: 256, 32>}, {transform_indices = @transform_1, window_bounds = array<i64: 256, 128>}, {pipeline_mode = #tpu.pipeline_mode<synchronous>, transform_indices = @transform_2, window_bounds = array<i64: 32, 1024>}, {pipeline_mode = #tpu.pipeline_mode<synchronous>, transform_indices = @transform_3, window_bounds = array<i64: 1, 1024>}, {pipeline_mode = #tpu.pipeline_mode<synchronous>, transform_indices = @transform_4, window_bounds = array<i64: 1024, 8>}, {transform_indices = @transform_5, window_bounds = array<i64: 256, 8>}]} {
    %c0 = arith.constant 0 : index
    %c0_0 = arith.constant 0 : index
    %0 = vector.load %arg1[%c0, %c0_0] : memref<256x32xf32, #tpu.memory_space<vmem>>, vector<256x32xf32>
    %c0_1 = arith.constant 0 : index
    %c0_2 = arith.constant 0 : index
    %1 = vector.load %arg3[%c0_1, %c0_2] : memref<32x1024xf32, #tpu.memory_space<vmem>>, vector<32x1024xf32>
    %cst = arith.constant dense<0.000000e+00> : vector<256x1024xf32>
    %2 = tpu.matmul %0, %1, %cst {dimension_numbers = #tpu.dot_dimension_numbers<[1], [0], [0], [1], [0, 0, 1, 1], [], []>} : vector<256x32xf32>, vector<32x1024xf32>, vector<256x1024xf32> -> vector<256x1024xf32>
    %c0_3 = arith.constant 0 : index
    %c0_4 = arith.constant 0 : index
    %3 = vector.load %arg4[%c0_3, %c0_4] : memref<1x1024xf32, #tpu.memory_space<vmem>>, vector<1x1024xf32>
    %4 = vector.broadcast %3 : vector<1x1024xf32> to vector<256x1024xf32>
    %5 = arith.addf %2, %4 : vector<256x1024xf32>
    %c0_5 = arith.constant 0 : index
    %c0_6 = arith.constant 0 : index
    %6 = vector.load %arg2[%c0_5, %c0_6] : memref<256x128xf32, #tpu.memory_space<vmem>>, vector<256x128xf32>
    %7 = tpu.concatenate %6, %6, %6, %6, %6, %6, %6, %6 in 1 : vector<256x128xf32>, vector<256x128xf32>, vector<256x128xf32>, vector<256x128xf32>, vector<256x128xf32>, vector<256x128xf32>, vector<256x128xf32>, vector<256x128xf32> -> vector<256x1024xf32>
    %8 = arith.mulf %5, %7 : vector<256x1024xf32>
    %c0_7 = arith.constant 0 : index
    %c0_8 = arith.constant 0 : index
    %9 = vector.load %arg5[%c0_7, %c0_8] : memref<1024x8xf32, #tpu.memory_space<vmem>>, vector<1024x8xf32>
    %cst_9 = arith.constant dense<0.000000e+00> : vector<256x8xf32>
    %10 = tpu.matmul %8, %9, %cst_9 {dimension_numbers = #tpu.dot_dimension_numbers<[1], [0], [0], [1], [0, 0, 1, 1], [], []>} : vector<256x1024xf32>, vector<1024x8xf32>, vector<256x8xf32> -> vector<256x8xf32>
    %11 = arith.negf %10 : vector<256x8xf32>
    %12 = math.exp %11 : vector<256x8xf32>
    %cst_10 = arith.constant 1.000000e+00 : f32
    %13 = vector.broadcast %cst_10 : f32 to vector<256x8xf32>
    %14 = arith.addf %13, %12 : vector<256x8xf32>
    %15 = arith.divf %13, %14 : vector<256x8xf32>
    %c0_11 = arith.constant 0 : index
    %c0_12 = arith.constant 0 : index
    %16 = vector.load %arg6[%c0_11, %c0_12] : memref<256x8xf32, #tpu.memory_space<vmem>>, vector<256x8xf32>
    tpu.vector_store %arg6[%c0_11, %c0_12], %15 {strides = array<i32>} : memref<256x8xf32, #tpu.memory_space<vmem>>, vector<256x8xf32>,
    return
  }
  func.func @transform_0(%arg0: i32) -> (i32, i32) {
    %c0_i32 = arith.constant 0 : i32
    %c0_i32_0 = arith.constant 0 : i32
    return %arg0, %c0_i32 : i32, i32
  }
  func.func @transform_1(%arg0: i32) -> (i32, i32) {
    %c0_i32 = arith.constant 0 : i32
    %c0_i32_0 = arith.constant 0 : i32
    return %arg0, %c0_i32 : i32, i32
  }
  func.func @transform_2(%arg0: i32) -> (i32, i32) {
    %c0_i32 = arith.constant 0 : i32
    %c0_i32_0 = arith.constant 0 : i32
    %c0_i32_1 = arith.constant 0 : i32
    return %c0_i32, %c0_i32_0 : i32, i32
  }
  func.func @transform_3(%arg0: i32) -> (i32, i32) {
    %c0_i32 = arith.constant 0 : i32
    %c0_i32_0 = arith.constant 0 : i32
    %c0_i32_1 = arith.constant 0 : i32
    return %c0_i32, %c0_i32_0 : i32, i32
  }
  func.func @transform_4(%arg0: i32) -> (i32, i32) {
    %c0_i32 = arith.constant 0 : i32
    %c0_i32_0 = arith.constant 0 : i32
    %c0_i32_1 = arith.constant 0 : i32
    return %c0_i32, %c0_i32_0 : i32, i32
  }
  func.func @transform_5(%arg0: i32) -> (i32, i32) {
    %c0_i32 = arith.constant 0 : i32
    %c0_i32_0 = arith.constant 0 : i32
    return %arg0, %c0_i32 : i32, i32
  }
}

</mosaic_0001>

<llo_original>
// kernel: tpu_custom_call.1
$region0: #{tpu_custom_call.1}
  #allocation0 [shape = 'u32[]', space=smem, size = 0x4, offset = 0x4, fixed_abs, tag = 'smem constant byte address 0x4 - core index']
  #allocation1 [shape = 'u32[72,128]{1,0:T(1,128)}', space=vmem, size = 0x9000, scoped, tag = 'internal scratch']
  %s0 = inlined_call_operand.vmem [shape: f32[512,32], index: 0, kind: input, shape index: {}]
  %s1 = inlined_call_operand.vmem [shape: f32[512,128], index: 1, kind: input, shape index: {}]
  %s2 = inlined_call_operand.vmem [shape: f32[32,1024], index: 2, kind: input, shape index: {}]
  %s3 = inlined_call_operand.vmem [shape: f32[1,1024], index: 3, kind: input, shape index: {}]
  %s4 = inlined_call_operand.vmem [shape: f32[1024,8], index: 4, kind: input, shape index: {}]
  %s5 = inlined_call_operand.vmem [shape: f32[512,8], index: 5, kind: output, shape index: {}]
  %s6 = sld [smem:[#allocation0]]
  $region53: #{tpu_custom_call.1} parent=0
    _
  %s8 = ssub.s32 1, %s6
  %s9 = scalar_select 0, %s8, %s6
  loop: start=0, step=1, limit=4
  $region2: #{tpu_custom_call.1} parent=0 // loop_pre_header
    _
  $region3: #{tpu_custom_call.1} parent=0 // loop_header
    %s11 = sphi 0, %s15
    %p12 = scmp.ge.s32.totalorder %s11, 4
    %s21 = sphi 0, %s23
    %s24 = sphi 0, %s21
    %s25 = sphi 0, %s24
    %s41 = sphi 0, %s25
    %s47 = sphi 0, %s49
    %s50 = sphi 0, %s47
    %s51 = sphi 0, %s50
    %s67 = sphi 0, %s51
    %s71 = sphi 0, %s71
    %s73 = sphi 0, %s71
    %s74 = sphi 0, %s73
    %s88 = sphi 0, %s74
    %s92 = sphi 0, %s92
    %s94 = sphi 0, %s92
    %s95 = sphi 0, %s94
    %s109 = sphi 0, %s95
    %s113 = sphi 0, %s113
    %s115 = sphi 0, %s113
    %s116 = sphi 0, %s115
    %s130 = sphi 0, %s116
    %s136 = sphi 0, %s138
    %s139 = sphi 0, %s136
    %s140 = sphi 0, %s139
    %s156 = sphi 0, %s140
  $region4: #{tpu_custom_call.1} parent=0 // loop_header_branch
    %14 = sbr.rel (%p12) target = $region8
  $region5: #{tpu_custom_call.1} parent=0 // loop_body
    %s16 = ssub.s32 %s11, 1
    %s17 = ssub.s32 %s11, 2
    %s18 = sadd.s32 %s11, 1
    %s19 = ssub.s32 %s11, %s18
    %p20 = scmp.eq.s32.totalorder %s19, 0
    %s22 = sadd.s32 %s21, 1
    %s23 = scalar_select %p20, %s21, %s22
    %p26 = pneg %p20
    %p27 = scmp.eq.s32.totalorder %s11, 1
    %p28 = por %p26, %p27
    %p29 = scmp.ne.s32.totalorder %s21, %s24
    %p30 = scmp.eq.s32.totalorder %s11, 0
    %p31 = por %p29, %p30
    %p32 = scmp.ne.s32.totalorder %s21, %s24
    %p33 = scmp.eq.s32.totalorder %s16, 1
    %p34 = por %p32, %p33
    %p35 = scmp.ne.s32.totalorder %s24, %s25
    %p36 = scmp.eq.s32.totalorder %s16, 0
    %p37 = por %p35, %p36
    %p38 = scmp.ne.s32.totalorder %s24, %s25
    %p39 = scmp.eq.s32.totalorder %s17, 1
    %p40 = por %p38, %p39
    %p42 = scmp.ne.s32.totalorder %s25, %s41
    %p43 = scmp.eq.s32.totalorder %s17, 0
    %p44 = por %p42, %p43
    %s45 = ssub.s32 %s11, %s18
    %p46 = scmp.eq.s32.totalorder %s45, 0
    %s48 = sadd.s32 %s47, 1
    %s49 = scalar_select %p46, %s47, %s48
    %p52 = pneg %p46
    %p53 = scmp.eq.s32.totalorder %s11, 1
    %p54 = por %p52, %p53
    %p55 = scmp.ne.s32.totalorder %s47, %s50
    %p56 = scmp.eq.s32.totalorder %s11, 0
    %p57 = por %p55, %p56
    %p58 = scmp.ne.s32.totalorder %s47, %s50
    %p59 = scmp.eq.s32.totalorder %s16, 1
    %p60 = por %p58, %p59
    %p61 = scmp.ne.s32.totalorder %s50, %s51
    %p62 = scmp.eq.s32.totalorder %s16, 0
    %p63 = por %p61, %p62
    %p64 = scmp.ne.s32.totalorder %s50, %s51
    %p65 = scmp.eq.s32.totalorder %s17, 1
    %p66 = por %p64, %p65
    %p68 = scmp.ne.s32.totalorder %s51, %s67
    %p69 = scmp.eq.s32.totalorder %s17, 0
    %p70 = por %p68, %p69
    %s72 = sadd.s32 %s71, 1
    %p75 = scmp.eq.s32.totalorder %s11, 1
    %p76 = scmp.ne.s32.totalorder %s71, %s73
    %p77 = scmp.eq.s32.totalorder %s11, 0
    %p78 = por %p76, %p77
    %p79 = scmp.ne.s32.totalorder %s71, %s73
    %p80 = scmp.eq.s32.totalorder %s16, 1
    %p81 = por %p79, %p80
    %p82 = scmp.ne.s32.totalorder %s73, %s74
    %p83 = scmp.eq.s32.totalorder %s16, 0
    %p84 = por %p82, %p83
    %p85 = scmp.ne.s32.totalorder %s73, %s74
    %p86 = scmp.eq.s32.totalorder %s17, 1
    %p87 = por %p85, %p86
    %p89 = scmp.ne.s32.totalorder %s74, %s88
    %p90 = scmp.eq.s32.totalorder %s17, 0
    %p91 = por %p89, %p90
    %s93 = sadd.s32 %s92, 1
    %p96 = scmp.eq.s32.totalorder %s11, 1
    %p97 = scmp.ne.s32.totalorder %s92, %s94
    %p98 = scmp.eq.s32.totalorder %s11, 0
    %p99 = por %p97, %p98
    %p100 = scmp.ne.s32.totalorder %s92, %s94
    %p101 = scmp.eq.s32.totalorder %s16, 1
    %p102 = por %p100, %p101
    %p103 = scmp.ne.s32.totalorder %s94, %s95
    %p104 = scmp.eq.s32.totalorder %s16, 0
    %p105 = por %p103, %p104
    %p106 = scmp.ne.s32.totalorder %s94, %s95
    %p107 = scmp.eq.s32.totalorder %s17, 1
    %p108 = por %p106, %p107
    %p110 = scmp.ne.s32.totalorder %s95, %s109
    %p111 = scmp.eq.s32.totalorder %s17, 0
    %p112 = por %p110, %p111
    %s114 = sadd.s32 %s113, 1
    %p117 = scmp.eq.s32.totalorder %s11, 1
    %p118 = scmp.ne.s32.totalorder %s113, %s115
    %p119 = scmp.eq.s32.totalorder %s11, 0
    %p120 = por %p118, %p119
    %p121 = scmp.ne.s32.totalorder %s113, %s115
    %p122 = scmp.eq.s32.totalorder %s16, 1
    %p123 = por %p121, %p122
    %p124 = scmp.ne.s32.totalorder %s115, %s116
    %p125 = scmp.eq.s32.totalorder %s16, 0
    %p126 = por %p124, %p125
    %p127 = scmp.ne.s32.totalorder %s115, %s116
    %p128 = scmp.eq.s32.totalorder %s17, 1
    %p129 = por %p127, %p128
    %p131 = scmp.ne.s32.totalorder %s116, %s130
    %p132 = scmp.eq.s32.totalorder %s17, 0
    %p133 = por %p131, %p132
    %s134 = ssub.s32 %s11, %s18
    %p135 = scmp.eq.s32.totalorder %s134, 0
    %s137 = sadd.s32 %s136, 1
    %s138 = scalar_select %p135, %s136, %s137
    %p141 = pneg %p135
    %p142 = scmp.eq.s32.totalorder %s11, 1
    %p143 = por %p141, %p142
    %p144 = scmp.ne.s32.totalorder %s136, %s139
    %p145 = scmp.eq.s32.totalorder %s11, 0
    %p146 = por %p144, %p145
    %p147 = scmp.ne.s32.totalorder %s136, %s139
    %p148 = scmp.eq.s32.totalorder %s16, 1
    %p149 = por %p147, %p148
    %p150 = scmp.ne.s32.totalorder %s139, %s140
    %p151 = scmp.eq.s32.totalorder %s16, 0
    %p152 = por %p150, %p151
    %p153 = scmp.ne.s32.totalorder %s139, %s140
    %p154 = scmp.eq.s32.totalorder %s17, 1
    %p155 = por %p153, %p154
    %p157 = scmp.ne.s32.totalorder %s140, %s156
    %p158 = scmp.eq.s32.totalorder %s17, 0
    %p159 = por %p157, %p158
    %p160 = scmp.le.s32.totalorder 1, %s11
    %p161 = scmp.lt.s32.totalorder %s11, 3
    %p162 = pnand %p160, %p161
    %p163 = pneg %p162
    // Predicated region
    $region9: #{tpu_custom_call.1} parent=5 // pred_check
      _
    $region10: #{tpu_custom_call.1} parent=5 // pred_check_branch
      %165 = sbr.rel (%p162) target = $region12
    $region11: #{tpu_custom_call.1} parent=5 // pred_region
      %s166 = ssub.s32 %s11, 1
      // Predicated region
      $region13: #{tpu_custom_call.1} parent=11 // pred_check
        %p167 = pneg %p84
      $region14: #{tpu_custom_call.1} parent=11 // pred_check_branch
        %169 = sbr.rel (%p167) target = $region16
      $region15: #{tpu_custom_call.1} parent=11 // pred_region
        _
      $region16: #{tpu_custom_call.1} parent=11 // pred_fallthru
        _
      // Predicated region
      $region17: #{tpu_custom_call.1} parent=11 // pred_check
        %p170 = pneg %p105
      $region18: #{tpu_custom_call.1} parent=11 // pred_check_branch
        %172 = sbr.rel (%p170) target = $region20
      $region19: #{tpu_custom_call.1} parent=11 // pred_region
        _
      $region20: #{tpu_custom_call.1} parent=11 // pred_fallthru
        _
      // Predicated region
      $region21: #{tpu_custom_call.1} parent=11 // pred_check
        %p173 = pneg %p126
      $region22: #{tpu_custom_call.1} parent=11 // pred_check_branch
        %175 = sbr.rel (%p173) target = $region24
      $region23: #{tpu_custom_call.1} parent=11 // pred_region
        _
      $region24: #{tpu_custom_call.1} parent=11 // pred_fallthru
        _
    $region12: #{tpu_custom_call.1} parent=5 // pred_fallthru
      _
    %p176 = scmp.lt.s32.totalorder %s11, 2
    // Predicated region
    $region25: #{tpu_custom_call.1} parent=5 // pred_check
      %p177 = pneg %p176
    $region26: #{tpu_custom_call.1} parent=5 // pred_check_branch
      %179 = sbr.rel (%p177) target = $region28
    $region27: #{tpu_custom_call.1} parent=5 // pred_region
      // Predicated region
      $region29: #{tpu_custom_call.1} parent=27 // pred_check
        %p180 = pneg %p31
      $region30: #{tpu_custom_call.1} parent=27 // pred_check_branch
        %182 = sbr.rel (%p180) target = $region32
      $region31: #{tpu_custom_call.1} parent=27 // pred_region
        %s183 = smul.u32 32, %s11
        %p184 = scmp.lt.s32.totalorder %s183, 63
        %s185 = scalar_select %p184, %s183, 63
        %s186 = smul.addr %s185, 8
        %s187 = scalar_lea.vmem %s0, %s186
        %s188 = smul.u32 32, %s11
      $region32: #{tpu_custom_call.1} parent=27 // pred_fallthru
        _
      // Predicated region
      $region33: #{tpu_custom_call.1} parent=27 // pred_check
        %p189 = pneg %p57
      $region34: #{tpu_custom_call.1} parent=27 // pred_check_branch
        %191 = sbr.rel (%p189) target = $region36
      $region35: #{tpu_custom_call.1} parent=27 // pred_region
        %s192 = smul.u32 32, %s11
        %p193 = scmp.lt.s32.totalorder %s192, 63
        %s194 = scalar_select %p193, %s192, 63
        %s195 = smul.addr %s194, 8
        %s196 = scalar_lea.vmem %s1, %s195
        %s197 = smul.u32 32, %s11
      $region36: #{tpu_custom_call.1} parent=27 // pred_fallthru
        _
    $region28: #{tpu_custom_call.1} parent=5 // pred_fallthru
      _
    %p198 = scmp.le.s32.totalorder 1, %s11
    %p199 = scmp.lt.s32.totalorder %s11, 3
    %p200 = pnand %p198, %p199
    %p201 = pneg %p200
    // Predicated region
    $region37: #{tpu_custom_call.1} parent=5 // pred_check
      _
    $region38: #{tpu_custom_call.1} parent=5 // pred_check_branch
      %203 = sbr.rel (%p200) target = $region40
    $region39: #{tpu_custom_call.1} parent=5 // pred_region
      %s204 = ssub.s32 %s11, 1
      %s205 = smul.u32 32, %s16
      %p206 = scmp.lt.s32.totalorder %s205, 63
      %s207 = scalar_select %p206, %s205, 63
      %s208 = smul.addr %s207, 8
      %s209 = scalar_lea.vmem %s0, %s208
      %p210 = pneg %p37
      %p211 = pneg %p34
      %s212 = smul.u32 32, %s16
      %p213 = scmp.lt.s32.totalorder %s212, 63
      %s214 = scalar_select %p213, %s212, 63
      %s215 = smul.addr %s214, 8
      %s216 = scalar_lea.vmem %s1, %s215
      %p217 = pneg %p63
      %p218 = pneg %p60
      %p219 = pneg %p84
      %p220 = pneg %p81
      %p221 = pneg %p105
      %p222 = pneg %p102
      %p223 = pneg %p126
      %p224 = pneg %p123
      %p225 = pneg %p152
      %p226 = pneg %p149
      %s227 = smul.u32 32, %s16
      %p228 = scmp.lt.s32.totalorder %s227, 63
      %s229 = scalar_select %p228, %s227, 63
      %s230 = smul.addr %s229, 8
      %s231 = scalar_lea.vmem %s5, %s230
      %s232 = smul.u32 32, %s16
      %p233 = scmp.lt.s32.totalorder %s232, 63
      %s234 = scalar_select %p233, %s232, 63
      %s235 = smul.addr %s234, 8
      %s236 = scalar_lea.vmem %s0, %s235
      %s237 = smul.u32 32, %s16
      %s238 = smul.u32 32, %s16
      %p239 = scmp.lt.s32.totalorder %s238, 63
      %s240 = scalar_select %p239, %s238, 63
      %s241 = smul.addr %s240, 8
      %s242 = scalar_lea.vmem %s1, %s241
      %s243 = smul.u32 32, %s16
      %s244 = smul.u32 32, %s16
      %p245 = scmp.lt.s32.totalorder %s244, 63
      %s246 = scalar_select %p245, %s244, 63
      %s247 = smul.addr %s246, 8
      %s248 = scalar_lea.vmem %s5, %s247
      %s249 = smul.u32 32, %s16
      %v250 = vld [vmem:[%s236] sm:$0xff]
      %v251 = vld [vmem:[%s236 + $0x8] sm:$0xff]
      %v252 = vld [vmem:[%s236 + $0x10] sm:$0xff]
      %v253 = vld [vmem:[%s236 + $0x18] sm:$0xff]
      %v254 = vld [vmem:[%s236 + $0x20] sm:$0xff]
      %v255 = vld [vmem:[%s236 + $0x28] sm:$0xff]
      %v256 = vld [vmem:[%s236 + $0x30] sm:$0xff]
      %v257 = vld [vmem:[%s236 + $0x38] sm:$0xff]
      %v258 = vld [vmem:[%s236 + $0x40] sm:$0xff]
      %v259 = vld [vmem:[%s236 + $0x48] sm:$0xff]
      %v260 = vld [vmem:[%s236 + $0x50] sm:$0xff]
      %v261 = vld [vmem:[%s236 + $0x58] sm:$0xff]
      %v262 = vld [vmem:[%s236 + $0x60] sm:$0xff]
      %v263 = vld [vmem:[%s236 + $0x68] sm:$0xff]
      %v264 = vld [vmem:[%s236 + $0x70] sm:$0xff]
      %v265 = vld [vmem:[%s236 + $0x78] sm:$0xff]
      %v266 = vld [vmem:[%s236 + $0x80] sm:$0xff]
      %v267 = vld [vmem:[%s236 + $0x88] sm:$0xff]
      %v268 = vld [vmem:[%s236 + $0x90] sm:$0xff]
      %v269 = vld [vmem:[%s236 + $0x98] sm:$0xff]
      %v270 = vld [vmem:[%s236 + $0xa0] sm:$0xff]
      %v271 = vld [vmem:[%s236 + $0xa8] sm:$0xff]
      %v272 = vld [vmem:[%s236 + $0xb0] sm:$0xff]
      %v273 = vld [vmem:[%s236 + $0xb8] sm:$0xff]
      %v274 = vld [vmem:[%s236 + $0xc0] sm:$0xff]
      %v275 = vld [vmem:[%s236 + $0xc8] sm:$0xff]
      %v276 = vld [vmem:[%s236 + $0xd0] sm:$0xff]
      %v277 = vld [vmem:[%s236 + $0xd8] sm:$0xff]
      %v278 = vld [vmem:[%s236 + $0xe0] sm:$0xff]
      %v279 = vld [vmem:[%s236 + $0xe8] sm:$0xff]
      %v280 = vld [vmem:[%s236 + $0xf0] sm:$0xff]
      %v281 = vld [vmem:[%s236 + $0xf8] sm:$0xff]
      %v282 = vld [vmem:[%s2] sm:$0xff]
      %v283 = vld [vmem:[%s2 + $0x8] sm:$0xff]
      %v284 = vld [vmem:[%s2 + $0x10] sm:$0xff]
      %v285 = vld [vmem:[%s2 + $0x18] sm:$0xff]
      %v286 = vld [vmem:[%s2 + $0x20] sm:$0xff]
      %v287 = vld [vmem:[%s2 + $0x28] sm:$0xff]
      %v288 = vld [vmem:[%s2 + $0x30] sm:$0xff]
      %v289 = vld [vmem:[%s2 + $0x38] sm:$0xff]
      %v290 = vld [vmem:[%s2 + $0x40] sm:$0xff]
      %v291 = vld [vmem:[%s2 + $0x48] sm:$0xff]
      %v292 = vld [vmem:[%s2 + $0x50] sm:$0xff]
      %v293 = vld [vmem:[%s2 + $0x58] sm:$0xff]
      %v294 = vld [vmem:[%s2 + $0x60] sm:$0xff]
      %v295 = vld [vmem:[%s2 + $0x68] sm:$0xff]
      %v296 = vld [vmem:[%s2 + $0x70] sm:$0xff]
      %v297 = vld [vmem:[%s2 + $0x78] sm:$0xff]
      %v298 = vld [vmem:[%s2 + $0x80] sm:$0xff]
      %v299 = vld [vmem:[%s2 + $0x88] sm:$0xff]
      %v300 = vld [vmem:[%s2 + $0x90] sm:$0xff]
      %v301 = vld [vmem:[%s2 + $0x98] sm:$0xff]
      %v302 = vld [vmem:[%s2 + $0xa0] sm:$0xff]
      %v303 = vld [vmem:[%s2 + $0xa8] sm:$0xff]
      %v304 = vld [vmem:[%s2 + $0xb0] sm:$0xff]
      %v305 = vld [vmem:[%s2 + $0xb8] sm:$0xff]
      %v306 = vld [vmem:[%s2 + $0xc0] sm:$0xff]
      %v307 = vld [vmem:[%s2 + $0xc8] sm:$0xff]
      %v308 = vld [vmem:[%s2 + $0xd0] sm:$0xff]
      %v309 = vld [vmem:[%s2 + $0xd8] sm:$0xff]
      %v310 = vld [vmem:[%s2 + $0xe0] sm:$0xff]
      %v311 = vld [vmem:[%s2 + $0xe8] sm:$0xff]
      %v312 = vld [vmem:[%s2 + $0xf0] sm:$0xff]
      %v313 = vld [vmem:[%s2 + $0xf8] sm:$0xff]
      %v314 = vld [vmem:[%s3] sm:$0xff]
      %v316 = vperm.slane %v314, 0
      %v317 = vperm.slane %v314, 1
      %v318 = vperm.slane %v314, 2
      %v319 = vperm.slane %v314, 3
      %v320 = vperm.slane %v314, 4
      %v321 = vperm.slane %v314, 5
      %v322 = vperm.slane %v314, 6
      %v323 = vperm.slane %v314, 7
      %vm332 = vcmask 261120
      %v334 = vsel %vm332, %v250, 0
      %v337 = vsel %vm332, %v251, 0
      %v340 = vsel %vm332, %v252, 0
      %v343 = vsel %vm332, %v253, 0
      %v346 = vsel %vm332, %v254, 0
      %v349 = vsel %vm332, %v255, 0
      %v352 = vsel %vm332, %v256, 0
      %v355 = vsel %vm332, %v257, 0
      %v358 = vsel %vm332, %v258, 0
      %v361 = vsel %vm332, %v259, 0
      %v364 = vsel %vm332, %v260, 0
      %v367 = vsel %vm332, %v261, 0
      %v370 = vsel %vm332, %v262, 0
      %v373 = vsel %vm332, %v263, 0
      %v376 = vsel %vm332, %v264, 0
      %v379 = vsel %vm332, %v265, 0
      %v382 = vsel %vm332, %v266, 0
      %v385 = vsel %vm332, %v267, 0
      %v388 = vsel %vm332, %v268, 0
      %v391 = vsel %vm332, %v269, 0
      %v394 = vsel %vm332, %v270, 0
      %v397 = vsel %vm332, %v271, 0
      %v400 = vsel %vm332, %v272, 0
      %v403 = vsel %vm332, %v273, 0
      %v406 = vsel %vm332, %v274, 0
      %v409 = vsel %vm332, %v275, 0
      %v412 = vsel %vm332, %v276, 0
      %v415 = vsel %vm332, %v277, 0
      %v418 = vsel %vm332, %v278, 0
      %v421 = vsel %vm332, %v279, 0
      %v424 = vsel %vm332, %v280, 0
      %v427 = vsel %vm332, %v281, 0
      %429 = vmatpush.msra.mxu0 0.0
      %430 = vmatpush.msra.mxu0 0.0
      %431 = vmatpush.msra.mxu0 0.0
      %432 = vmatpush.msra.mxu0 0.0
      %433 = vmatpush.msra.mxu0 0.0
      %434 = vmatpush.msra.mxu0 0.0
      %435 = vmatpush.msra.mxu0 0.0
      %436 = vmatpush.msra.mxu0 0.0
      %437 = vmatpush.msra.mxu0 0.0
      %438 = vmatpush.msra.mxu0 0.0
      %439 = vmatpush.msra.mxu0 0.0
      %440 = vmatpush.msra.mxu0 0.0
      %441 = vmatpush.msra.mxu0 %v306
      %442 = vmatpush.msra.mxu0 %v298
      %443 = vmatpush.msra.mxu0 %v290
      %444 = vmatpush.msra.mxu0 %v282
      %445 = vmatmul.f32.gmra.mxu0 %v334
      %v446 = vpop.f32.mrf.mxu0
      %v447 = vadd.f32 %v316, %v446
      %448 = vmatmul.f32.gmra.mxu0 %v337
      %v449 = vpop.f32.mrf.mxu0
      %v450 = vadd.f32 %v316, %v449
      %451 = vmatmul.f32.gmra.mxu0 %v340
      %v452 = vpop.f32.mrf.mxu0
      %v453 = vadd.f32 %v316, %v452
      %454 = vmatmul.f32.gmra.mxu0 %v343
      %v455 = vpop.f32.mrf.mxu0
      %v456 = vadd.f32 %v316, %v455
      %457 = vmatmul.f32.gmra.mxu0 %v346
      %v458 = vpop.f32.mrf.mxu0
      %v459 = vadd.f32 %v316, %v458
      %460 = vmatmul.f32.gmra.mxu0 %v349
      %v461 = vpop.f32.mrf.mxu0
      %v462 = vadd.f32 %v316, %v461
      %463 = vmatmul.f32.gmra.mxu0 %v352
      %v464 = vpop.f32.mrf.mxu0
      %v465 = vadd.f32 %v316, %v464
      %466 = vmatmul.f32.gmra.mxu0 %v355
      %v467 = vpop.f32.mrf.mxu0
      %v468 = vadd.f32 %v316, %v467
      %469 = vmatmul.f32.gmra.mxu0 %v358
      %v470 = vpop.f32.mrf.mxu0
      %v471 = vadd.f32 %v316, %v470
      %472 = vmatmul.f32.gmra.mxu0 %v361
      %v473 = vpop.f32.mrf.mxu0
      %v474 = vadd.f32 %v316, %v473
      %475 = vmatmul.f32.gmra.mxu0 %v364
      %v476 = vpop.f32.mrf.mxu0
      %v477 = vadd.f32 %v316, %v476
      %478 = vmatmul.f32.gmra.mxu0 %v367
      %v479 = vpop.f32.mrf.mxu0
      %v480 = vadd.f32 %v316, %v479
      %481 = vmatmul.f32.gmra.mxu0 %v370
      %v482 = vpop.f32.mrf.mxu0
      %v483 = vadd.f32 %v316, %v482
      %484 = vmatmul.f32.gmra.mxu0 %v373
      %v485 = vpop.f32.mrf.mxu0
      %v486 = vadd.f32 %v316, %v485
      %487 = vmatmul.f32.gmra.mxu0 %v376
      %v488 = vpop.f32.mrf.mxu0
      %v489 = vadd.f32 %v316, %v488
      %490 = vmatmul.f32.gmra.mxu0 %v379
      %v491 = vpop.f32.mrf.mxu0
      %v492 = vadd.f32 %v316, %v491
      %493 = vmatmul.f32.gmra.mxu0 %v382
      %v494 = vpop.f32.mrf.mxu0
      %v495 = vadd.f32 %v316, %v494
      %496 = vmatmul.f32.gmra.mxu0 %v385
      %v497 = vpop.f32.mrf.mxu0
      %v498 = vadd.f32 %v316, %v497
      %499 = vmatmul.f32.gmra.mxu0 %v388
      %v500 = vpop.f32.mrf.mxu0
      %v501 = vadd.f32 %v316, %v500
      %502 = vmatmul.f32.gmra.mxu0 %v391
      %v503 = vpop.f32.mrf.mxu0
      %v504 = vadd.f32 %v316, %v503
      %505 = vmatmul.f32.gmra.mxu0 %v394
      %v506 = vpop.f32.mrf.mxu0
      %v507 = vadd.f32 %v316, %v506
      %508 = vmatmul.f32.gmra.mxu0 %v397
      %v509 = vpop.f32.mrf.mxu0
      %v510 = vadd.f32 %v316, %v509
      %511 = vmatmul.f32.gmra.mxu0 %v400
      %v512 = vpop.f32.mrf.mxu0
      %v513 = vadd.f32 %v316, %v512
      %514 = vmatmul.f32.gmra.mxu0 %v403
      %v515 = vpop.f32.mrf.mxu0
      %v516 = vadd.f32 %v316, %v515
      %517 = vmatmul.f32.gmra.mxu0 %v406
      %v518 = vpop.f32.mrf.mxu0
      %v519 = vadd.f32 %v316, %v518
      %520 = vmatmul.f32.gmra.mxu0 %v409
      %v521 = vpop.f32.mrf.mxu0
      %v522 = vadd.f32 %v316, %v521
      %523 = vmatmul.f32.gmra.mxu0 %v412
      %v524 = vpop.f32.mrf.mxu0
      %v525 = vadd.f32 %v316, %v524
      %526 = vmatmul.f32.gmra.mxu0 %v415
      %v527 = vpop.f32.mrf.mxu0
      %v528 = vadd.f32 %v316, %v527
      %529 = vmatmul.f32.gmra.mxu0 %v418
      %v530 = vpop.f32.mrf.mxu0
      %v531 = vadd.f32 %v316, %v530
      %532 = vmatmul.f32.gmra.mxu0 %v421
      %v533 = vpop.f32.mrf.mxu0
      %v534 = vadd.f32 %v316, %v533
      %535 = vmatmul.f32.gmra.mxu0 %v424
      %v536 = vpop.f32.mrf.mxu0
      %v537 = vadd.f32 %v316, %v536
      %538 = vmatmul.f32.gmra.mxu0 %v427
      %v539 = vpop.f32.mrf.mxu0
      %v540 = vadd.f32 %v316, %v539
      %541 = vdwg.mxu0
      %542 = vmatpush.msra.mxu0 0.0
      %543 = vmatpush.msra.mxu0 0.0
      %544 = vmatpush.msra.mxu0 0.0
      %545 = vmatpush.msra.mxu0 0.0
      %546 = vmatpush.msra.mxu0 0.0
      %547 = vmatpush.msra.mxu0 0.0
      %548 = vmatpush.msra.mxu0 0.0
      %549 = vmatpush.msra.mxu0 0.0
      %550 = vmatpush.msra.mxu0 0.0
      %551 = vmatpush.msra.mxu0 0.0
      %552 = vmatpush.msra.mxu0 0.0
      %553 = vmatpush.msra.mxu0 0.0
      %554 = vmatpush.msra.mxu0 %v307
      %555 = vmatpush.msra.mxu0 %v299
      %556 = vmatpush.msra.mxu0 %v291
      %557 = vmatpush.msra.mxu0 %v283
      %558 = vmatmul.f32.gmra.mxu0 %v334
      %v559 = vpop.f32.mrf.mxu0
      %v560 = vadd.f32 %v317, %v559
      %561 = vmatmul.f32.gmra.mxu0 %v337
      %v562 = vpop.f32.mrf.mxu0
      %v563 = vadd.f32 %v317, %v562
      %564 = vmatmul.f32.gmra.mxu0 %v340
      %v565 = vpop.f32.mrf.mxu0
      %v566 = vadd.f32 %v317, %v565
      %567 = vmatmul.f32.gmra.mxu0 %v343
      %v568 = vpop.f32.mrf.mxu0
      %v569 = vadd.f32 %v317, %v568
      %570 = vmatmul.f32.gmra.mxu0 %v346
      %v571 = vpop.f32.mrf.mxu0
      %v572 = vadd.f32 %v317, %v571
      %573 = vmatmul.f32.gmra.mxu0 %v349
      %v574 = vpop.f32.mrf.mxu0
      %v575 = vadd.f32 %v317, %v574
      %576 = vmatmul.f32.gmra.mxu0 %v352
      %v577 = vpop.f32.mrf.mxu0
      %v578 = vadd.f32 %v317, %v577
      %579 = vmatmul.f32.gmra.mxu0 %v355
      %v580 = vpop.f32.mrf.mxu0
      %v581 = vadd.f32 %v317, %v580
      %582 = vmatmul.f32.gmra.mxu0 %v358
      %v583 = vpop.f32.mrf.mxu0
      %v584 = vadd.f32 %v317, %v583
      %585 = vmatmul.f32.gmra.mxu0 %v361
      %v586 = vpop.f32.mrf.mxu0
      %v587 = vadd.f32 %v317, %v586
      %588 = vmatmul.f32.gmra.mxu0 %v364
      %v589 = vpop.f32.mrf.mxu0
      %v590 = vadd.f32 %v317, %v589
      %591 = vmatmul.f32.gmra.mxu0 %v367
      %v592 = vpop.f32.mrf.mxu0
      %v593 = vadd.f32 %v317, %v592
      %594 = vmatmul.f32.gmra.mxu0 %v370
      %v595 = vpop.f32.mrf.mxu0
      %v596 = vadd.f32 %v317, %v595
      %597 = vmatmul.f32.gmra.mxu0 %v373
      %v598 = vpop.f32.mrf.mxu0
      %v599 = vadd.f32 %v317, %v598
      %600 = vmatmul.f32.gmra.mxu0 %v376
      %v601 = vpop.f32.mrf.mxu0
      %v602 = vadd.f32 %v317, %v601
      %603 = vmatmul.f32.gmra.mxu0 %v379
      %v604 = vpop.f32.mrf.mxu0
      %v605 = vadd.f32 %v317, %v604
      %606 = vmatmul.f32.gmra.mxu0 %v382
      %v607 = vpop.f32.mrf.mxu0
      %v608 = vadd.f32 %v317, %v607
      %609 = vmatmul.f32.gmra.mxu0 %v385
      %v610 = vpop.f32.mrf.mxu0
      %v611 = vadd.f32 %v317, %v610
      %612 = vmatmul.f32.gmra.mxu0 %v388
      %v613 = vpop.f32.mrf.mxu0
      %v614 = vadd.f32 %v317, %v613
      %615 = vmatmul.f32.gmra.mxu0 %v391
      %v616 = vpop.f32.mrf.mxu0
      %v617 = vadd.f32 %v317, %v616
      %618 = vmatmul.f32.gmra.mxu0 %v394
      %v619 = vpop.f32.mrf.mxu0
      %v620 = vadd.f32 %v317, %v619
      %621 = vmatmul.f32.gmra.mxu0 %v397
      %v622 = vpop.f32.mrf.mxu0
      %v623 = vadd.f32 %v317, %v622
      %624 = vmatmul.f32.gmra.mxu0 %v400
      %v625 = vpop.f32.mrf.mxu0
      %v626 = vadd.f32 %v317, %v625
      %627 = vmatmul.f32.gmra.mxu0 %v403
      %v628 = vpop.f32.mrf.mxu0
      %v629 = vadd.f32 %v317, %v628
      %630 = vmatmul.f32.gmra.mxu0 %v406
      %v631 = vpop.f32.mrf.mxu0
      %v632 = vadd.f32 %v317, %v631
      %633 = vmatmul.f32.gmra.mxu0 %v409
      %v634 = vpop.f32.mrf.mxu0
      %v635 = vadd.f32 %v317, %v634
      %636 = vmatmul.f32.gmra.mxu0 %v412
      %v637 = vpop.f32.mrf.mxu0
      %v638 = vadd.f32 %v317, %v637
      %639 = vmatmul.f32.gmra.mxu0 %v415
      %v640 = vpop.f32.mrf.mxu0
      %v641 = vadd.f32 %v317, %v640
      %642 = vmatmul.f32.gmra.mxu0 %v418
      %v643 = vpop.f32.mrf.mxu0
      %v644 = vadd.f32 %v317, %v643
      %645 = vmatmul.f32.gmra.mxu0 %v421
      %v646 = vpop.f32.mrf.mxu0
      %v647 = vadd.f32 %v317, %v646
      %648 = vmatmul.f32.gmra.mxu0 %v424
      %v649 = vpop.f32.mrf.mxu0
      %v650 = vadd.f32 %v317, %v649
      %651 = vmatmul.f32.gmra.mxu0 %v427
      %v652 = vpop.f32.mrf.mxu0
      %v653 = vadd.f32 %v317, %v652
      %654 = vdwg.mxu0
      %655 = vmatpush.msra.mxu0 0.0
      %656 = vmatpush.msra.mxu0 0.0
      %657 = vmatpush.msra.mxu0 0.0
      %658 = vmatpush.msra.mxu0 0.0
      %659 = vmatpush.msra.mxu0 0.0
      %660 = vmatpush.msra.mxu0 0.0
      %661 = vmatpush.msra.mxu0 0.0
      %662 = vmatpush.msra.mxu0 0.0
      %663 = vmatpush.msra.mxu0 0.0
      %664 = vmatpush.msra.mxu0 0.0
      %665 = vmatpush.msra.mxu0 0.0
      %666 = vmatpush.msra.mxu0 0.0
      %667 = vmatpush.msra.mxu0 %v308
      %668 = vmatpush.msra.mxu0 %v300
      %669 = vmatpush.msra.mxu0 %v292
      %670 = vmatpush.msra.mxu0 %v284
      %671 = vmatmul.f32.gmra.mxu0 %v334
      %v672 = vpop.f32.mrf.mxu0
      %v673 = vadd.f32 %v318, %v672
      %674 = vmatmul.f32.gmra.mxu0 %v337
      %v675 = vpop.f32.mrf.mxu0
      %v676 = vadd.f32 %v318, %v675
      %677 = vmatmul.f32.gmra.mxu0 %v340
      %v678 = vpop.f32.mrf.mxu0
      %v679 = vadd.f32 %v318, %v678
      %680 = vmatmul.f32.gmra.mxu0 %v343
      %v681 = vpop.f32.mrf.mxu0
      %v682 = vadd.f32 %v318, %v681
      %683 = vmatmul.f32.gmra.mxu0 %v346
      %v684 = vpop.f32.mrf.mxu0
      %v685 = vadd.f32 %v318, %v684
      %686 = vmatmul.f32.gmra.mxu0 %v349
      %v687 = vpop.f32.mrf.mxu0
      %v688 = vadd.f32 %v318, %v687
      %689 = vmatmul.f32.gmra.mxu0 %v352
      %v690 = vpop.f32.mrf.mxu0
      %v691 = vadd.f32 %v318, %v690
      %692 = vmatmul.f32.gmra.mxu0 %v355
      %v693 = vpop.f32.mrf.mxu0
      %v694 = vadd.f32 %v318, %v693
      %695 = vmatmul.f32.gmra.mxu0 %v358
      %v696 = vpop.f32.mrf.mxu0
      %v697 = vadd.f32 %v318, %v696
      %698 = vmatmul.f32.gmra.mxu0 %v361
      %v699 = vpop.f32.mrf.mxu0
      %v700 = vadd.f32 %v318, %v699
      %701 = vmatmul.f32.gmra.mxu0 %v364
      %v702 = vpop.f32.mrf.mxu0
      %v703 = vadd.f32 %v318, %v702
      %704 = vmatmul.f32.gmra.mxu0 %v367
      %v705 = vpop.f32.mrf.mxu0
      %v706 = vadd.f32 %v318, %v705
      %707 = vmatmul.f32.gmra.mxu0 %v370
      %v708 = vpop.f32.mrf.mxu0
      %v709 = vadd.f32 %v318, %v708
      %710 = vmatmul.f32.gmra.mxu0 %v373
      %v711 = vpop.f32.mrf.mxu0
      %v712 = vadd.f32 %v318, %v711
      %713 = vmatmul.f32.gmra.mxu0 %v376
      %v714 = vpop.f32.mrf.mxu0
      %v715 = vadd.f32 %v318, %v714
      %716 = vmatmul.f32.gmra.mxu0 %v379
      %v717 = vpop.f32.mrf.mxu0
      %v718 = vadd.f32 %v318, %v717
      %719 = vmatmul.f32.gmra.mxu0 %v382
      %v720 = vpop.f32.mrf.mxu0
      %v721 = vadd.f32 %v318, %v720
      %722 = vmatmul.f32.gmra.mxu0 %v385
      %v723 = vpop.f32.mrf.mxu0
      %v724 = vadd.f32 %v318, %v723
      %725 = vmatmul.f32.gmra.mxu0 %v388
      %v726 = vpop.f32.mrf.mxu0
      %v727 = vadd.f32 %v318, %v726
      %728 = vmatmul.f32.gmra.mxu0 %v391
      %v729 = vpop.f32.mrf.mxu0
      %v730 = vadd.f32 %v318, %v729
      %731 = vmatmul.f32.gmra.mxu0 %v394
      %v732 = vpop.f32.mrf.mxu0
      %v733 = vadd.f32 %v318, %v732
      %734 = vmatmul.f32.gmra.mxu0 %v397
      %v735 = vpop.f32.mrf.mxu0
      %v736 = vadd.f32 %v318, %v735
      %737 = vmatmul.f32.gmra.mxu0 %v400
      %v738 = vpop.f32.mrf.mxu0
      %v739 = vadd.f32 %v318, %v738
      %740 = vmatmul.f32.gmra.mxu0 %v403
      %v741 = vpop.f32.mrf.mxu0
      %v742 = vadd.f32 %v318, %v741
      %743 = vmatmul.f32.gmra.mxu0 %v406
      %v744 = vpop.f32.mrf.mxu0
      %v745 = vadd.f32 %v318, %v744
      %746 = vmatmul.f32.gmra.mxu0 %v409
      %v747 = vpop.f32.mrf.mxu0
      %v748 = vadd.f32 %v318, %v747
      %749 = vmatmul.f32.gmra.mxu0 %v412
      %v750 = vpop.f32.mrf.mxu0
      %v751 = vadd.f32 %v318, %v750
      %752 = vmatmul.f32.gmra.mxu0 %v415
      %v753 = vpop.f32.mrf.mxu0
      %v754 = vadd.f32 %v318, %v753
      %755 = vmatmul.f32.gmra.mxu0 %v418
      %v756 = vpop.f32.mrf.mxu0
      %v757 = vadd.f32 %v318, %v756
      %758 = vmatmul.f32.gmra.mxu0 %v421
      %v759 = vpop.f32.mrf.mxu0
      %v760 = vadd.f32 %v318, %v759
      %761 = vmatmul.f32.gmra.mxu0 %v424
      %v762 = vpop.f32.mrf.mxu0
      %v763 = vadd.f32 %v318, %v762
      %764 = vmatmul.f32.gmra.mxu0 %v427
      %v765 = vpop.f32.mrf.mxu0
      %v766 = vadd.f32 %v318, %v765
      %767 = vdwg.mxu0
      %768 = vmatpush.msra.mxu0 0.0
      %769 = vmatpush.msra.mxu0 0.0
      %770 = vmatpush.msra.mxu0 0.0
      %771 = vmatpush.msra.mxu0 0.0
      %772 = vmatpush.msra.mxu0 0.0
      %773 = vmatpush.msra.mxu0 0.0
      %774 = vmatpush.msra.mxu0 0.0
      %775 = vmatpush.msra.mxu0 0.0
      %776 = vmatpush.msra.mxu0 0.0
      %777 = vmatpush.msra.mxu0 0.0
      %778 = vmatpush.msra.mxu0 0.0
      %779 = vmatpush.msra.mxu0 0.0
      %780 = vmatpush.msra.mxu0 %v309
      %781 = vmatpush.msra.mxu0 %v301
      %782 = vmatpush.msra.mxu0 %v293
      %783 = vmatpush.msra.mxu0 %v285
      %784 = vmatmul.f32.gmra.mxu0 %v334
      %v785 = vpop.f32.mrf.mxu0
      %v786 = vadd.f32 %v319, %v785
      %787 = vmatmul.f32.gmra.mxu0 %v337
      %v788 = vpop.f32.mrf.mxu0
      %v789 = vadd.f32 %v319, %v788
      %790 = vmatmul.f32.gmra.mxu0 %v340
      %v791 = vpop.f32.mrf.mxu0
      %v792 = vadd.f32 %v319, %v791
      %793 = vmatmul.f32.gmra.mxu0 %v343
      %v794 = vpop.f32.mrf.mxu0
      %v795 = vadd.f32 %v319, %v794
      %796 = vmatmul.f32.gmra.mxu0 %v346
      %v797 = vpop.f32.mrf.mxu0
      %v798 = vadd.f32 %v319, %v797
      %799 = vmatmul.f32.gmra.mxu0 %v349
      %v800 = vpop.f32.mrf.mxu0
      %v801 = vadd.f32 %v319, %v800
      %802 = vmatmul.f32.gmra.mxu0 %v352
      %v803 = vpop.f32.mrf.mxu0
      %v804 = vadd.f32 %v319, %v803
      %805 = vmatmul.f32.gmra.mxu0 %v355
      %v806 = vpop.f32.mrf.mxu0
      %v807 = vadd.f32 %v319, %v806
      %808 = vmatmul.f32.gmra.mxu0 %v358
      %v809 = vpop.f32.mrf.mxu0
      %v810 = vadd.f32 %v319, %v809
      %811 = vmatmul.f32.gmra.mxu0 %v361
      %v812 = vpop.f32.mrf.mxu0
      %v813 = vadd.f32 %v319, %v812
      %814 = vmatmul.f32.gmra.mxu0 %v364
      %v815 = vpop.f32.mrf.mxu0
      %v816 = vadd.f32 %v319, %v815
      %817 = vmatmul.f32.gmra.mxu0 %v367
      %v818 = vpop.f32.mrf.mxu0
      %v819 = vadd.f32 %v319, %v818
      %820 = vmatmul.f32.gmra.mxu0 %v370
      %v821 = vpop.f32.mrf.mxu0
      %v822 = vadd.f32 %v319, %v821
      %823 = vmatmul.f32.gmra.mxu0 %v373
      %v824 = vpop.f32.mrf.mxu0
      %v825 = vadd.f32 %v319, %v824
      %826 = vmatmul.f32.gmra.mxu0 %v376
      %v827 = vpop.f32.mrf.mxu0
      %v828 = vadd.f32 %v319, %v827
      %829 = vmatmul.f32.gmra.mxu0 %v379
      %v830 = vpop.f32.mrf.mxu0
      %v831 = vadd.f32 %v319, %v830
      %832 = vmatmul.f32.gmra.mxu0 %v382
      %v833 = vpop.f32.mrf.mxu0
      %v834 = vadd.f32 %v319, %v833
      %835 = vmatmul.f32.gmra.mxu0 %v385
      %v836 = vpop.f32.mrf.mxu0
      %v837 = vadd.f32 %v319, %v836
      %838 = vmatmul.f32.gmra.mxu0 %v388
      %v839 = vpop.f32.mrf.mxu0
      %v840 = vadd.f32 %v319, %v839
      %841 = vmatmul.f32.gmra.mxu0 %v391
      %v842 = vpop.f32.mrf.mxu0
      %v843 = vadd.f32 %v319, %v842
      %844 = vmatmul.f32.gmra.mxu0 %v394
      %v845 = vpop.f32.mrf.mxu0
      %v846 = vadd.f32 %v319, %v845
      %847 = vmatmul.f32.gmra.mxu0 %v397
      %v848 = vpop.f32.mrf.mxu0
      %v849 = vadd.f32 %v319, %v848
      %850 = vmatmul.f32.gmra.mxu0 %v400
      %v851 = vpop.f32.mrf.mxu0
      %v852 = vadd.f32 %v319, %v851
      %853 = vmatmul.f32.gmra.mxu0 %v403
      %v854 = vpop.f32.mrf.mxu0
      %v855 = vadd.f32 %v319, %v854
      %856 = vmatmul.f32.gmra.mxu0 %v406
      %v857 = vpop.f32.mrf.mxu0
      %v858 = vadd.f32 %v319, %v857
      %859 = vmatmul.f32.gmra.mxu0 %v409
      %v860 = vpop.f32.mrf.mxu0
      %v861 = vadd.f32 %v319, %v860
      %862 = vmatmul.f32.gmra.mxu0 %v412
      %v863 = vpop.f32.mrf.mxu0
      %v864 = vadd.f32 %v319, %v863
      %865 = vmatmul.f32.gmra.mxu0 %v415
      %v866 = vpop.f32.mrf.mxu0
      %v867 = vadd.f32 %v319, %v866
      %868 = vmatmul.f32.gmra.mxu0 %v418
      %v869 = vpop.f32.mrf.mxu0
      %v870 = vadd.f32 %v319, %v869
      %871 = vmatmul.f32.gmra.mxu0 %v421
      %v872 = vpop.f32.mrf.mxu0
      %v873 = vadd.f32 %v319, %v872
      %874 = vmatmul.f32.gmra.mxu0 %v424
      %v875 = vpop.f32.mrf.mxu0
      %v876 = vadd.f32 %v319, %v875
      %877 = vmatmul.f32.gmra.mxu0 %v427
      %v878 = vpop.f32.mrf.mxu0
      %v879 = vadd.f32 %v319, %v878
      %880 = vdwg.mxu0
      %881 = vmatpush.msra.mxu0 0.0
      %882 = vmatpush.msra.mxu0 0.0
      %883 = vmatpush.msra.mxu0 0.0
      %884 = vmatpush.msra.mxu0 0.0
      %885 = vmatpush.msra.mxu0 0.0
      %886 = vmatpush.msra.mxu0 0.0
      %887 = vmatpush.msra.mxu0 0.0
      %888 = vmatpush.msra.mxu0 0.0
      %889 = vmatpush.msra.mxu0 0.0
      %890 = vmatpush.msra.mxu0 0.0
      %891 = vmatpush.msra.mxu0 0.0
      %892 = vmatpush.msra.mxu0 0.0
      %893 = vmatpush.msra.mxu0 %v310
      %894 = vmatpush.msra.mxu0 %v302
      %895 = vmatpush.msra.mxu0 %v294
      %896 = vmatpush.msra.mxu0 %v286
      %897 = vmatmul.f32.gmra.mxu0 %v334
      %v898 = vpop.f32.mrf.mxu0
      %v899 = vadd.f32 %v320, %v898
      %900 = vmatmul.f32.gmra.mxu0 %v337
      %v901 = vpop.f32.mrf.mxu0
      %v902 = vadd.f32 %v320, %v901
      %903 = vmatmul.f32.gmra.mxu0 %v340
      %v904 = vpop.f32.mrf.mxu0
      %v905 = vadd.f32 %v320, %v904
      %906 = vmatmul.f32.gmra.mxu0 %v343
      %v907 = vpop.f32.mrf.mxu0
      %v908 = vadd.f32 %v320, %v907
      %909 = vmatmul.f32.gmra.mxu0 %v346
      %v910 = vpop.f32.mrf.mxu0
      %v911 = vadd.f32 %v320, %v910
      %912 = vmatmul.f32.gmra.mxu0 %v349
      %v913 = vpop.f32.mrf.mxu0
      %v914 = vadd.f32 %v320, %v913
      %915 = vmatmul.f32.gmra.mxu0 %v352
      %v916 = vpop.f32.mrf.mxu0
      %v917 = vadd.f32 %v320, %v916
      %918 = vmatmul.f32.gmra.mxu0 %v355
      %v919 = vpop.f32.mrf.mxu0
      %v920 = vadd.f32 %v320, %v919
      %921 = vmatmul.f32.gmra.mxu0 %v358
      %v922 = vpop.f32.mrf.mxu0
      %v923 = vadd.f32 %v320, %v922
      %924 = vmatmul.f32.gmra.mxu0 %v361
      %v925 = vpop.f32.mrf.mxu0
      %v926 = vadd.f32 %v320, %v925
      %927 = vmatmul.f32.gmra.mxu0 %v364
      %v928 = vpop.f32.mrf.mxu0
      %v929 = vadd.f32 %v320, %v928
      %930 = vmatmul.f32.gmra.mxu0 %v367
      %v931 = vpop.f32.mrf.mxu0
      %v932 = vadd.f32 %v320, %v931
      %933 = vmatmul.f32.gmra.mxu0 %v370
      %v934 = vpop.f32.mrf.mxu0
      %v935 = vadd.f32 %v320, %v934
      %936 = vmatmul.f32.gmra.mxu0 %v373
      %v937 = vpop.f32.mrf.mxu0
      %v938 = vadd.f32 %v320, %v937
      %939 = vmatmul.f32.gmra.mxu0 %v376
      %v940 = vpop.f32.mrf.mxu0
      %v941 = vadd.f32 %v320, %v940
      %942 = vmatmul.f32.gmra.mxu0 %v379
      %v943 = vpop.f32.mrf.mxu0
      %v944 = vadd.f32 %v320, %v943
      %945 = vmatmul.f32.gmra.mxu0 %v382
      %v946 = vpop.f32.mrf.mxu0
      %v947 = vadd.f32 %v320, %v946
      %948 = vmatmul.f32.gmra.mxu0 %v385
      %v949 = vpop.f32.mrf.mxu0
      %v950 = vadd.f32 %v320, %v949
      %951 = vmatmul.f32.gmra.mxu0 %v388
      %v952 = vpop.f32.mrf.mxu0
      %v953 = vadd.f32 %v320, %v952
      %954 = vmatmul.f32.gmra.mxu0 %v391
      %v955 = vpop.f32.mrf.mxu0
      %v956 = vadd.f32 %v320, %v955
      %957 = vmatmul.f32.gmra.mxu0 %v394
      %v958 = vpop.f32.mrf.mxu0
      %v959 = vadd.f32 %v320, %v958
      %960 = vmatmul.f32.gmra.mxu0 %v397
      %v961 = vpop.f32.mrf.mxu0
      %v962 = vadd.f32 %v320, %v961
      %963 = vmatmul.f32.gmra.mxu0 %v400
      %v964 = vpop.f32.mrf.mxu0
      %v965 = vadd.f32 %v320, %v964
      %966 = vmatmul.f32.gmra.mxu0 %v403
      %v967 = vpop.f32.mrf.mxu0
      %v968 = vadd.f32 %v320, %v967
      %969 = vmatmul.f32.gmra.mxu0 %v406
      %v970 = vpop.f32.mrf.mxu0
      %v971 = vadd.f32 %v320, %v970
      %972 = vmatmul.f32.gmra.mxu0 %v409
      %v973 = vpop.f32.mrf.mxu0
      %v974 = vadd.f32 %v320, %v973
      %975 = vmatmul.f32.gmra.mxu0 %v412
      %v976 = vpop.f32.mrf.mxu0
      %v977 = vadd.f32 %v320, %v976
      %978 = vmatmul.f32.gmra.mxu0 %v415
      %v979 = vpop.f32.mrf.mxu0
      %v980 = vadd.f32 %v320, %v979
      %981 = vmatmul.f32.gmra.mxu0 %v418
      %v982 = vpop.f32.mrf.mxu0
      %v983 = vadd.f32 %v320, %v982
      %984 = vmatmul.f32.gmra.mxu0 %v421
      %v985 = vpop.f32.mrf.mxu0
      %v986 = vadd.f32 %v320, %v985
      %987 = vmatmul.f32.gmra.mxu0 %v424
      %v988 = vpop.f32.mrf.mxu0
      %v989 = vadd.f32 %v320, %v988
      %990 = vmatmul.f32.gmra.mxu0 %v427
      %v991 = vpop.f32.mrf.mxu0
      %v992 = vadd.f32 %v320, %v991
      %993 = vdwg.mxu0
      %994 = vmatpush.msra.mxu0 0.0
      %995 = vmatpush.msra.mxu0 0.0
      %996 = vmatpush.msra.mxu0 0.0
      %997 = vmatpush.msra.mxu0 0.0
      %998 = vmatpush.msra.mxu0 0.0
      %999 = vmatpush.msra.mxu0 0.0
      %1000 = vmatpush.msra.mxu0 0.0
      %1001 = vmatpush.msra.mxu0 0.0
      %1002 = vmatpush.msra.mxu0 0.0
      %1003 = vmatpush.msra.mxu0 0.0
      %1004 = vmatpush.msra.mxu0 0.0
      %1005 = vmatpush.msra.mxu0 0.0
      %1006 = vmatpush.msra.mxu0 %v311
      %1007 = vmatpush.msra.mxu0 %v303
      %1008 = vmatpush.msra.mxu0 %v295
      %1009 = vmatpush.msra.mxu0 %v287
      %1010 = vmatmul.f32.gmra.mxu0 %v334
      %v1011 = vpop.f32.mrf.mxu0
      %v1012 = vadd.f32 %v321, %v1011
      %1013 = vmatmul.f32.gmra.mxu0 %v337
      %v1014 = vpop.f32.mrf.mxu0
      %v1015 = vadd.f32 %v321, %v1014
      %1016 = vmatmul.f32.gmra.mxu0 %v340
      %v1017 = vpop.f32.mrf.mxu0
      %v1018 = vadd.f32 %v321, %v1017
      %1019 = vmatmul.f32.gmra.mxu0 %v343
      %v1020 = vpop.f32.mrf.mxu0
      %v1021 = vadd.f32 %v321, %v1020
      %1022 = vmatmul.f32.gmra.mxu0 %v346
      %v1023 = vpop.f32.mrf.mxu0
      %v1024 = vadd.f32 %v321, %v1023
      %1025 = vmatmul.f32.gmra.mxu0 %v349
      %v1026 = vpop.f32.mrf.mxu0
      %v1027 = vadd.f32 %v321, %v1026
      %1028 = vmatmul.f32.gmra.mxu0 %v352
      %v1029 = vpop.f32.mrf.mxu0
      %v1030 = vadd.f32 %v321, %v1029
      %1031 = vmatmul.f32.gmra.mxu0 %v355
      %v1032 = vpop.f32.mrf.mxu0
      %v1033 = vadd.f32 %v321, %v1032
      %1034 = vmatmul.f32.gmra.mxu0 %v358
      %v1035 = vpop.f32.mrf.mxu0
      %v1036 = vadd.f32 %v321, %v1035
      %1037 = vmatmul.f32.gmra.mxu0 %v361
      %v1038 = vpop.f32.mrf.mxu0
      %v1039 = vadd.f32 %v321, %v1038
      %1040 = vmatmul.f32.gmra.mxu0 %v364
      %v1041 = vpop.f32.mrf.mxu0
      %v1042 = vadd.f32 %v321, %v1041
      %1043 = vmatmul.f32.gmra.mxu0 %v367
      %v1044 = vpop.f32.mrf.mxu0
      %v1045 = vadd.f32 %v321, %v1044
      %1046 = vmatmul.f32.gmra.mxu0 %v370
      %v1047 = vpop.f32.mrf.mxu0
      %v1048 = vadd.f32 %v321, %v1047
      %1049 = vmatmul.f32.gmra.mxu0 %v373
      %v1050 = vpop.f32.mrf.mxu0
      %v1051 = vadd.f32 %v321, %v1050
      %1052 = vmatmul.f32.gmra.mxu0 %v376
      %v1053 = vpop.f32.mrf.mxu0
      %v1054 = vadd.f32 %v321, %v1053
      %1055 = vmatmul.f32.gmra.mxu0 %v379
      %v1056 = vpop.f32.mrf.mxu0
      %v1057 = vadd.f32 %v321, %v1056
      %1058 = vmatmul.f32.gmra.mxu0 %v382
      %v1059 = vpop.f32.mrf.mxu0
      %v1060 = vadd.f32 %v321, %v1059
      %1061 = vmatmul.f32.gmra.mxu0 %v385
      %v1062 = vpop.f32.mrf.mxu0
      %v1063 = vadd.f32 %v321, %v1062
      %1064 = vmatmul.f32.gmra.mxu0 %v388
      %v1065 = vpop.f32.mrf.mxu0
      %v1066 = vadd.f32 %v321, %v1065
      %1067 = vmatmul.f32.gmra.mxu0 %v391
      %v1068 = vpop.f32.mrf.mxu0
      %v1069 = vadd.f32 %v321, %v1068
      %1070 = vmatmul.f32.gmra.mxu0 %v394
      %v1071 = vpop.f32.mrf.mxu0
      %v1072 = vadd.f32 %v321, %v1071
      %1073 = vmatmul.f32.gmra.mxu0 %v397
      %v1074 = vpop.f32.mrf.mxu0
      %v1075 = vadd.f32 %v321, %v1074
      %1076 = vmatmul.f32.gmra.mxu0 %v400
      %v1077 = vpop.f32.mrf.mxu0
      %v1078 = vadd.f32 %v321, %v1077
      %1079 = vmatmul.f32.gmra.mxu0 %v403
      %v1080 = vpop.f32.mrf.mxu0
      %v1081 = vadd.f32 %v321, %v1080
      %1082 = vmatmul.f32.gmra.mxu0 %v406
      %v1083 = vpop.f32.mrf.mxu0
      %v1084 = vadd.f32 %v321, %v1083
      %1085 = vmatmul.f32.gmra.mxu0 %v409
      %v1086 = vpop.f32.mrf.mxu0
      %v1087 = vadd.f32 %v321, %v1086
      %1088 = vmatmul.f32.gmra.mxu0 %v412
      %v1089 = vpop.f32.mrf.mxu0
      %v1090 = vadd.f32 %v321, %v1089
      %1091 = vmatmul.f32.gmra.mxu0 %v415
      %v1092 = vpop.f32.mrf.mxu0
      %v1093 = vadd.f32 %v321, %v1092
      %1094 = vmatmul.f32.gmra.mxu0 %v418
      %v1095 = vpop.f32.mrf.mxu0
      %v1096 = vadd.f32 %v321, %v1095
      %1097 = vmatmul.f32.gmra.mxu0 %v421
      %v1098 = vpop.f32.mrf.mxu0
      %v1099 = vadd.f32 %v321, %v1098
      %1100 = vmatmul.f32.gmra.mxu0 %v424
      %v1101 = vpop.f32.mrf.mxu0
      %v1102 = vadd.f32 %v321, %v1101
      %1103 = vmatmul.f32.gmra.mxu0 %v427
      %v1104 = vpop.f32.mrf.mxu0
      %v1105 = vadd.f32 %v321, %v1104
      %1106 = vdwg.mxu0
      %1107 = vmatpush.msra.mxu0 0.0
      %1108 = vmatpush.msra.mxu0 0.0
      %1109 = vmatpush.msra.mxu0 0.0
      %1110 = vmatpush.msra.mxu0 0.0
      %1111 = vmatpush.msra.mxu0 0.0
      %1112 = vmatpush.msra.mxu0 0.0
      %1113 = vmatpush.msra.mxu0 0.0
      %1114 = vmatpush.msra.mxu0 0.0
      %1115 = vmatpush.msra.mxu0 0.0
      %1116 = vmatpush.msra.mxu0 0.0
      %1117 = vmatpush.msra.mxu0 0.0
      %1118 = vmatpush.msra.mxu0 0.0
      %1119 = vmatpush.msra.mxu0 %v312
      %1120 = vmatpush.msra.mxu0 %v304
      %1121 = vmatpush.msra.mxu0 %v296
      %1122 = vmatpush.msra.mxu0 %v288
      %1123 = vmatmul.f32.gmra.mxu0 %v334
      %v1124 = vpop.f32.mrf.mxu0
      %v1125 = vadd.f32 %v322, %v1124
      %1126 = vmatmul.f32.gmra.mxu0 %v337
      %v1127 = vpop.f32.mrf.mxu0
      %v1128 = vadd.f32 %v322, %v1127
      %1129 = vmatmul.f32.gmra.mxu0 %v340
      %v1130 = vpop.f32.mrf.mxu0
      %v1131 = vadd.f32 %v322, %v1130
      %1132 = vmatmul.f32.gmra.mxu0 %v343
      %v1133 = vpop.f32.mrf.mxu0
      %v1134 = vadd.f32 %v322, %v1133
      %1135 = vmatmul.f32.gmra.mxu0 %v346
      %v1136 = vpop.f32.mrf.mxu0
      %v1137 = vadd.f32 %v322, %v1136
      %1138 = vmatmul.f32.gmra.mxu0 %v349
      %v1139 = vpop.f32.mrf.mxu0
      %v1140 = vadd.f32 %v322, %v1139
      %1141 = vmatmul.f32.gmra.mxu0 %v352
      %v1142 = vpop.f32.mrf.mxu0
      %v1143 = vadd.f32 %v322, %v1142
      %1144 = vmatmul.f32.gmra.mxu0 %v355
      %v1145 = vpop.f32.mrf.mxu0
      %v1146 = vadd.f32 %v322, %v1145
      %1147 = vmatmul.f32.gmra.mxu0 %v358
      %v1148 = vpop.f32.mrf.mxu0
      %v1149 = vadd.f32 %v322, %v1148
      %1150 = vmatmul.f32.gmra.mxu0 %v361
      %v1151 = vpop.f32.mrf.mxu0
      %v1152 = vadd.f32 %v322, %v1151
      %1153 = vmatmul.f32.gmra.mxu0 %v364
      %v1154 = vpop.f32.mrf.mxu0
      %v1155 = vadd.f32 %v322, %v1154
      %1156 = vmatmul.f32.gmra.mxu0 %v367
      %v1157 = vpop.f32.mrf.mxu0
      %v1158 = vadd.f32 %v322, %v1157
      %1159 = vmatmul.f32.gmra.mxu0 %v370
      %v1160 = vpop.f32.mrf.mxu0
      %v1161 = vadd.f32 %v322, %v1160
      %1162 = vmatmul.f32.gmra.mxu0 %v373
      %v1163 = vpop.f32.mrf.mxu0
      %v1164 = vadd.f32 %v322, %v1163
      %1165 = vmatmul.f32.gmra.mxu0 %v376
      %v1166 = vpop.f32.mrf.mxu0
      %v1167 = vadd.f32 %v322, %v1166
      %1168 = vmatmul.f32.gmra.mxu0 %v379
      %v1169 = vpop.f32.mrf.mxu0
      %v1170 = vadd.f32 %v322, %v1169
      %1171 = vmatmul.f32.gmra.mxu0 %v382
      %v1172 = vpop.f32.mrf.mxu0
      %v1173 = vadd.f32 %v322, %v1172
      %1174 = vmatmul.f32.gmra.mxu0 %v385
      %v1175 = vpop.f32.mrf.mxu0
      %v1176 = vadd.f32 %v322, %v1175
      %1177 = vmatmul.f32.gmra.mxu0 %v388
      %v1178 = vpop.f32.mrf.mxu0
      %v1179 = vadd.f32 %v322, %v1178
      %1180 = vmatmul.f32.gmra.mxu0 %v391
      %v1181 = vpop.f32.mrf.mxu0
      %v1182 = vadd.f32 %v322, %v1181
      %1183 = vmatmul.f32.gmra.mxu0 %v394
      %v1184 = vpop.f32.mrf.mxu0
      %v1185 = vadd.f32 %v322, %v1184
      %1186 = vmatmul.f32.gmra.mxu0 %v397
      %v1187 = vpop.f32.mrf.mxu0
      %v1188 = vadd.f32 %v322, %v1187
      %1189 = vmatmul.f32.gmra.mxu0 %v400
      %v1190 = vpop.f32.mrf.mxu0
      %v1191 = vadd.f32 %v322, %v1190
      %1192 = vmatmul.f32.gmra.mxu0 %v403
      %v1193 = vpop.f32.mrf.mxu0
      %v1194 = vadd.f32 %v322, %v1193
      %1195 = vmatmul.f32.gmra.mxu0 %v406
      %v1196 = vpop.f32.mrf.mxu0
      %v1197 = vadd.f32 %v322, %v1196
      %1198 = vmatmul.f32.gmra.mxu0 %v409
      %v1199 = vpop.f32.mrf.mxu0
      %v1200 = vadd.f32 %v322, %v1199
      %1201 = vmatmul.f32.gmra.mxu0 %v412
      %v1202 = vpop.f32.mrf.mxu0
      %v1203 = vadd.f32 %v322, %v1202
      %1204 = vmatmul.f32.gmra.mxu0 %v415
      %v1205 = vpop.f32.mrf.mxu0
      %v1206 = vadd.f32 %v322, %v1205
      %1207 = vmatmul.f32.gmra.mxu0 %v418
      %v1208 = vpop.f32.mrf.mxu0
      %v1209 = vadd.f32 %v322, %v1208
      %1210 = vmatmul.f32.gmra.mxu0 %v421
      %v1211 = vpop.f32.mrf.mxu0
      %v1212 = vadd.f32 %v322, %v1211
      %1213 = vmatmul.f32.gmra.mxu0 %v424
      %v1214 = vpop.f32.mrf.mxu0
      %v1215 = vadd.f32 %v322, %v1214
      %1216 = vmatmul.f32.gmra.mxu0 %v427
      %v1217 = vpop.f32.mrf.mxu0
      %v1218 = vadd.f32 %v322, %v1217
      %1219 = vdwg.mxu0
      %1220 = vmatpush.msra.mxu0 0.0
      %1221 = vmatpush.msra.mxu0 0.0
      %1222 = vmatpush.msra.mxu0 0.0
      %1223 = vmatpush.msra.mxu0 0.0
      %1224 = vmatpush.msra.mxu0 0.0
      %1225 = vmatpush.msra.mxu0 0.0
      %1226 = vmatpush.msra.mxu0 0.0
      %1227 = vmatpush.msra.mxu0 0.0
      %1228 = vmatpush.msra.mxu0 0.0
      %1229 = vmatpush.msra.mxu0 0.0
      %1230 = vmatpush.msra.mxu0 0.0
      %1231 = vmatpush.msra.mxu0 0.0
      %1232 = vmatpush.msra.mxu0 %v313
      %1233 = vmatpush.msra.mxu0 %v305
      %1234 = vmatpush.msra.mxu0 %v297
      %1235 = vmatpush.msra.mxu0 %v289
      %1236 = vmatmul.f32.gmra.mxu0 %v334
      %v1237 = vpop.f32.mrf.mxu0
      %v1238 = vadd.f32 %v323, %v1237
      %1239 = vmatmul.f32.gmra.mxu0 %v337
      %v1240 = vpop.f32.mrf.mxu0
      %v1241 = vadd.f32 %v323, %v1240
      %1242 = vmatmul.f32.gmra.mxu0 %v340
      %v1243 = vpop.f32.mrf.mxu0
      %v1244 = vadd.f32 %v323, %v1243
      %1245 = vmatmul.f32.gmra.mxu0 %v343
      %v1246 = vpop.f32.mrf.mxu0
      %v1247 = vadd.f32 %v323, %v1246
      %1248 = vmatmul.f32.gmra.mxu0 %v346
      %v1249 = vpop.f32.mrf.mxu0
      %v1250 = vadd.f32 %v323, %v1249
      %1251 = vmatmul.f32.gmra.mxu0 %v349
      %v1252 = vpop.f32.mrf.mxu0
      %v1253 = vadd.f32 %v323, %v1252
      %1254 = vmatmul.f32.gmra.mxu0 %v352
      %v1255 = vpop.f32.mrf.mxu0
      %v1256 = vadd.f32 %v323, %v1255
      %1257 = vmatmul.f32.gmra.mxu0 %v355
      %v1258 = vpop.f32.mrf.mxu0
      %v1259 = vadd.f32 %v323, %v1258
      %1260 = vmatmul.f32.gmra.mxu0 %v358
      %v1261 = vpop.f32.mrf.mxu0
      %v1262 = vadd.f32 %v323, %v1261
      %1263 = vmatmul.f32.gmra.mxu0 %v361
      %v1264 = vpop.f32.mrf.mxu0
      %v1265 = vadd.f32 %v323, %v1264
      %1266 = vmatmul.f32.gmra.mxu0 %v364
      %v1267 = vpop.f32.mrf.mxu0
      %v1268 = vadd.f32 %v323, %v1267
      %1269 = vmatmul.f32.gmra.mxu0 %v367
      %v1270 = vpop.f32.mrf.mxu0
      %v1271 = vadd.f32 %v323, %v1270
      %1272 = vmatmul.f32.gmra.mxu0 %v370
      %v1273 = vpop.f32.mrf.mxu0
      %v1274 = vadd.f32 %v323, %v1273
      %1275 = vmatmul.f32.gmra.mxu0 %v373
      %v1276 = vpop.f32.mrf.mxu0
      %v1277 = vadd.f32 %v323, %v1276
      %1278 = vmatmul.f32.gmra.mxu0 %v376
      %v1279 = vpop.f32.mrf.mxu0
      %v1280 = vadd.f32 %v323, %v1279
      %1281 = vmatmul.f32.gmra.mxu0 %v379
      %v1282 = vpop.f32.mrf.mxu0
      %v1283 = vadd.f32 %v323, %v1282
      %1284 = vmatmul.f32.gmra.mxu0 %v382
      %v1285 = vpop.f32.mrf.mxu0
      %v1286 = vadd.f32 %v323, %v1285
      %1287 = vmatmul.f32.gmra.mxu0 %v385
      %v1288 = vpop.f32.mrf.mxu0
      %v1289 = vadd.f32 %v323, %v1288
      %1290 = vmatmul.f32.gmra.mxu0 %v388
      %v1291 = vpop.f32.mrf.mxu0
      %v1292 = vadd.f32 %v323, %v1291
      %1293 = vmatmul.f32.gmra.mxu0 %v391
      %v1294 = vpop.f32.mrf.mxu0
      %v1295 = vadd.f32 %v323, %v1294
      %1296 = vmatmul.f32.gmra.mxu0 %v394
      %v1297 = vpop.f32.mrf.mxu0
      %v1298 = vadd.f32 %v323, %v1297
      %1299 = vmatmul.f32.gmra.mxu0 %v397
      %v1300 = vpop.f32.mrf.mxu0
      %v1301 = vadd.f32 %v323, %v1300
      %1302 = vmatmul.f32.gmra.mxu0 %v400
      %v1303 = vpop.f32.mrf.mxu0
      %v1304 = vadd.f32 %v323, %v1303
      %1305 = vmatmul.f32.gmra.mxu0 %v403
      %v1306 = vpop.f32.mrf.mxu0
      %v1307 = vadd.f32 %v323, %v1306
      %1308 = vmatmul.f32.gmra.mxu0 %v406
      %v1309 = vpop.f32.mrf.mxu0
      %v1310 = vadd.f32 %v323, %v1309
      %1311 = vmatmul.f32.gmra.mxu0 %v409
      %v1312 = vpop.f32.mrf.mxu0
      %v1313 = vadd.f32 %v323, %v1312
      %1314 = vmatmul.f32.gmra.mxu0 %v412
      %v1315 = vpop.f32.mrf.mxu0
      %v1316 = vadd.f32 %v323, %v1315
      %1317 = vmatmul.f32.gmra.mxu0 %v415
      %v1318 = vpop.f32.mrf.mxu0
      %v1319 = vadd.f32 %v323, %v1318
      %1320 = vmatmul.f32.gmra.mxu0 %v418
      %v1321 = vpop.f32.mrf.mxu0
      %v1322 = vadd.f32 %v323, %v1321
      %1323 = vmatmul.f32.gmra.mxu0 %v421
      %v1324 = vpop.f32.mrf.mxu0
      %v1325 = vadd.f32 %v323, %v1324
      %1326 = vmatmul.f32.gmra.mxu0 %v424
      %v1327 = vpop.f32.mrf.mxu0
      %v1328 = vadd.f32 %v323, %v1327
      %1329 = vmatmul.f32.gmra.mxu0 %v427
      %v1330 = vpop.f32.mrf.mxu0
      %v1331 = vadd.f32 %v323, %v1330
      %1332 = vdwg.mxu0
      %v1333 = vld [vmem:[%s242] sm:$0xff]
      %v1334 = vld [vmem:[%s242 + $0x8] sm:$0xff]
      %v1335 = vld [vmem:[%s242 + $0x10] sm:$0xff]
      %v1336 = vld [vmem:[%s242 + $0x18] sm:$0xff]
      %v1337 = vld [vmem:[%s242 + $0x20] sm:$0xff]
      %v1338 = vld [vmem:[%s242 + $0x28] sm:$0xff]
      %v1339 = vld [vmem:[%s242 + $0x30] sm:$0xff]
      %v1340 = vld [vmem:[%s242 + $0x38] sm:$0xff]
      %v1341 = vld [vmem:[%s242 + $0x40] sm:$0xff]
      %v1342 = vld [vmem:[%s242 + $0x48] sm:$0xff]
      %v1343 = vld [vmem:[%s242 + $0x50] sm:$0xff]
      %v1344 = vld [vmem:[%s242 + $0x58] sm:$0xff]
      %v1345 = vld [vmem:[%s242 + $0x60] sm:$0xff]
      %v1346 = vld [vmem:[%s242 + $0x68] sm:$0xff]
      %v1347 = vld [vmem:[%s242 + $0x70] sm:$0xff]
      %v1348 = vld [vmem:[%s242 + $0x78] sm:$0xff]
      %v1349 = vld [vmem:[%s242 + $0x80] sm:$0xff]
      %v1350 = vld [vmem:[%s242 + $0x88] sm:$0xff]
      %v1351 = vld [vmem:[%s242 + $0x90] sm:$0xff]
      %v1352 = vld [vmem:[%s242 + $0x98] sm:$0xff]
      %v1353 = vld [vmem:[%s242 + $0xa0] sm:$0xff]
      %v1354 = vld [vmem:[%s242 + $0xa8] sm:$0xff]
      %v1355 = vld [vmem:[%s242 + $0xb0] sm:$0xff]
      %v1356 = vld [vmem:[%s242 + $0xb8] sm:$0xff]
      %v1357 = vld [vmem:[%s242 + $0xc0] sm:$0xff]
      %v1358 = vld [vmem:[%s242 + $0xc8] sm:$0xff]
      %v1359 = vld [vmem:[%s242 + $0xd0] sm:$0xff]
      %v1360 = vld [vmem:[%s242 + $0xd8] sm:$0xff]
      %v1361 = vld [vmem:[%s242 + $0xe0] sm:$0xff]
      %v1362 = vld [vmem:[%s242 + $0xe8] sm:$0xff]
      %v1363 = vld [vmem:[%s242 + $0xf0] sm:$0xff]
      %v1364 = vld [vmem:[%s242 + $0xf8] sm:$0xff]
      %v1365 = vmul.f32 %v447, %v1333
      %v1366 = vmul.f32 %v560, %v1333
      %v1367 = vmul.f32 %v673, %v1333
      %v1368 = vmul.f32 %v786, %v1333
      %v1369 = vmul.f32 %v899, %v1333
      %v1370 = vmul.f32 %v1012, %v1333
      %v1371 = vmul.f32 %v1125, %v1333
      %v1372 = vmul.f32 %v1238, %v1333
      %v1373 = vmul.f32 %v450, %v1334
      %v1374 = vmul.f32 %v563, %v1334
      %v1375 = vmul.f32 %v676, %v1334
      %v1376 = vmul.f32 %v789, %v1334
      %v1377 = vmul.f32 %v902, %v1334
      %v1378 = vmul.f32 %v1015, %v1334
      %v1379 = vmul.f32 %v1128, %v1334
      %v1380 = vmul.f32 %v1241, %v1334
      %v1381 = vmul.f32 %v453, %v1335
      %v1382 = vmul.f32 %v566, %v1335
      %v1383 = vmul.f32 %v679, %v1335
      %v1384 = vmul.f32 %v792, %v1335
      %v1385 = vmul.f32 %v905, %v1335
      %v1386 = vmul.f32 %v1018, %v1335
      %v1387 = vmul.f32 %v1131, %v1335
      %v1388 = vmul.f32 %v1244, %v1335
      %v1389 = vmul.f32 %v456, %v1336
      %v1390 = vmul.f32 %v569, %v1336
      %v1391 = vmul.f32 %v682, %v1336
      %v1392 = vmul.f32 %v795, %v1336
      %v1393 = vmul.f32 %v908, %v1336
      %v1394 = vmul.f32 %v1021, %v1336
      %v1395 = vmul.f32 %v1134, %v1336
      %v1396 = vmul.f32 %v1247, %v1336
      %v1397 = vmul.f32 %v459, %v1337
      %v1398 = vmul.f32 %v572, %v1337
      %v1399 = vmul.f32 %v685, %v1337
      %v1400 = vmul.f32 %v798, %v1337
      %v1401 = vmul.f32 %v911, %v1337
      %v1402 = vmul.f32 %v1024, %v1337
      %v1403 = vmul.f32 %v1137, %v1337
      %v1404 = vmul.f32 %v1250, %v1337
      %v1405 = vmul.f32 %v462, %v1338
      %v1406 = vmul.f32 %v575, %v1338
      %v1407 = vmul.f32 %v688, %v1338
      %v1408 = vmul.f32 %v801, %v1338
      %v1409 = vmul.f32 %v914, %v1338
      %v1410 = vmul.f32 %v1027, %v1338
      %v1411 = vmul.f32 %v1140, %v1338
      %v1412 = vmul.f32 %v1253, %v1338
      %v1413 = vmul.f32 %v465, %v1339
      %v1414 = vmul.f32 %v578, %v1339
      %v1415 = vmul.f32 %v691, %v1339
      %v1416 = vmul.f32 %v804, %v1339
      %v1417 = vmul.f32 %v917, %v1339
      %v1418 = vmul.f32 %v1030, %v1339
      %v1419 = vmul.f32 %v1143, %v1339
      %v1420 = vmul.f32 %v1256, %v1339
      %v1421 = vmul.f32 %v468, %v1340
      %v1422 = vmul.f32 %v581, %v1340
      %v1423 = vmul.f32 %v694, %v1340
      %v1424 = vmul.f32 %v807, %v1340
      %v1425 = vmul.f32 %v920, %v1340
      %v1426 = vmul.f32 %v1033, %v1340
      %v1427 = vmul.f32 %v1146, %v1340
      %v1428 = vmul.f32 %v1259, %v1340
      %v1429 = vmul.f32 %v471, %v1341
      %v1430 = vmul.f32 %v584, %v1341
      %v1431 = vmul.f32 %v697, %v1341
      %v1432 = vmul.f32 %v810, %v1341
      %v1433 = vmul.f32 %v923, %v1341
      %v1434 = vmul.f32 %v1036, %v1341
      %v1435 = vmul.f32 %v1149, %v1341
      %v1436 = vmul.f32 %v1262, %v1341
      %v1437 = vmul.f32 %v474, %v1342
      %v1438 = vmul.f32 %v587, %v1342
      %v1439 = vmul.f32 %v700, %v1342
      %v1440 = vmul.f32 %v813, %v1342
      %v1441 = vmul.f32 %v926, %v1342
      %v1442 = vmul.f32 %v1039, %v1342
      %v1443 = vmul.f32 %v1152, %v1342
      %v1444 = vmul.f32 %v1265, %v1342
      %v1445 = vmul.f32 %v477, %v1343
      %v1446 = vmul.f32 %v590, %v1343
      %v1447 = vmul.f32 %v703, %v1343
      %v1448 = vmul.f32 %v816, %v1343
      %v1449 = vmul.f32 %v929, %v1343
      %v1450 = vmul.f32 %v1042, %v1343
      %v1451 = vmul.f32 %v1155, %v1343
      %v1452 = vmul.f32 %v1268, %v1343
      %v1453 = vmul.f32 %v480, %v1344
      %v1454 = vmul.f32 %v593, %v1344
      %v1455 = vmul.f32 %v706, %v1344
      %v1456 = vmul.f32 %v819, %v1344
      %v1457 = vmul.f32 %v932, %v1344
      %v1458 = vmul.f32 %v1045, %v1344
      %v1459 = vmul.f32 %v1158, %v1344
      %v1460 = vmul.f32 %v1271, %v1344
      %v1461 = vmul.f32 %v483, %v1345
      %v1462 = vmul.f32 %v596, %v1345
      %v1463 = vmul.f32 %v709, %v1345
      %v1464 = vmul.f32 %v822, %v1345
      %v1465 = vmul.f32 %v935, %v1345
      %v1466 = vmul.f32 %v1048, %v1345
      %v1467 = vmul.f32 %v1161, %v1345
      %v1468 = vmul.f32 %v1274, %v1345
      %v1469 = vmul.f32 %v486, %v1346
      %v1470 = vmul.f32 %v599, %v1346
      %v1471 = vmul.f32 %v712, %v1346
      %v1472 = vmul.f32 %v825, %v1346
      %v1473 = vmul.f32 %v938, %v1346
      %v1474 = vmul.f32 %v1051, %v1346
      %v1475 = vmul.f32 %v1164, %v1346
      %v1476 = vmul.f32 %v1277, %v1346
      %v1477 = vmul.f32 %v489, %v1347
      %v1478 = vmul.f32 %v602, %v1347
      %v1479 = vmul.f32 %v715, %v1347
      %v1480 = vmul.f32 %v828, %v1347
      %v1481 = vmul.f32 %v941, %v1347
      %v1482 = vmul.f32 %v1054, %v1347
      %v1483 = vmul.f32 %v1167, %v1347
      %v1484 = vmul.f32 %v1280, %v1347
      %v1485 = vmul.f32 %v492, %v1348
      %v1486 = vmul.f32 %v605, %v1348
      %v1487 = vmul.f32 %v718, %v1348
      %v1488 = vmul.f32 %v831, %v1348
      %v1489 = vmul.f32 %v944, %v1348
      %v1490 = vmul.f32 %v1057, %v1348
      %v1491 = vmul.f32 %v1170, %v1348
      %v1492 = vmul.f32 %v1283, %v1348
      %v1493 = vmul.f32 %v495, %v1349
      %v1494 = vmul.f32 %v608, %v1349
      %v1495 = vmul.f32 %v721, %v1349
      %v1496 = vmul.f32 %v834, %v1349
      %v1497 = vmul.f32 %v947, %v1349
      %v1498 = vmul.f32 %v1060, %v1349
      %v1499 = vmul.f32 %v1173, %v1349
      %v1500 = vmul.f32 %v1286, %v1349
      %v1501 = vmul.f32 %v498, %v1350
      %v1502 = vmul.f32 %v611, %v1350
      %v1503 = vmul.f32 %v724, %v1350
      %v1504 = vmul.f32 %v837, %v1350
      %v1505 = vmul.f32 %v950, %v1350
      %v1506 = vmul.f32 %v1063, %v1350
      %v1507 = vmul.f32 %v1176, %v1350
      %v1508 = vmul.f32 %v1289, %v1350
      %v1509 = vmul.f32 %v501, %v1351
      %v1510 = vmul.f32 %v614, %v1351
      %v1511 = vmul.f32 %v727, %v1351
      %v1512 = vmul.f32 %v840, %v1351
      %v1513 = vmul.f32 %v953, %v1351
      %v1514 = vmul.f32 %v1066, %v1351
      %v1515 = vmul.f32 %v1179, %v1351
      %v1516 = vmul.f32 %v1292, %v1351
      %v1517 = vmul.f32 %v504, %v1352
      %v1518 = vmul.f32 %v617, %v1352
      %v1519 = vmul.f32 %v730, %v1352
      %v1520 = vmul.f32 %v843, %v1352
      %v1521 = vmul.f32 %v956, %v1352
      %v1522 = vmul.f32 %v1069, %v1352
      %v1523 = vmul.f32 %v1182, %v1352
      %v1524 = vmul.f32 %v1295, %v1352
      %v1525 = vmul.f32 %v507, %v1353
      %v1526 = vmul.f32 %v620, %v1353
      %v1527 = vmul.f32 %v733, %v1353
      %v1528 = vmul.f32 %v846, %v1353
      %v1529 = vmul.f32 %v959, %v1353
      %v1530 = vmul.f32 %v1072, %v1353
      %v1531 = vmul.f32 %v1185, %v1353
      %v1532 = vmul.f32 %v1298, %v1353
      %v1533 = vmul.f32 %v510, %v1354
      %v1534 = vmul.f32 %v623, %v1354
      %v1535 = vmul.f32 %v736, %v1354
      %v1536 = vmul.f32 %v849, %v1354
      %v1537 = vmul.f32 %v962, %v1354
      %v1538 = vmul.f32 %v1075, %v1354
      %v1539 = vmul.f32 %v1188, %v1354
      %v1540 = vmul.f32 %v1301, %v1354
      %v1541 = vmul.f32 %v513, %v1355
      %v1542 = vmul.f32 %v626, %v1355
      %v1543 = vmul.f32 %v739, %v1355
      %v1544 = vmul.f32 %v852, %v1355
      %v1545 = vmul.f32 %v965, %v1355
      %v1546 = vmul.f32 %v1078, %v1355
      %v1547 = vmul.f32 %v1191, %v1355
      %v1548 = vmul.f32 %v1304, %v1355
      %v1549 = vmul.f32 %v516, %v1356
      %v1550 = vmul.f32 %v629, %v1356
      %v1551 = vmul.f32 %v742, %v1356
      %v1552 = vmul.f32 %v855, %v1356
      %v1553 = vmul.f32 %v968, %v1356
      %v1554 = vmul.f32 %v1081, %v1356
      %v1555 = vmul.f32 %v1194, %v1356
      %v1556 = vmul.f32 %v1307, %v1356
      %v1557 = vmul.f32 %v519, %v1357
      %v1558 = vmul.f32 %v632, %v1357
      %v1559 = vmul.f32 %v745, %v1357
      %v1560 = vmul.f32 %v858, %v1357
      %v1561 = vmul.f32 %v971, %v1357
      %v1562 = vmul.f32 %v1084, %v1357
      %v1563 = vmul.f32 %v1197, %v1357
      %v1564 = vmul.f32 %v1310, %v1357
      %v1565 = vmul.f32 %v522, %v1358
      %v1566 = vmul.f32 %v635, %v1358
      %v1567 = vmul.f32 %v748, %v1358
      %v1568 = vmul.f32 %v861, %v1358
      %v1569 = vmul.f32 %v974, %v1358
      %v1570 = vmul.f32 %v1087, %v1358
      %v1571 = vmul.f32 %v1200, %v1358
      %v1572 = vmul.f32 %v1313, %v1358
      %v1573 = vmul.f32 %v525, %v1359
      %v1574 = vmul.f32 %v638, %v1359
      %v1575 = vmul.f32 %v751, %v1359
      %v1576 = vmul.f32 %v864, %v1359
      %v1577 = vmul.f32 %v977, %v1359
      %v1578 = vmul.f32 %v1090, %v1359
      %v1579 = vmul.f32 %v1203, %v1359
      %v1580 = vmul.f32 %v1316, %v1359
      %v1581 = vmul.f32 %v528, %v1360
      %v1582 = vmul.f32 %v641, %v1360
      %v1583 = vmul.f32 %v754, %v1360
      %v1584 = vmul.f32 %v867, %v1360
      %v1585 = vmul.f32 %v980, %v1360
      %v1586 = vmul.f32 %v1093, %v1360
      %v1587 = vmul.f32 %v1206, %v1360
      %v1588 = vmul.f32 %v1319, %v1360
      %v1589 = vmul.f32 %v531, %v1361
      %v1590 = vmul.f32 %v644, %v1361
      %v1591 = vmul.f32 %v757, %v1361
      %v1592 = vmul.f32 %v870, %v1361
      %v1593 = vmul.f32 %v983, %v1361
      %v1594 = vmul.f32 %v1096, %v1361
      %v1595 = vmul.f32 %v1209, %v1361
      %v1596 = vmul.f32 %v1322, %v1361
      %v1597 = vmul.f32 %v534, %v1362
      %v1598 = vmul.f32 %v647, %v1362
      %v1599 = vmul.f32 %v760, %v1362
      %v1600 = vmul.f32 %v873, %v1362
      %v1601 = vmul.f32 %v986, %v1362
      %v1602 = vmul.f32 %v1099, %v1362
      %v1603 = vmul.f32 %v1212, %v1362
      %v1604 = vmul.f32 %v1325, %v1362
      %v1605 = vmul.f32 %v537, %v1363
      %v1606 = vmul.f32 %v650, %v1363
      %v1607 = vmul.f32 %v763, %v1363
      %v1608 = vmul.f32 %v876, %v1363
      %v1609 = vmul.f32 %v989, %v1363
      %v1610 = vmul.f32 %v1102, %v1363
      %v1611 = vmul.f32 %v1215, %v1363
      %v1612 = vmul.f32 %v1328, %v1363
      %v1613 = vmul.f32 %v540, %v1364
      %v1614 = vmul.f32 %v653, %v1364
      %v1615 = vmul.f32 %v766, %v1364
      %v1616 = vmul.f32 %v879, %v1364
      %v1617 = vmul.f32 %v992, %v1364
      %v1618 = vmul.f32 %v1105, %v1364
      %v1619 = vmul.f32 %v1218, %v1364
      %v1620 = vmul.f32 %v1331, %v1364
      %v1621 = vld [vmem:[%s4] sm:$0xff]
      %v1622 = vld [vmem:[%s4 + $0x8] sm:$0xff]
      %v1623 = vld [vmem:[%s4 + $0x10] sm:$0xff]
      %v1624 = vld [vmem:[%s4 + $0x18] sm:$0xff]
      %v1625 = vld [vmem:[%s4 + $0x20] sm:$0xff]
      %v1626 = vld [vmem:[%s4 + $0x28] sm:$0xff]
      %v1627 = vld [vmem:[%s4 + $0x30] sm:$0xff]
      %v1628 = vld [vmem:[%s4 + $0x38] sm:$0xff]
      %v1629 = vld [vmem:[%s4 + $0x40] sm:$0xff]
      %v1630 = vld [vmem:[%s4 + $0x48] sm:$0xff]
      %v1631 = vld [vmem:[%s4 + $0x50] sm:$0xff]
      %v1632 = vld [vmem:[%s4 + $0x58] sm:$0xff]
      %v1633 = vld [vmem:[%s4 + $0x60] sm:$0xff]
      %v1634 = vld [vmem:[%s4 + $0x68] sm:$0xff]
      %v1635 = vld [vmem:[%s4 + $0x70] sm:$0xff]
      %v1636 = vld [vmem:[%s4 + $0x78] sm:$0xff]
      %v1637 = vld [vmem:[%s4 + $0x80] sm:$0xff]
      %v1638 = vld [vmem:[%s4 + $0x88] sm:$0xff]
      %v1639 = vld [vmem:[%s4 + $0x90] sm:$0xff]
      %v1640 = vld [vmem:[%s4 + $0x98] sm:$0xff]
      %v1641 = vld [vmem:[%s4 + $0xa0] sm:$0xff]
      %v1642 = vld [vmem:[%s4 + $0xa8] sm:$0xff]
      %v1643 = vld [vmem:[%s4 + $0xb0] sm:$0xff]
      %v1644 = vld [vmem:[%s4 + $0xb8] sm:$0xff]
      %v1645 = vld [vmem:[%s4 + $0xc0] sm:$0xff]
      %v1646 = vld [vmem:[%s4 + $0xc8] sm:$0xff]
      %v1647 = vld [vmem:[%s4 + $0xd0] sm:$0xff]
      %v1648 = vld [vmem:[%s4 + $0xd8] sm:$0xff]
      %v1649 = vld [vmem:[%s4 + $0xe0] sm:$0xff]
      %v1650 = vld [vmem:[%s4 + $0xe8] sm:$0xff]
      %v1651 = vld [vmem:[%s4 + $0xf0] sm:$0xff]
      %v1652 = vld [vmem:[%s4 + $0xf8] sm:$0xff]
      %v1653 = vld [vmem:[%s4 + $0x100] sm:$0xff]
      %v1654 = vld [vmem:[%s4 + $0x108] sm:$0xff]
      %v1655 = vld [vmem:[%s4 + $0x110] sm:$0xff]
      %v1656 = vld [vmem:[%s4 + $0x118] sm:$0xff]
      %v1657 = vld [vmem:[%s4 + $0x120] sm:$0xff]
      %v1658 = vld [vmem:[%s4 + $0x128] sm:$0xff]
      %v1659 = vld [vmem:[%s4 + $0x130] sm:$0xff]
      %v1660 = vld [vmem:[%s4 + $0x138] sm:$0xff]
      %v1661 = vld [vmem:[%s4 + $0x140] sm:$0xff]
      %v1662 = vld [vmem:[%s4 + $0x148] sm:$0xff]
      %v1663 = vld [vmem:[%s4 + $0x150] sm:$0xff]
      %v1664 = vld [vmem:[%s4 + $0x158] sm:$0xff]
      %v1665 = vld [vmem:[%s4 + $0x160] sm:$0xff]
      %v1666 = vld [vmem:[%s4 + $0x168] sm:$0xff]
      %v1667 = vld [vmem:[%s4 + $0x170] sm:$0xff]
      %v1668 = vld [vmem:[%s4 + $0x178] sm:$0xff]
      %v1669 = vld [vmem:[%s4 + $0x180] sm:$0xff]
      %v1670 = vld [vmem:[%s4 + $0x188] sm:$0xff]
      %v1671 = vld [vmem:[%s4 + $0x190] sm:$0xff]
      %v1672 = vld [vmem:[%s4 + $0x198] sm:$0xff]
      %v1673 = vld [vmem:[%s4 + $0x1a0] sm:$0xff]
      %v1674 = vld [vmem:[%s4 + $0x1a8] sm:$0xff]
      %v1675 = vld [vmem:[%s4 + $0x1b0] sm:$0xff]
      %v1676 = vld [vmem:[%s4 + $0x1b8] sm:$0xff]
      %v1677 = vld [vmem:[%s4 + $0x1c0] sm:$0xff]
      %v1678 = vld [vmem:[%s4 + $0x1c8] sm:$0xff]
      %v1679 = vld [vmem:[%s4 + $0x1d0] sm:$0xff]
      %v1680 = vld [vmem:[%s4 + $0x1d8] sm:$0xff]
      %v1681 = vld [vmem:[%s4 + $0x1e0] sm:$0xff]
      %v1682 = vld [vmem:[%s4 + $0x1e8] sm:$0xff]
      %v1683 = vld [vmem:[%s4 + $0x1f0] sm:$0xff]
      %v1684 = vld [vmem:[%s4 + $0x1f8] sm:$0xff]
      %v1685 = vld [vmem:[%s4 + $0x200] sm:$0xff]
      %v1686 = vld [vmem:[%s4 + $0x208] sm:$0xff]
      %v1687 = vld [vmem:[%s4 + $0x210] sm:$0xff]
      %v1688 = vld [vmem:[%s4 + $0x218] sm:$0xff]
      %v1689 = vld [vmem:[%s4 + $0x220] sm:$0xff]
      %v1690 = vld [vmem:[%s4 + $0x228] sm:$0xff]
      %v1691 = vld [vmem:[%s4 + $0x230] sm:$0xff]
      %v1692 = vld [vmem:[%s4 + $0x238] sm:$0xff]
      %v1693 = vld [vmem:[%s4 + $0x240] sm:$0xff]
      %v1694 = vld [vmem:[%s4 + $0x248] sm:$0xff]
      %v1695 = vld [vmem:[%s4 + $0x250] sm:$0xff]
      %v1696 = vld [vmem:[%s4 + $0x258] sm:$0xff]
      %v1697 = vld [vmem:[%s4 + $0x260] sm:$0xff]
      %v1698 = vld [vmem:[%s4 + $0x268] sm:$0xff]
      %v1699 = vld [vmem:[%s4 + $0x270] sm:$0xff]
      %v1700 = vld [vmem:[%s4 + $0x278] sm:$0xff]
      %v1701 = vld [vmem:[%s4 + $0x280] sm:$0xff]
      %v1702 = vld [vmem:[%s4 + $0x288] sm:$0xff]
      %v1703 = vld [vmem:[%s4 + $0x290] sm:$0xff]
      %v1704 = vld [vmem:[%s4 + $0x298] sm:$0xff]
      %v1705 = vld [vmem:[%s4 + $0x2a0] sm:$0xff]
      %v1706 = vld [vmem:[%s4 + $0x2a8] sm:$0xff]
      %v1707 = vld [vmem:[%s4 + $0x2b0] sm:$0xff]
      %v1708 = vld [vmem:[%s4 + $0x2b8] sm:$0xff]
      %v1709 = vld [vmem:[%s4 + $0x2c0] sm:$0xff]
      %v1710 = vld [vmem:[%s4 + $0x2c8] sm:$0xff]
      %v1711 = vld [vmem:[%s4 + $0x2d0] sm:$0xff]
      %v1712 = vld [vmem:[%s4 + $0x2d8] sm:$0xff]
      %v1713 = vld [vmem:[%s4 + $0x2e0] sm:$0xff]
      %v1714 = vld [vmem:[%s4 + $0x2e8] sm:$0xff]
      %v1715 = vld [vmem:[%s4 + $0x2f0] sm:$0xff]
      %v1716 = vld [vmem:[%s4 + $0x2f8] sm:$0xff]
      %v1717 = vld [vmem:[%s4 + $0x300] sm:$0xff]
      %v1718 = vld [vmem:[%s4 + $0x308] sm:$0xff]
      %v1719 = vld [vmem:[%s4 + $0x310] sm:$0xff]
      %v1720 = vld [vmem:[%s4 + $0x318] sm:$0xff]
      %v1721 = vld [vmem:[%s4 + $0x320] sm:$0xff]
      %v1722 = vld [vmem:[%s4 + $0x328] sm:$0xff]
      %v1723 = vld [vmem:[%s4 + $0x330] sm:$0xff]
      %v1724 = vld [vmem:[%s4 + $0x338] sm:$0xff]
      %v1725 = vld [vmem:[%s4 + $0x340] sm:$0xff]
      %v1726 = vld [vmem:[%s4 + $0x348] sm:$0xff]
      %v1727 = vld [vmem:[%s4 + $0x350] sm:$0xff]
      %v1728 = vld [vmem:[%s4 + $0x358] sm:$0xff]
      %v1729 = vld [vmem:[%s4 + $0x360] sm:$0xff]
      %v1730 = vld [vmem:[%s4 + $0x368] sm:$0xff]
      %v1731 = vld [vmem:[%s4 + $0x370] sm:$0xff]
      %v1732 = vld [vmem:[%s4 + $0x378] sm:$0xff]
      %v1733 = vld [vmem:[%s4 + $0x380] sm:$0xff]
      %v1734 = vld [vmem:[%s4 + $0x388] sm:$0xff]
      %v1735 = vld [vmem:[%s4 + $0x390] sm:$0xff]
      %v1736 = vld [vmem:[%s4 + $0x398] sm:$0xff]
      %v1737 = vld [vmem:[%s4 + $0x3a0] sm:$0xff]
      %v1738 = vld [vmem:[%s4 + $0x3a8] sm:$0xff]
      %v1739 = vld [vmem:[%s4 + $0x3b0] sm:$0xff]
      %v1740 = vld [vmem:[%s4 + $0x3b8] sm:$0xff]
      %v1741 = vld [vmem:[%s4 + $0x3c0] sm:$0xff]
      %v1742 = vld [vmem:[%s4 + $0x3c8] sm:$0xff]
      %v1743 = vld [vmem:[%s4 + $0x3d0] sm:$0xff]
      %v1744 = vld [vmem:[%s4 + $0x3d8] sm:$0xff]
      %v1745 = vld [vmem:[%s4 + $0x3e0] sm:$0xff]
      %v1746 = vld [vmem:[%s4 + $0x3e8] sm:$0xff]
      %v1747 = vld [vmem:[%s4 + $0x3f0] sm:$0xff]
      %v1748 = vld [vmem:[%s4 + $0x3f8] sm:$0xff]
      %1749 = vmatpush.msra.mxu0 %v1636
      %1750 = vmatpush.msra.mxu0 %v1635
      %1751 = vmatpush.msra.mxu0 %v1634
      %1752 = vmatpush.msra.mxu0 %v1633
      %1753 = vmatpush.msra.mxu0 %v1632
      %1754 = vmatpush.msra.mxu0 %v1631
      %1755 = vmatpush.msra.mxu0 %v1630
      %1756 = vmatpush.msra.mxu0 %v1629
      %1757 = vmatpush.msra.mxu0 %v1628
      %1758 = vmatpush.msra.mxu0 %v1627
      %1759 = vmatpush.msra.mxu0 %v1626
      %1760 = vmatpush.msra.mxu0 %v1625
      %1761 = vmatpush.msra.mxu0 %v1624
      %1762 = vmatpush.msra.mxu0 %v1623
      %1763 = vmatpush.msra.mxu0 %v1622
      %1764 = vmatpush.msra.mxu0 %v1621
      %1765 = vmatmul.f32.gmra.mxu0 %v1365
      %v1766 = vpop.f32.mrf.mxu0
      %v1767 = vadd.f32 0.0, %v1766
      %1768 = vmatmul.f32.gmra.mxu0 %v1373
      %v1769 = vpop.f32.mrf.mxu0
      %v1770 = vadd.f32 0.0, %v1769
      %1771 = vmatmul.f32.gmra.mxu0 %v1381
      %v1772 = vpop.f32.mrf.mxu0
      %v1773 = vadd.f32 0.0, %v1772
      %1774 = vmatmul.f32.gmra.mxu0 %v1389
      %v1775 = vpop.f32.mrf.mxu0
      %v1776 = vadd.f32 0.0, %v1775
      %1777 = vmatmul.f32.gmra.mxu0 %v1397
      %v1778 = vpop.f32.mrf.mxu0
      %v1779 = vadd.f32 0.0, %v1778
      %1780 = vmatmul.f32.gmra.mxu0 %v1405
      %v1781 = vpop.f32.mrf.mxu0
      %v1782 = vadd.f32 0.0, %v1781
      %1783 = vmatmul.f32.gmra.mxu0 %v1413
      %v1784 = vpop.f32.mrf.mxu0
      %v1785 = vadd.f32 0.0, %v1784
      %1786 = vmatmul.f32.gmra.mxu0 %v1421
      %v1787 = vpop.f32.mrf.mxu0
      %v1788 = vadd.f32 0.0, %v1787
      %1789 = vmatmul.f32.gmra.mxu0 %v1429
      %v1790 = vpop.f32.mrf.mxu0
      %v1791 = vadd.f32 0.0, %v1790
      %1792 = vmatmul.f32.gmra.mxu0 %v1437
      %v1793 = vpop.f32.mrf.mxu0
      %v1794 = vadd.f32 0.0, %v1793
      %1795 = vmatmul.f32.gmra.mxu0 %v1445
      %v1796 = vpop.f32.mrf.mxu0
      %v1797 = vadd.f32 0.0, %v1796
      %1798 = vmatmul.f32.gmra.mxu0 %v1453
      %v1799 = vpop.f32.mrf.mxu0
      %v1800 = vadd.f32 0.0, %v1799
      %1801 = vmatmul.f32.gmra.mxu0 %v1461
      %v1802 = vpop.f32.mrf.mxu0
      %v1803 = vadd.f32 0.0, %v1802
      %1804 = vmatmul.f32.gmra.mxu0 %v1469
      %v1805 = vpop.f32.mrf.mxu0
      %v1806 = vadd.f32 0.0, %v1805
      %1807 = vmatmul.f32.gmra.mxu0 %v1477
      %v1808 = vpop.f32.mrf.mxu0
      %v1809 = vadd.f32 0.0, %v1808
      %1810 = vmatmul.f32.gmra.mxu0 %v1485
      %v1811 = vpop.f32.mrf.mxu0
      %v1812 = vadd.f32 0.0, %v1811
      %1813 = vmatmul.f32.gmra.mxu0 %v1493
      %v1814 = vpop.f32.mrf.mxu0
      %v1815 = vadd.f32 0.0, %v1814
      %1816 = vmatmul.f32.gmra.mxu0 %v1501
      %v1817 = vpop.f32.mrf.mxu0
      %v1818 = vadd.f32 0.0, %v1817
      %1819 = vmatmul.f32.gmra.mxu0 %v1509
      %v1820 = vpop.f32.mrf.mxu0
      %v1821 = vadd.f32 0.0, %v1820
      %1822 = vmatmul.f32.gmra.mxu0 %v1517
      %v1823 = vpop.f32.mrf.mxu0
      %v1824 = vadd.f32 0.0, %v1823
      %1825 = vmatmul.f32.gmra.mxu0 %v1525
      %v1826 = vpop.f32.mrf.mxu0
      %v1827 = vadd.f32 0.0, %v1826
      %1828 = vmatmul.f32.gmra.mxu0 %v1533
      %v1829 = vpop.f32.mrf.mxu0
      %v1830 = vadd.f32 0.0, %v1829
      %1831 = vmatmul.f32.gmra.mxu0 %v1541
      %v1832 = vpop.f32.mrf.mxu0
      %v1833 = vadd.f32 0.0, %v1832
      %1834 = vmatmul.f32.gmra.mxu0 %v1549
      %v1835 = vpop.f32.mrf.mxu0
      %v1836 = vadd.f32 0.0, %v1835
      %1837 = vmatmul.f32.gmra.mxu0 %v1557
      %v1838 = vpop.f32.mrf.mxu0
      %v1839 = vadd.f32 0.0, %v1838
      %1840 = vmatmul.f32.gmra.mxu0 %v1565
      %v1841 = vpop.f32.mrf.mxu0
      %v1842 = vadd.f32 0.0, %v1841
      %1843 = vmatmul.f32.gmra.mxu0 %v1573
      %v1844 = vpop.f32.mrf.mxu0
      %v1845 = vadd.f32 0.0, %v1844
      %1846 = vmatmul.f32.gmra.mxu0 %v1581
      %v1847 = vpop.f32.mrf.mxu0
      %v1848 = vadd.f32 0.0, %v1847
      %1849 = vmatmul.f32.gmra.mxu0 %v1589
      %v1850 = vpop.f32.mrf.mxu0
      %v1851 = vadd.f32 0.0, %v1850
      %1852 = vmatmul.f32.gmra.mxu0 %v1597
      %v1853 = vpop.f32.mrf.mxu0
      %v1854 = vadd.f32 0.0, %v1853
      %1855 = vmatmul.f32.gmra.mxu0 %v1605
      %v1856 = vpop.f32.mrf.mxu0
      %v1857 = vadd.f32 0.0, %v1856
      %1858 = vmatmul.f32.gmra.mxu0 %v1613
      %v1859 = vpop.f32.mrf.mxu0
      %v1860 = vadd.f32 0.0, %v1859
      %1861 = vdwg.mxu0
      %1862 = vmatpush.msra.mxu0 %v1652
      %1863 = vmatpush.msra.mxu0 %v1651
      %1864 = vmatpush.msra.mxu0 %v1650
      %1865 = vmatpush.msra.mxu0 %v1649
      %1866 = vmatpush.msra.mxu0 %v1648
      %1867 = vmatpush.msra.mxu0 %v1647
      %1868 = vmatpush.msra.mxu0 %v1646
      %1869 = vmatpush.msra.mxu0 %v1645
      %1870 = vmatpush.msra.mxu0 %v1644
      %1871 = vmatpush.msra.mxu0 %v1643
      %1872 = vmatpush.msra.mxu0 %v1642
      %1873 = vmatpush.msra.mxu0 %v1641
      %1874 = vmatpush.msra.mxu0 %v1640
      %1875 = vmatpush.msra.mxu0 %v1639
      %1876 = vmatpush.msra.mxu0 %v1638
      %1877 = vmatpush.msra.mxu0 %v1637
      %1878 = vmatmul.f32.gmra.mxu0 %v1366
      %v1879 = vpop.f32.mrf.mxu0
      %v1880 = vadd.f32 %v1767, %v1879
      %1881 = vmatmul.f32.gmra.mxu0 %v1374
      %v1882 = vpop.f32.mrf.mxu0
      %v1883 = vadd.f32 %v1770, %v1882
      %1884 = vmatmul.f32.gmra.mxu0 %v1382
      %v1885 = vpop.f32.mrf.mxu0
      %v1886 = vadd.f32 %v1773, %v1885
      %1887 = vmatmul.f32.gmra.mxu0 %v1390
      %v1888 = vpop.f32.mrf.mxu0
      %v1889 = vadd.f32 %v1776, %v1888
      %1890 = vmatmul.f32.gmra.mxu0 %v1398
      %v1891 = vpop.f32.mrf.mxu0
      %v1892 = vadd.f32 %v1779, %v1891
      %1893 = vmatmul.f32.gmra.mxu0 %v1406
      %v1894 = vpop.f32.mrf.mxu0
      %v1895 = vadd.f32 %v1782, %v1894
      %1896 = vmatmul.f32.gmra.mxu0 %v1414
      %v1897 = vpop.f32.mrf.mxu0
      %v1898 = vadd.f32 %v1785, %v1897
      %1899 = vmatmul.f32.gmra.mxu0 %v1422
      %v1900 = vpop.f32.mrf.mxu0
      %v1901 = vadd.f32 %v1788, %v1900
      %1902 = vmatmul.f32.gmra.mxu0 %v1430
      %v1903 = vpop.f32.mrf.mxu0
      %v1904 = vadd.f32 %v1791, %v1903
      %1905 = vmatmul.f32.gmra.mxu0 %v1438
      %v1906 = vpop.f32.mrf.mxu0
      %v1907 = vadd.f32 %v1794, %v1906
      %1908 = vmatmul.f32.gmra.mxu0 %v1446
      %v1909 = vpop.f32.mrf.mxu0
      %v1910 = vadd.f32 %v1797, %v1909
      %1911 = vmatmul.f32.gmra.mxu0 %v1454
      %v1912 = vpop.f32.mrf.mxu0
      %v1913 = vadd.f32 %v1800, %v1912
      %1914 = vmatmul.f32.gmra.mxu0 %v1462
      %v1915 = vpop.f32.mrf.mxu0
      %v1916 = vadd.f32 %v1803, %v1915
      %1917 = vmatmul.f32.gmra.mxu0 %v1470
      %v1918 = vpop.f32.mrf.mxu0
      %v1919 = vadd.f32 %v1806, %v1918
      %1920 = vmatmul.f32.gmra.mxu0 %v1478
      %v1921 = vpop.f32.mrf.mxu0
      %v1922 = vadd.f32 %v1809, %v1921
      %1923 = vmatmul.f32.gmra.mxu0 %v1486
      %v1924 = vpop.f32.mrf.mxu0
      %v1925 = vadd.f32 %v1812, %v1924
      %1926 = vmatmul.f32.gmra.mxu0 %v1494
      %v1927 = vpop.f32.mrf.mxu0
      %v1928 = vadd.f32 %v1815, %v1927
      %1929 = vmatmul.f32.gmra.mxu0 %v1502
      %v1930 = vpop.f32.mrf.mxu0
      %v1931 = vadd.f32 %v1818, %v1930
      %1932 = vmatmul.f32.gmra.mxu0 %v1510
      %v1933 = vpop.f32.mrf.mxu0
      %v1934 = vadd.f32 %v1821, %v1933
      %1935 = vmatmul.f32.gmra.mxu0 %v1518
      %v1936 = vpop.f32.mrf.mxu0
      %v1937 = vadd.f32 %v1824, %v1936
      %1938 = vmatmul.f32.gmra.mxu0 %v1526
      %v1939 = vpop.f32.mrf.mxu0
      %v1940 = vadd.f32 %v1827, %v1939
      %1941 = vmatmul.f32.gmra.mxu0 %v1534
      %v1942 = vpop.f32.mrf.mxu0
      %v1943 = vadd.f32 %v1830, %v1942
      %1944 = vmatmul.f32.gmra.mxu0 %v1542
      %v1945 = vpop.f32.mrf.mxu0
      %v1946 = vadd.f32 %v1833, %v1945
      %1947 = vmatmul.f32.gmra.mxu0 %v1550
      %v1948 = vpop.f32.mrf.mxu0
      %v1949 = vadd.f32 %v1836, %v1948
      %1950 = vmatmul.f32.gmra.mxu0 %v1558
      %v1951 = vpop.f32.mrf.mxu0
      %v1952 = vadd.f32 %v1839, %v1951
      %1953 = vmatmul.f32.gmra.mxu0 %v1566
      %v1954 = vpop.f32.mrf.mxu0
      %v1955 = vadd.f32 %v1842, %v1954
      %1956 = vmatmul.f32.gmra.mxu0 %v1574
      %v1957 = vpop.f32.mrf.mxu0
      %v1958 = vadd.f32 %v1845, %v1957
      %1959 = vmatmul.f32.gmra.mxu0 %v1582
      %v1960 = vpop.f32.mrf.mxu0
      %v1961 = vadd.f32 %v1848, %v1960
      %1962 = vmatmul.f32.gmra.mxu0 %v1590
      %v1963 = vpop.f32.mrf.mxu0
      %v1964 = vadd.f32 %v1851, %v1963
      %1965 = vmatmul.f32.gmra.mxu0 %v1598
      %v1966 = vpop.f32.mrf.mxu0
      %v1967 = vadd.f32 %v1854, %v1966
      %1968 = vmatmul.f32.gmra.mxu0 %v1606
      %v1969 = vpop.f32.mrf.mxu0
      %v1970 = vadd.f32 %v1857, %v1969
      %1971 = vmatmul.f32.gmra.mxu0 %v1614
      %v1972 = vpop.f32.mrf.mxu0
      %v1973 = vadd.f32 %v1860, %v1972
      %1974 = vdwg.mxu0
      %1975 = vmatpush.msra.mxu0 %v1668
      %1976 = vmatpush.msra.mxu0 %v1667
      %1977 = vmatpush.msra.mxu0 %v1666
      %1978 = vmatpush.msra.mxu0 %v1665
      %1979 = vmatpush.msra.mxu0 %v1664
      %1980 = vmatpush.msra.mxu0 %v1663
      %1981 = vmatpush.msra.mxu0 %v1662
      %1982 = vmatpush.msra.mxu0 %v1661
      %1983 = vmatpush.msra.mxu0 %v1660
      %1984 = vmatpush.msra.mxu0 %v1659
      %1985 = vmatpush.msra.mxu0 %v1658
      %1986 = vmatpush.msra.mxu0 %v1657
      %1987 = vmatpush.msra.mxu0 %v1656
      %1988 = vmatpush.msra.mxu0 %v1655
      %1989 = vmatpush.msra.mxu0 %v1654
      %1990 = vmatpush.msra.mxu0 %v1653
      %1991 = vmatmul.f32.gmra.mxu0 %v1367
      %v1992 = vpop.f32.mrf.mxu0
      %v1993 = vadd.f32 %v1880, %v1992
      %1994 = vmatmul.f32.gmra.mxu0 %v1375
      %v1995 = vpop.f32.mrf.mxu0
      %v1996 = vadd.f32 %v1883, %v1995
      %1997 = vmatmul.f32.gmra.mxu0 %v1383
      %v1998 = vpop.f32.mrf.mxu0
      %v1999 = vadd.f32 %v1886, %v1998
      %2000 = vmatmul.f32.gmra.mxu0 %v1391
      %v2001 = vpop.f32.mrf.mxu0
      %v2002 = vadd.f32 %v1889, %v2001
      %2003 = vmatmul.f32.gmra.mxu0 %v1399
      %v2004 = vpop.f32.mrf.mxu0
      %v2005 = vadd.f32 %v1892, %v2004
      %2006 = vmatmul.f32.gmra.mxu0 %v1407
      %v2007 = vpop.f32.mrf.mxu0
      %v2008 = vadd.f32 %v1895, %v2007
      %2009 = vmatmul.f32.gmra.mxu0 %v1415
      %v2010 = vpop.f32.mrf.mxu0
      %v2011 = vadd.f32 %v1898, %v2010
      %2012 = vmatmul.f32.gmra.mxu0 %v1423
      %v2013 = vpop.f32.mrf.mxu0
      %v2014 = vadd.f32 %v1901, %v2013
      %2015 = vmatmul.f32.gmra.mxu0 %v1431
      %v2016 = vpop.f32.mrf.mxu0
      %v2017 = vadd.f32 %v1904, %v2016
      %2018 = vmatmul.f32.gmra.mxu0 %v1439
      %v2019 = vpop.f32.mrf.mxu0
      %v2020 = vadd.f32 %v1907, %v2019
      %2021 = vmatmul.f32.gmra.mxu0 %v1447
      %v2022 = vpop.f32.mrf.mxu0
      %v2023 = vadd.f32 %v1910, %v2022
      %2024 = vmatmul.f32.gmra.mxu0 %v1455
      %v2025 = vpop.f32.mrf.mxu0
      %v2026 = vadd.f32 %v1913, %v2025
      %2027 = vmatmul.f32.gmra.mxu0 %v1463
      %v2028 = vpop.f32.mrf.mxu0
      %v2029 = vadd.f32 %v1916, %v2028
      %2030 = vmatmul.f32.gmra.mxu0 %v1471
      %v2031 = vpop.f32.mrf.mxu0
      %v2032 = vadd.f32 %v1919, %v2031
      %2033 = vmatmul.f32.gmra.mxu0 %v1479
      %v2034 = vpop.f32.mrf.mxu0
      %v2035 = vadd.f32 %v1922, %v2034
      %2036 = vmatmul.f32.gmra.mxu0 %v1487
      %v2037 = vpop.f32.mrf.mxu0
      %v2038 = vadd.f32 %v1925, %v2037
      %2039 = vmatmul.f32.gmra.mxu0 %v1495
      %v2040 = vpop.f32.mrf.mxu0
      %v2041 = vadd.f32 %v1928, %v2040
      %2042 = vmatmul.f32.gmra.mxu0 %v1503
      %v2043 = vpop.f32.mrf.mxu0
      %v2044 = vadd.f32 %v1931, %v2043
      %2045 = vmatmul.f32.gmra.mxu0 %v1511
      %v2046 = vpop.f32.mrf.mxu0
      %v2047 = vadd.f32 %v1934, %v2046
      %2048 = vmatmul.f32.gmra.mxu0 %v1519
      %v2049 = vpop.f32.mrf.mxu0
      %v2050 = vadd.f32 %v1937, %v2049
      %2051 = vmatmul.f32.gmra.mxu0 %v1527
      %v2052 = vpop.f32.mrf.mxu0
      %v2053 = vadd.f32 %v1940, %v2052
      %2054 = vmatmul.f32.gmra.mxu0 %v1535
      %v2055 = vpop.f32.mrf.mxu0
      %v2056 = vadd.f32 %v1943, %v2055
      %2057 = vmatmul.f32.gmra.mxu0 %v1543
      %v2058 = vpop.f32.mrf.mxu0
      %v2059 = vadd.f32 %v1946, %v2058
      %2060 = vmatmul.f32.gmra.mxu0 %v1551
      %v2061 = vpop.f32.mrf.mxu0
      %v2062 = vadd.f32 %v1949, %v2061
      %2063 = vmatmul.f32.gmra.mxu0 %v1559
      %v2064 = vpop.f32.mrf.mxu0
      %v2065 = vadd.f32 %v1952, %v2064
      %2066 = vmatmul.f32.gmra.mxu0 %v1567
      %v2067 = vpop.f32.mrf.mxu0
      %v2068 = vadd.f32 %v1955, %v2067
      %2069 = vmatmul.f32.gmra.mxu0 %v1575
      %v2070 = vpop.f32.mrf.mxu0
      %v2071 = vadd.f32 %v1958, %v2070
      %2072 = vmatmul.f32.gmra.mxu0 %v1583
      %v2073 = vpop.f32.mrf.mxu0
      %v2074 = vadd.f32 %v1961, %v2073
      %2075 = vmatmul.f32.gmra.mxu0 %v1591
      %v2076 = vpop.f32.mrf.mxu0
      %v2077 = vadd.f32 %v1964, %v2076
      %2078 = vmatmul.f32.gmra.mxu0 %v1599
      %v2079 = vpop.f32.mrf.mxu0
      %v2080 = vadd.f32 %v1967, %v2079
      %2081 = vmatmul.f32.gmra.mxu0 %v1607
      %v2082 = vpop.f32.mrf.mxu0
      %v2083 = vadd.f32 %v1970, %v2082
      %2084 = vmatmul.f32.gmra.mxu0 %v1615
      %v2085 = vpop.f32.mrf.mxu0
      %v2086 = vadd.f32 %v1973, %v2085
      %2087 = vdwg.mxu0
      %2088 = vmatpush.msra.mxu0 %v1684
      %2089 = vmatpush.msra.mxu0 %v1683
      %2090 = vmatpush.msra.mxu0 %v1682
      %2091 = vmatpush.msra.mxu0 %v1681
      %2092 = vmatpush.msra.mxu0 %v1680
      %2093 = vmatpush.msra.mxu0 %v1679
      %2094 = vmatpush.msra.mxu0 %v1678
      %2095 = vmatpush.msra.mxu0 %v1677
      %2096 = vmatpush.msra.mxu0 %v1676
      %2097 = vmatpush.msra.mxu0 %v1675
      %2098 = vmatpush.msra.mxu0 %v1674
      %2099 = vmatpush.msra.mxu0 %v1673
      %2100 = vmatpush.msra.mxu0 %v1672
      %2101 = vmatpush.msra.mxu0 %v1671
      %2102 = vmatpush.msra.mxu0 %v1670
      %2103 = vmatpush.msra.mxu0 %v1669
      %2104 = vmatmul.f32.gmra.mxu0 %v1368
      %v2105 = vpop.f32.mrf.mxu0
      %v2106 = vadd.f32 %v1993, %v2105
      %2107 = vmatmul.f32.gmra.mxu0 %v1376
      %v2108 = vpop.f32.mrf.mxu0
      %v2109 = vadd.f32 %v1996, %v2108
      %2110 = vmatmul.f32.gmra.mxu0 %v1384
      %v2111 = vpop.f32.mrf.mxu0
      %v2112 = vadd.f32 %v1999, %v2111
      %2113 = vmatmul.f32.gmra.mxu0 %v1392
      %v2114 = vpop.f32.mrf.mxu0
      %v2115 = vadd.f32 %v2002, %v2114
      %2116 = vmatmul.f32.gmra.mxu0 %v1400
      %v2117 = vpop.f32.mrf.mxu0
      %v2118 = vadd.f32 %v2005, %v2117
      %2119 = vmatmul.f32.gmra.mxu0 %v1408
      %v2120 = vpop.f32.mrf.mxu0
      %v2121 = vadd.f32 %v2008, %v2120
      %2122 = vmatmul.f32.gmra.mxu0 %v1416
      %v2123 = vpop.f32.mrf.mxu0
      %v2124 = vadd.f32 %v2011, %v2123
      %2125 = vmatmul.f32.gmra.mxu0 %v1424
      %v2126 = vpop.f32.mrf.mxu0
      %v2127 = vadd.f32 %v2014, %v2126
      %2128 = vmatmul.f32.gmra.mxu0 %v1432
      %v2129 = vpop.f32.mrf.mxu0
      %v2130 = vadd.f32 %v2017, %v2129
      %2131 = vmatmul.f32.gmra.mxu0 %v1440
      %v2132 = vpop.f32.mrf.mxu0
      %v2133 = vadd.f32 %v2020, %v2132
      %2134 = vmatmul.f32.gmra.mxu0 %v1448
      %v2135 = vpop.f32.mrf.mxu0
      %v2136 = vadd.f32 %v2023, %v2135
      %2137 = vmatmul.f32.gmra.mxu0 %v1456
      %v2138 = vpop.f32.mrf.mxu0
      %v2139 = vadd.f32 %v2026, %v2138
      %2140 = vmatmul.f32.gmra.mxu0 %v1464
      %v2141 = vpop.f32.mrf.mxu0
      %v2142 = vadd.f32 %v2029, %v2141
      %2143 = vmatmul.f32.gmra.mxu0 %v1472
      %v2144 = vpop.f32.mrf.mxu0
      %v2145 = vadd.f32 %v2032, %v2144
      %2146 = vmatmul.f32.gmra.mxu0 %v1480
      %v2147 = vpop.f32.mrf.mxu0
      %v2148 = vadd.f32 %v2035, %v2147
      %2149 = vmatmul.f32.gmra.mxu0 %v1488
      %v2150 = vpop.f32.mrf.mxu0
      %v2151 = vadd.f32 %v2038, %v2150
      %2152 = vmatmul.f32.gmra.mxu0 %v1496
      %v2153 = vpop.f32.mrf.mxu0
      %v2154 = vadd.f32 %v2041, %v2153
      %2155 = vmatmul.f32.gmra.mxu0 %v1504
      %v2156 = vpop.f32.mrf.mxu0
      %v2157 = vadd.f32 %v2044, %v2156
      %2158 = vmatmul.f32.gmra.mxu0 %v1512
      %v2159 = vpop.f32.mrf.mxu0
      %v2160 = vadd.f32 %v2047, %v2159
      %2161 = vmatmul.f32.gmra.mxu0 %v1520
      %v2162 = vpop.f32.mrf.mxu0
      %v2163 = vadd.f32 %v2050, %v2162
      %2164 = vmatmul.f32.gmra.mxu0 %v1528
      %v2165 = vpop.f32.mrf.mxu0
      %v2166 = vadd.f32 %v2053, %v2165
      %2167 = vmatmul.f32.gmra.mxu0 %v1536
      %v2168 = vpop.f32.mrf.mxu0
      %v2169 = vadd.f32 %v2056, %v2168
      %2170 = vmatmul.f32.gmra.mxu0 %v1544
      %v2171 = vpop.f32.mrf.mxu0
      %v2172 = vadd.f32 %v2059, %v2171
      %2173 = vmatmul.f32.gmra.mxu0 %v1552
      %v2174 = vpop.f32.mrf.mxu0
      %v2175 = vadd.f32 %v2062, %v2174
      %2176 = vmatmul.f32.gmra.mxu0 %v1560
      %v2177 = vpop.f32.mrf.mxu0
      %v2178 = vadd.f32 %v2065, %v2177
      %2179 = vmatmul.f32.gmra.mxu0 %v1568
      %v2180 = vpop.f32.mrf.mxu0
      %v2181 = vadd.f32 %v2068, %v2180
      %2182 = vmatmul.f32.gmra.mxu0 %v1576
      %v2183 = vpop.f32.mrf.mxu0
      %v2184 = vadd.f32 %v2071, %v2183
      %2185 = vmatmul.f32.gmra.mxu0 %v1584
      %v2186 = vpop.f32.mrf.mxu0
      %v2187 = vadd.f32 %v2074, %v2186
      %2188 = vmatmul.f32.gmra.mxu0 %v1592
      %v2189 = vpop.f32.mrf.mxu0
      %v2190 = vadd.f32 %v2077, %v2189
      %2191 = vmatmul.f32.gmra.mxu0 %v1600
      %v2192 = vpop.f32.mrf.mxu0
      %v2193 = vadd.f32 %v2080, %v2192
      %2194 = vmatmul.f32.gmra.mxu0 %v1608
      %v2195 = vpop.f32.mrf.mxu0
      %v2196 = vadd.f32 %v2083, %v2195
      %2197 = vmatmul.f32.gmra.mxu0 %v1616
      %v2198 = vpop.f32.mrf.mxu0
      %v2199 = vadd.f32 %v2086, %v2198
      %2200 = vdwg.mxu0
      %2201 = vmatpush.msra.mxu0 %v1700
      %2202 = vmatpush.msra.mxu0 %v1699
      %2203 = vmatpush.msra.mxu0 %v1698
      %2204 = vmatpush.msra.mxu0 %v1697
      %2205 = vmatpush.msra.mxu0 %v1696
      %2206 = vmatpush.msra.mxu0 %v1695
      %2207 = vmatpush.msra.mxu0 %v1694
      %2208 = vmatpush.msra.mxu0 %v1693
      %2209 = vmatpush.msra.mxu0 %v1692
      %2210 = vmatpush.msra.mxu0 %v1691
      %2211 = vmatpush.msra.mxu0 %v1690
      %2212 = vmatpush.msra.mxu0 %v1689
      %2213 = vmatpush.msra.mxu0 %v1688
      %2214 = vmatpush.msra.mxu0 %v1687
      %2215 = vmatpush.msra.mxu0 %v1686
      %2216 = vmatpush.msra.mxu0 %v1685
      %2217 = vmatmul.f32.gmra.mxu0 %v1369
      %v2218 = vpop.f32.mrf.mxu0
      %v2219 = vadd.f32 %v2106, %v2218
      %2220 = vmatmul.f32.gmra.mxu0 %v1377
      %v2221 = vpop.f32.mrf.mxu0
      %v2222 = vadd.f32 %v2109, %v2221
      %2223 = vmatmul.f32.gmra.mxu0 %v1385
      %v2224 = vpop.f32.mrf.mxu0
      %v2225 = vadd.f32 %v2112, %v2224
      %2226 = vmatmul.f32.gmra.mxu0 %v1393
      %v2227 = vpop.f32.mrf.mxu0
      %v2228 = vadd.f32 %v2115, %v2227
      %2229 = vmatmul.f32.gmra.mxu0 %v1401
      %v2230 = vpop.f32.mrf.mxu0
      %v2231 = vadd.f32 %v2118, %v2230
      %2232 = vmatmul.f32.gmra.mxu0 %v1409
      %v2233 = vpop.f32.mrf.mxu0
      %v2234 = vadd.f32 %v2121, %v2233
      %2235 = vmatmul.f32.gmra.mxu0 %v1417
      %v2236 = vpop.f32.mrf.mxu0
      %v2237 = vadd.f32 %v2124, %v2236
      %2238 = vmatmul.f32.gmra.mxu0 %v1425
      %v2239 = vpop.f32.mrf.mxu0
      %v2240 = vadd.f32 %v2127, %v2239
      %2241 = vmatmul.f32.gmra.mxu0 %v1433
      %v2242 = vpop.f32.mrf.mxu0
      %v2243 = vadd.f32 %v2130, %v2242
      %2244 = vmatmul.f32.gmra.mxu0 %v1441
      %v2245 = vpop.f32.mrf.mxu0
      %v2246 = vadd.f32 %v2133, %v2245
      %2247 = vmatmul.f32.gmra.mxu0 %v1449
      %v2248 = vpop.f32.mrf.mxu0
      %v2249 = vadd.f32 %v2136, %v2248
      %2250 = vmatmul.f32.gmra.mxu0 %v1457
      %v2251 = vpop.f32.mrf.mxu0
      %v2252 = vadd.f32 %v2139, %v2251
      %2253 = vmatmul.f32.gmra.mxu0 %v1465
      %v2254 = vpop.f32.mrf.mxu0
      %v2255 = vadd.f32 %v2142, %v2254
      %2256 = vmatmul.f32.gmra.mxu0 %v1473
      %v2257 = vpop.f32.mrf.mxu0
      %v2258 = vadd.f32 %v2145, %v2257
      %2259 = vmatmul.f32.gmra.mxu0 %v1481
      %v2260 = vpop.f32.mrf.mxu0
      %v2261 = vadd.f32 %v2148, %v2260
      %2262 = vmatmul.f32.gmra.mxu0 %v1489
      %v2263 = vpop.f32.mrf.mxu0
      %v2264 = vadd.f32 %v2151, %v2263
      %2265 = vmatmul.f32.gmra.mxu0 %v1497
      %v2266 = vpop.f32.mrf.mxu0
      %v2267 = vadd.f32 %v2154, %v2266
      %2268 = vmatmul.f32.gmra.mxu0 %v1505
      %v2269 = vpop.f32.mrf.mxu0
      %v2270 = vadd.f32 %v2157, %v2269
      %2271 = vmatmul.f32.gmra.mxu0 %v1513
      %v2272 = vpop.f32.mrf.mxu0
      %v2273 = vadd.f32 %v2160, %v2272
      %2274 = vmatmul.f32.gmra.mxu0 %v1521
      %v2275 = vpop.f32.mrf.mxu0
      %v2276 = vadd.f32 %v2163, %v2275
      %2277 = vmatmul.f32.gmra.mxu0 %v1529
      %v2278 = vpop.f32.mrf.mxu0
      %v2279 = vadd.f32 %v2166, %v2278
      %2280 = vmatmul.f32.gmra.mxu0 %v1537
      %v2281 = vpop.f32.mrf.mxu0
      %v2282 = vadd.f32 %v2169, %v2281
      %2283 = vmatmul.f32.gmra.mxu0 %v1545
      %v2284 = vpop.f32.mrf.mxu0
      %v2285 = vadd.f32 %v2172, %v2284
      %2286 = vmatmul.f32.gmra.mxu0 %v1553
      %v2287 = vpop.f32.mrf.mxu0
      %v2288 = vadd.f32 %v2175, %v2287
      %2289 = vmatmul.f32.gmra.mxu0 %v1561
      %v2290 = vpop.f32.mrf.mxu0
      %v2291 = vadd.f32 %v2178, %v2290
      %2292 = vmatmul.f32.gmra.mxu0 %v1569
      %v2293 = vpop.f32.mrf.mxu0
      %v2294 = vadd.f32 %v2181, %v2293
      %2295 = vmatmul.f32.gmra.mxu0 %v1577
      %v2296 = vpop.f32.mrf.mxu0
      %v2297 = vadd.f32 %v2184, %v2296
      %2298 = vmatmul.f32.gmra.mxu0 %v1585
      %v2299 = vpop.f32.mrf.mxu0
      %v2300 = vadd.f32 %v2187, %v2299
      %2301 = vmatmul.f32.gmra.mxu0 %v1593
      %v2302 = vpop.f32.mrf.mxu0
      %v2303 = vadd.f32 %v2190, %v2302
      %2304 = vmatmul.f32.gmra.mxu0 %v1601
      %v2305 = vpop.f32.mrf.mxu0
      %v2306 = vadd.f32 %v2193, %v2305
      %2307 = vmatmul.f32.gmra.mxu0 %v1609
      %v2308 = vpop.f32.mrf.mxu0
      %v2309 = vadd.f32 %v2196, %v2308
      %2310 = vmatmul.f32.gmra.mxu0 %v1617
      %v2311 = vpop.f32.mrf.mxu0
      %v2312 = vadd.f32 %v2199, %v2311
      %2313 = vdwg.mxu0
      %2314 = vmatpush.msra.mxu0 %v1716
      %2315 = vmatpush.msra.mxu0 %v1715
      %2316 = vmatpush.msra.mxu0 %v1714
      %2317 = vmatpush.msra.mxu0 %v1713
      %2318 = vmatpush.msra.mxu0 %v1712
      %2319 = vmatpush.msra.mxu0 %v1711
      %2320 = vmatpush.msra.mxu0 %v1710
      %2321 = vmatpush.msra.mxu0 %v1709
      %2322 = vmatpush.msra.mxu0 %v1708
      %2323 = vmatpush.msra.mxu0 %v1707
      %2324 = vmatpush.msra.mxu0 %v1706
      %2325 = vmatpush.msra.mxu0 %v1705
      %2326 = vmatpush.msra.mxu0 %v1704
      %2327 = vmatpush.msra.mxu0 %v1703
      %2328 = vmatpush.msra.mxu0 %v1702
      %2329 = vmatpush.msra.mxu0 %v1701
      %2330 = vmatmul.f32.gmra.mxu0 %v1370
      %v2331 = vpop.f32.mrf.mxu0
      %v2332 = vadd.f32 %v2219, %v2331
      %2333 = vmatmul.f32.gmra.mxu0 %v1378
      %v2334 = vpop.f32.mrf.mxu0
      %v2335 = vadd.f32 %v2222, %v2334
      %2336 = vmatmul.f32.gmra.mxu0 %v1386
      %v2337 = vpop.f32.mrf.mxu0
      %v2338 = vadd.f32 %v2225, %v2337
      %2339 = vmatmul.f32.gmra.mxu0 %v1394
      %v2340 = vpop.f32.mrf.mxu0
      %v2341 = vadd.f32 %v2228, %v2340
      %2342 = vmatmul.f32.gmra.mxu0 %v1402
      %v2343 = vpop.f32.mrf.mxu0
      %v2344 = vadd.f32 %v2231, %v2343
      %2345 = vmatmul.f32.gmra.mxu0 %v1410
      %v2346 = vpop.f32.mrf.mxu0
      %v2347 = vadd.f32 %v2234, %v2346
      %2348 = vmatmul.f32.gmra.mxu0 %v1418
      %v2349 = vpop.f32.mrf.mxu0
      %v2350 = vadd.f32 %v2237, %v2349
      %2351 = vmatmul.f32.gmra.mxu0 %v1426
      %v2352 = vpop.f32.mrf.mxu0
      %v2353 = vadd.f32 %v2240, %v2352
      %2354 = vmatmul.f32.gmra.mxu0 %v1434
      %v2355 = vpop.f32.mrf.mxu0
      %v2356 = vadd.f32 %v2243, %v2355
      %2357 = vmatmul.f32.gmra.mxu0 %v1442
      %v2358 = vpop.f32.mrf.mxu0
      %v2359 = vadd.f32 %v2246, %v2358
      %2360 = vmatmul.f32.gmra.mxu0 %v1450
      %v2361 = vpop.f32.mrf.mxu0
      %v2362 = vadd.f32 %v2249, %v2361
      %2363 = vmatmul.f32.gmra.mxu0 %v1458
      %v2364 = vpop.f32.mrf.mxu0
      %v2365 = vadd.f32 %v2252, %v2364
      %2366 = vmatmul.f32.gmra.mxu0 %v1466
      %v2367 = vpop.f32.mrf.mxu0
      %v2368 = vadd.f32 %v2255, %v2367
      %2369 = vmatmul.f32.gmra.mxu0 %v1474
      %v2370 = vpop.f32.mrf.mxu0
      %v2371 = vadd.f32 %v2258, %v2370
      %2372 = vmatmul.f32.gmra.mxu0 %v1482
      %v2373 = vpop.f32.mrf.mxu0
      %v2374 = vadd.f32 %v2261, %v2373
      %2375 = vmatmul.f32.gmra.mxu0 %v1490
      %v2376 = vpop.f32.mrf.mxu0
      %v2377 = vadd.f32 %v2264, %v2376
      %2378 = vmatmul.f32.gmra.mxu0 %v1498
      %v2379 = vpop.f32.mrf.mxu0
      %v2380 = vadd.f32 %v2267, %v2379
      %2381 = vmatmul.f32.gmra.mxu0 %v1506
      %v2382 = vpop.f32.mrf.mxu0
      %v2383 = vadd.f32 %v2270, %v2382
      %2384 = vmatmul.f32.gmra.mxu0 %v1514
      %v2385 = vpop.f32.mrf.mxu0
      %v2386 = vadd.f32 %v2273, %v2385
      %2387 = vmatmul.f32.gmra.mxu0 %v1522
      %v2388 = vpop.f32.mrf.mxu0
      %v2389 = vadd.f32 %v2276, %v2388
      %2390 = vmatmul.f32.gmra.mxu0 %v1530
      %v2391 = vpop.f32.mrf.mxu0
      %v2392 = vadd.f32 %v2279, %v2391
      %2393 = vmatmul.f32.gmra.mxu0 %v1538
      %v2394 = vpop.f32.mrf.mxu0
      %v2395 = vadd.f32 %v2282, %v2394
      %2396 = vmatmul.f32.gmra.mxu0 %v1546
      %v2397 = vpop.f32.mrf.mxu0
      %v2398 = vadd.f32 %v2285, %v2397
      %2399 = vmatmul.f32.gmra.mxu0 %v1554
      %v2400 = vpop.f32.mrf.mxu0
      %v2401 = vadd.f32 %v2288, %v2400
      %2402 = vmatmul.f32.gmra.mxu0 %v1562
      %v2403 = vpop.f32.mrf.mxu0
      %v2404 = vadd.f32 %v2291, %v2403
      %2405 = vmatmul.f32.gmra.mxu0 %v1570
      %v2406 = vpop.f32.mrf.mxu0
      %v2407 = vadd.f32 %v2294, %v2406
      %2408 = vmatmul.f32.gmra.mxu0 %v1578
      %v2409 = vpop.f32.mrf.mxu0
      %v2410 = vadd.f32 %v2297, %v2409
      %2411 = vmatmul.f32.gmra.mxu0 %v1586
      %v2412 = vpop.f32.mrf.mxu0
      %v2413 = vadd.f32 %v2300, %v2412
      %2414 = vmatmul.f32.gmra.mxu0 %v1594
      %v2415 = vpop.f32.mrf.mxu0
      %v2416 = vadd.f32 %v2303, %v2415
      %2417 = vmatmul.f32.gmra.mxu0 %v1602
      %v2418 = vpop.f32.mrf.mxu0
      %v2419 = vadd.f32 %v2306, %v2418
      %2420 = vmatmul.f32.gmra.mxu0 %v1610
      %v2421 = vpop.f32.mrf.mxu0
      %v2422 = vadd.f32 %v2309, %v2421
      %2423 = vmatmul.f32.gmra.mxu0 %v1618
      %v2424 = vpop.f32.mrf.mxu0
      %v2425 = vadd.f32 %v2312, %v2424
      %2426 = vdwg.mxu0
      %2427 = vmatpush.msra.mxu0 %v1732
      %2428 = vmatpush.msra.mxu0 %v1731
      %2429 = vmatpush.msra.mxu0 %v1730
      %2430 = vmatpush.msra.mxu0 %v1729
      %2431 = vmatpush.msra.mxu0 %v1728
      %2432 = vmatpush.msra.mxu0 %v1727
      %2433 = vmatpush.msra.mxu0 %v1726
      %2434 = vmatpush.msra.mxu0 %v1725
      %2435 = vmatpush.msra.mxu0 %v1724
      %2436 = vmatpush.msra.mxu0 %v1723
      %2437 = vmatpush.msra.mxu0 %v1722
      %2438 = vmatpush.msra.mxu0 %v1721
      %2439 = vmatpush.msra.mxu0 %v1720
      %2440 = vmatpush.msra.mxu0 %v1719
      %2441 = vmatpush.msra.mxu0 %v1718
      %2442 = vmatpush.msra.mxu0 %v1717
      %2443 = vmatmul.f32.gmra.mxu0 %v1371
      %v2444 = vpop.f32.mrf.mxu0
      %v2445 = vadd.f32 %v2332, %v2444
      %2446 = vmatmul.f32.gmra.mxu0 %v1379
      %v2447 = vpop.f32.mrf.mxu0
      %v2448 = vadd.f32 %v2335, %v2447
      %2449 = vmatmul.f32.gmra.mxu0 %v1387
      %v2450 = vpop.f32.mrf.mxu0
      %v2451 = vadd.f32 %v2338, %v2450
      %2452 = vmatmul.f32.gmra.mxu0 %v1395
      %v2453 = vpop.f32.mrf.mxu0
      %v2454 = vadd.f32 %v2341, %v2453
      %2455 = vmatmul.f32.gmra.mxu0 %v1403
      %v2456 = vpop.f32.mrf.mxu0
      %v2457 = vadd.f32 %v2344, %v2456
      %2458 = vmatmul.f32.gmra.mxu0 %v1411
      %v2459 = vpop.f32.mrf.mxu0
      %v2460 = vadd.f32 %v2347, %v2459
      %2461 = vmatmul.f32.gmra.mxu0 %v1419
      %v2462 = vpop.f32.mrf.mxu0
      %v2463 = vadd.f32 %v2350, %v2462
      %2464 = vmatmul.f32.gmra.mxu0 %v1427
      %v2465 = vpop.f32.mrf.mxu0
      %v2466 = vadd.f32 %v2353, %v2465
      %2467 = vmatmul.f32.gmra.mxu0 %v1435
      %v2468 = vpop.f32.mrf.mxu0
      %v2469 = vadd.f32 %v2356, %v2468
      %2470 = vmatmul.f32.gmra.mxu0 %v1443
      %v2471 = vpop.f32.mrf.mxu0
      %v2472 = vadd.f32 %v2359, %v2471
      %2473 = vmatmul.f32.gmra.mxu0 %v1451
      %v2474 = vpop.f32.mrf.mxu0
      %v2475 = vadd.f32 %v2362, %v2474
      %2476 = vmatmul.f32.gmra.mxu0 %v1459
      %v2477 = vpop.f32.mrf.mxu0
      %v2478 = vadd.f32 %v2365, %v2477
      %2479 = vmatmul.f32.gmra.mxu0 %v1467
      %v2480 = vpop.f32.mrf.mxu0
      %v2481 = vadd.f32 %v2368, %v2480
      %2482 = vmatmul.f32.gmra.mxu0 %v1475
      %v2483 = vpop.f32.mrf.mxu0
      %v2484 = vadd.f32 %v2371, %v2483
      %2485 = vmatmul.f32.gmra.mxu0 %v1483
      %v2486 = vpop.f32.mrf.mxu0
      %v2487 = vadd.f32 %v2374, %v2486
      %2488 = vmatmul.f32.gmra.mxu0 %v1491
      %v2489 = vpop.f32.mrf.mxu0
      %v2490 = vadd.f32 %v2377, %v2489
      %2491 = vmatmul.f32.gmra.mxu0 %v1499
      %v2492 = vpop.f32.mrf.mxu0
      %v2493 = vadd.f32 %v2380, %v2492
      %2494 = vmatmul.f32.gmra.mxu0 %v1507
      %v2495 = vpop.f32.mrf.mxu0
      %v2496 = vadd.f32 %v2383, %v2495
      %2497 = vmatmul.f32.gmra.mxu0 %v1515
      %v2498 = vpop.f32.mrf.mxu0
      %v2499 = vadd.f32 %v2386, %v2498
      %2500 = vmatmul.f32.gmra.mxu0 %v1523
      %v2501 = vpop.f32.mrf.mxu0
      %v2502 = vadd.f32 %v2389, %v2501
      %2503 = vmatmul.f32.gmra.mxu0 %v1531
      %v2504 = vpop.f32.mrf.mxu0
      %v2505 = vadd.f32 %v2392, %v2504
      %2506 = vmatmul.f32.gmra.mxu0 %v1539
      %v2507 = vpop.f32.mrf.mxu0
      %v2508 = vadd.f32 %v2395, %v2507
      %2509 = vmatmul.f32.gmra.mxu0 %v1547
      %v2510 = vpop.f32.mrf.mxu0
      %v2511 = vadd.f32 %v2398, %v2510
      %2512 = vmatmul.f32.gmra.mxu0 %v1555
      %v2513 = vpop.f32.mrf.mxu0
      %v2514 = vadd.f32 %v2401, %v2513
      %2515 = vmatmul.f32.gmra.mxu0 %v1563
      %v2516 = vpop.f32.mrf.mxu0
      %v2517 = vadd.f32 %v2404, %v2516
      %2518 = vmatmul.f32.gmra.mxu0 %v1571
      %v2519 = vpop.f32.mrf.mxu0
      %v2520 = vadd.f32 %v2407, %v2519
      %2521 = vmatmul.f32.gmra.mxu0 %v1579
      %v2522 = vpop.f32.mrf.mxu0
      %v2523 = vadd.f32 %v2410, %v2522
      %2524 = vmatmul.f32.gmra.mxu0 %v1587
      %v2525 = vpop.f32.mrf.mxu0
      %v2526 = vadd.f32 %v2413, %v2525
      %2527 = vmatmul.f32.gmra.mxu0 %v1595
      %v2528 = vpop.f32.mrf.mxu0
      %v2529 = vadd.f32 %v2416, %v2528
      %2530 = vmatmul.f32.gmra.mxu0 %v1603
      %v2531 = vpop.f32.mrf.mxu0
      %v2532 = vadd.f32 %v2419, %v2531
      %2533 = vmatmul.f32.gmra.mxu0 %v1611
      %v2534 = vpop.f32.mrf.mxu0
      %v2535 = vadd.f32 %v2422, %v2534
      %2536 = vmatmul.f32.gmra.mxu0 %v1619
      %v2537 = vpop.f32.mrf.mxu0
      %v2538 = vadd.f32 %v2425, %v2537
      %2539 = vdwg.mxu0
      %2540 = vmatpush.msra.mxu0 %v1748
      %2541 = vmatpush.msra.mxu0 %v1747
      %2542 = vmatpush.msra.mxu0 %v1746
      %2543 = vmatpush.msra.mxu0 %v1745
      %2544 = vmatpush.msra.mxu0 %v1744
      %2545 = vmatpush.msra.mxu0 %v1743
      %2546 = vmatpush.msra.mxu0 %v1742
      %2547 = vmatpush.msra.mxu0 %v1741
      %2548 = vmatpush.msra.mxu0 %v1740
      %2549 = vmatpush.msra.mxu0 %v1739
      %2550 = vmatpush.msra.mxu0 %v1738
      %2551 = vmatpush.msra.mxu0 %v1737
      %2552 = vmatpush.msra.mxu0 %v1736
      %2553 = vmatpush.msra.mxu0 %v1735
      %2554 = vmatpush.msra.mxu0 %v1734
      %2555 = vmatpush.msra.mxu0 %v1733
      %2556 = vmatmul.f32.gmra.mxu0 %v1372
      %v2557 = vpop.f32.mrf.mxu0
      %v2558 = vadd.f32 %v2445, %v2557
      %2559 = vmatmul.f32.gmra.mxu0 %v1380
      %v2560 = vpop.f32.mrf.mxu0
      %v2561 = vadd.f32 %v2448, %v2560
      %2562 = vmatmul.f32.gmra.mxu0 %v1388
      %v2563 = vpop.f32.mrf.mxu0
      %v2564 = vadd.f32 %v2451, %v2563
      %2565 = vmatmul.f32.gmra.mxu0 %v1396
      %v2566 = vpop.f32.mrf.mxu0
      %v2567 = vadd.f32 %v2454, %v2566
      %2568 = vmatmul.f32.gmra.mxu0 %v1404
      %v2569 = vpop.f32.mrf.mxu0
      %v2570 = vadd.f32 %v2457, %v2569
      %2571 = vmatmul.f32.gmra.mxu0 %v1412
      %v2572 = vpop.f32.mrf.mxu0
      %v2573 = vadd.f32 %v2460, %v2572
      %2574 = vmatmul.f32.gmra.mxu0 %v1420
      %v2575 = vpop.f32.mrf.mxu0
      %v2576 = vadd.f32 %v2463, %v2575
      %2577 = vmatmul.f32.gmra.mxu0 %v1428
      %v2578 = vpop.f32.mrf.mxu0
      %v2579 = vadd.f32 %v2466, %v2578
      %2580 = vmatmul.f32.gmra.mxu0 %v1436
      %v2581 = vpop.f32.mrf.mxu0
      %v2582 = vadd.f32 %v2469, %v2581
      %2583 = vmatmul.f32.gmra.mxu0 %v1444
      %v2584 = vpop.f32.mrf.mxu0
      %v2585 = vadd.f32 %v2472, %v2584
      %2586 = vmatmul.f32.gmra.mxu0 %v1452
      %v2587 = vpop.f32.mrf.mxu0
      %v2588 = vadd.f32 %v2475, %v2587
      %2589 = vmatmul.f32.gmra.mxu0 %v1460
      %v2590 = vpop.f32.mrf.mxu0
      %v2591 = vadd.f32 %v2478, %v2590
      %2592 = vmatmul.f32.gmra.mxu0 %v1468
      %v2593 = vpop.f32.mrf.mxu0
      %v2594 = vadd.f32 %v2481, %v2593
      %2595 = vmatmul.f32.gmra.mxu0 %v1476
      %v2596 = vpop.f32.mrf.mxu0
      %v2597 = vadd.f32 %v2484, %v2596
      %2598 = vmatmul.f32.gmra.mxu0 %v1484
      %v2599 = vpop.f32.mrf.mxu0
      %v2600 = vadd.f32 %v2487, %v2599
      %2601 = vmatmul.f32.gmra.mxu0 %v1492
      %v2602 = vpop.f32.mrf.mxu0
      %v2603 = vadd.f32 %v2490, %v2602
      %2604 = vmatmul.f32.gmra.mxu0 %v1500
      %v2605 = vpop.f32.mrf.mxu0
      %v2606 = vadd.f32 %v2493, %v2605
      %2607 = vmatmul.f32.gmra.mxu0 %v1508
      %v2608 = vpop.f32.mrf.mxu0
      %v2609 = vadd.f32 %v2496, %v2608
      %2610 = vmatmul.f32.gmra.mxu0 %v1516
      %v2611 = vpop.f32.mrf.mxu0
      %v2612 = vadd.f32 %v2499, %v2611
      %2613 = vmatmul.f32.gmra.mxu0 %v1524
      %v2614 = vpop.f32.mrf.mxu0
      %v2615 = vadd.f32 %v2502, %v2614
      %2616 = vmatmul.f32.gmra.mxu0 %v1532
      %v2617 = vpop.f32.mrf.mxu0
      %v2618 = vadd.f32 %v2505, %v2617
      %2619 = vmatmul.f32.gmra.mxu0 %v1540
      %v2620 = vpop.f32.mrf.mxu0
      %v2621 = vadd.f32 %v2508, %v2620
      %2622 = vmatmul.f32.gmra.mxu0 %v1548
      %v2623 = vpop.f32.mrf.mxu0
      %v2624 = vadd.f32 %v2511, %v2623
      %2625 = vmatmul.f32.gmra.mxu0 %v1556
      %v2626 = vpop.f32.mrf.mxu0
      %v2627 = vadd.f32 %v2514, %v2626
      %2628 = vmatmul.f32.gmra.mxu0 %v1564
      %v2629 = vpop.f32.mrf.mxu0
      %v2630 = vadd.f32 %v2517, %v2629
      %2631 = vmatmul.f32.gmra.mxu0 %v1572
      %v2632 = vpop.f32.mrf.mxu0
      %v2633 = vadd.f32 %v2520, %v2632
      %2634 = vmatmul.f32.gmra.mxu0 %v1580
      %v2635 = vpop.f32.mrf.mxu0
      %v2636 = vadd.f32 %v2523, %v2635
      %2637 = vmatmul.f32.gmra.mxu0 %v1588
      %v2638 = vpop.f32.mrf.mxu0
      %v2639 = vadd.f32 %v2526, %v2638
      %2640 = vmatmul.f32.gmra.mxu0 %v1596
      %v2641 = vpop.f32.mrf.mxu0
      %v2642 = vadd.f32 %v2529, %v2641
      %2643 = vmatmul.f32.gmra.mxu0 %v1604
      %v2644 = vpop.f32.mrf.mxu0
      %v2645 = vadd.f32 %v2532, %v2644
      %2646 = vmatmul.f32.gmra.mxu0 %v1612
      %v2647 = vpop.f32.mrf.mxu0
      %v2648 = vadd.f32 %v2535, %v2647
      %2649 = vmatmul.f32.gmra.mxu0 %v1620
      %v2650 = vpop.f32.mrf.mxu0
      %v2651 = vadd.f32 %v2538, %v2650
      %2652 = vdwg.mxu0
      %v2653 = vxor.u32 %v2558, 2147483648
      %v2654 = vxor.u32 %v2561, 2147483648
      %v2655 = vxor.u32 %v2564, 2147483648
      %v2656 = vxor.u32 %v2567, 2147483648
      %v2657 = vxor.u32 %v2570, 2147483648
      %v2658 = vxor.u32 %v2573, 2147483648
      %v2659 = vxor.u32 %v2576, 2147483648
      %v2660 = vxor.u32 %v2579, 2147483648
      %v2661 = vxor.u32 %v2582, 2147483648
      %v2662 = vxor.u32 %v2585, 2147483648
      %v2663 = vxor.u32 %v2588, 2147483648
      %v2664 = vxor.u32 %v2591, 2147483648
      %v2665 = vxor.u32 %v2594, 2147483648
      %v2666 = vxor.u32 %v2597, 2147483648
      %v2667 = vxor.u32 %v2600, 2147483648
      %v2668 = vxor.u32 %v2603, 2147483648
      %v2669 = vxor.u32 %v2606, 2147483648
      %v2670 = vxor.u32 %v2609, 2147483648
      %v2671 = vxor.u32 %v2612, 2147483648
      %v2672 = vxor.u32 %v2615, 2147483648
      %v2673 = vxor.u32 %v2618, 2147483648
      %v2674 = vxor.u32 %v2621, 2147483648
      %v2675 = vxor.u32 %v2624, 2147483648
      %v2676 = vxor.u32 %v2627, 2147483648
      %v2677 = vxor.u32 %v2630, 2147483648
      %v2678 = vxor.u32 %v2633, 2147483648
      %v2679 = vxor.u32 %v2636, 2147483648
      %v2680 = vxor.u32 %v2639, 2147483648
      %v2681 = vxor.u32 %v2642, 2147483648
      %v2682 = vxor.u32 %v2645, 2147483648
      %v2683 = vxor.u32 %v2648, 2147483648
      %v2684 = vxor.u32 %v2651, 2147483648
      %v2685 = vmul.f32 %v2653, 1.442695
      %v2686 = vpow.pop %v2685
      %v2687 = vmul.f32 %v2654, 1.442695
      %v2688 = vpow.pop %v2687
      %v2689 = vmul.f32 %v2655, 1.442695
      %v2690 = vpow.pop %v2689
      %v2691 = vmul.f32 %v2656, 1.442695
      %v2692 = vpow.pop %v2691
      %v2693 = vmul.f32 %v2657, 1.442695
      %v2694 = vpow.pop %v2693
      %v2695 = vmul.f32 %v2658, 1.442695
      %v2696 = vpow.pop %v2695
      %v2697 = vmul.f32 %v2659, 1.442695
      %v2698 = vpow.pop %v2697
      %v2699 = vmul.f32 %v2660, 1.442695
      %v2700 = vpow.pop %v2699
      %v2701 = vmul.f32 %v2661, 1.442695
      %v2702 = vpow.pop %v2701
      %v2703 = vmul.f32 %v2662, 1.442695
      %v2704 = vpow.pop %v2703
      %v2705 = vmul.f32 %v2663, 1.442695
      %v2706 = vpow.pop %v2705
      %v2707 = vmul.f32 %v2664, 1.442695
      %v2708 = vpow.pop %v2707
      %v2709 = vmul.f32 %v2665, 1.442695
      %v2710 = vpow.pop %v2709
      %v2711 = vmul.f32 %v2666, 1.442695
      %v2712 = vpow.pop %v2711
      %v2713 = vmul.f32 %v2667, 1.442695
      %v2714 = vpow.pop %v2713
      %v2715 = vmul.f32 %v2668, 1.442695
      %v2716 = vpow.pop %v2715
      %v2717 = vmul.f32 %v2669, 1.442695
      %v2718 = vpow.pop %v2717
      %v2719 = vmul.f32 %v2670, 1.442695
      %v2720 = vpow.pop %v2719
      %v2721 = vmul.f32 %v2671, 1.442695
      %v2722 = vpow.pop %v2721
      %v2723 = vmul.f32 %v2672, 1.442695
      %v2724 = vpow.pop %v2723
      %v2725 = vmul.f32 %v2673, 1.442695
      %v2726 = vpow.pop %v2725
      %v2727 = vmul.f32 %v2674, 1.442695
      %v2728 = vpow.pop %v2727
      %v2729 = vmul.f32 %v2675, 1.442695
      %v2730 = vpow.pop %v2729
      %v2731 = vmul.f32 %v2676, 1.442695
      %v2732 = vpow.pop %v2731
      %v2733 = vmul.f32 %v2677, 1.442695
      %v2734 = vpow.pop %v2733
      %v2735 = vmul.f32 %v2678, 1.442695
      %v2736 = vpow.pop %v2735
      %v2737 = vmul.f32 %v2679, 1.442695
      %v2738 = vpow.pop %v2737
      %v2739 = vmul.f32 %v2680, 1.442695
      %v2740 = vpow.pop %v2739
      %v2741 = vmul.f32 %v2681, 1.442695
      %v2742 = vpow.pop %v2741
      %v2743 = vmul.f32 %v2682, 1.442695
      %v2744 = vpow.pop %v2743
      %v2745 = vmul.f32 %v2683, 1.442695
      %v2746 = vpow.pop %v2745
      %v2747 = vmul.f32 %v2684, 1.442695
      %v2748 = vpow.pop %v2747
      %v2749 = vadd.f32 %v2686, 1.0
      %v2750 = vadd.f32 %v2688, 1.0
      %v2751 = vadd.f32 %v2690, 1.0
      %v2752 = vadd.f32 %v2692, 1.0
      %v2753 = vadd.f32 %v2694, 1.0
      %v2754 = vadd.f32 %v2696, 1.0
      %v2755 = vadd.f32 %v2698, 1.0
      %v2756 = vadd.f32 %v2700, 1.0
      %v2757 = vadd.f32 %v2702, 1.0
      %v2758 = vadd.f32 %v2704, 1.0
      %v2759 = vadd.f32 %v2706, 1.0
      %v2760 = vadd.f32 %v2708, 1.0
      %v2761 = vadd.f32 %v2710, 1.0
      %v2762 = vadd.f32 %v2712, 1.0
      %v2763 = vadd.f32 %v2714, 1.0
      %v2764 = vadd.f32 %v2716, 1.0
      %v2765 = vadd.f32 %v2718, 1.0
      %v2766 = vadd.f32 %v2720, 1.0
      %v2767 = vadd.f32 %v2722, 1.0
      %v2768 = vadd.f32 %v2724, 1.0
      %v2769 = vadd.f32 %v2726, 1.0
      %v2770 = vadd.f32 %v2728, 1.0
      %v2771 = vadd.f32 %v2730, 1.0
      %v2772 = vadd.f32 %v2732, 1.0
      %v2773 = vadd.f32 %v2734, 1.0
      %v2774 = vadd.f32 %v2736, 1.0
      %v2775 = vadd.f32 %v2738, 1.0
      %v2776 = vadd.f32 %v2740, 1.0
      %v2777 = vadd.f32 %v2742, 1.0
      %v2778 = vadd.f32 %v2744, 1.0
      %v2779 = vadd.f32 %v2746, 1.0
      %v2780 = vadd.f32 %v2748, 1.0
      %v2781 = vrcp.pop %v2749
      %v2782 = vmul.f32 %v2749, %v2781
      %v2783 = vsub.f32 1.0, %v2782
      %v2784 = vmul.f32 %v2781, %v2783
      %v2785 = vadd.f32 %v2781, %v2784
      %vm2786 = vweird.f32 %v2749
      %vm2787 = vweird.f32 %v2781
      %vm2788 = vmor %vm2786, %vm2787
      %v2789 = vsel %vm2788, %v2781, %v2785
      %v2790 = vand.u32 2147483647, %v2749
      %vm2791 = vcmp.eq.f32.partialorder %v2790, 8.507059e+37
      %v2792 = vand.u32 %v2749, 2147483648
      %v2793 = vor.u32 1.1754944e-38, %v2792
      %v2794 = vsel %vm2791, %v2793, %v2789
      %v2795 = vmul.f32 1.0, %v2794
      %v2796 = vrcp.pop %v2750
      %v2797 = vmul.f32 %v2750, %v2796
      %v2798 = vsub.f32 1.0, %v2797
      %v2799 = vmul.f32 %v2796, %v2798
      %v2800 = vadd.f32 %v2796, %v2799
      %vm2801 = vweird.f32 %v2750
      %vm2802 = vweird.f32 %v2796
      %vm2803 = vmor %vm2801, %vm2802
      %v2804 = vsel %vm2803, %v2796, %v2800
      %v2805 = vand.u32 2147483647, %v2750
      %vm2806 = vcmp.eq.f32.partialorder %v2805, 8.507059e+37
      %v2807 = vand.u32 %v2750, 2147483648
      %v2808 = vor.u32 1.1754944e-38, %v2807
      %v2809 = vsel %vm2806, %v2808, %v2804
      %v2810 = vmul.f32 1.0, %v2809
      %v2811 = vrcp.pop %v2751
      %v2812 = vmul.f32 %v2751, %v2811
      %v2813 = vsub.f32 1.0, %v2812
      %v2814 = vmul.f32 %v2811, %v2813
      %v2815 = vadd.f32 %v2811, %v2814
      %vm2816 = vweird.f32 %v2751
      %vm2817 = vweird.f32 %v2811
      %vm2818 = vmor %vm2816, %vm2817
      %v2819 = vsel %vm2818, %v2811, %v2815
      %v2820 = vand.u32 2147483647, %v2751
      %vm2821 = vcmp.eq.f32.partialorder %v2820, 8.507059e+37
      %v2822 = vand.u32 %v2751, 2147483648
      %v2823 = vor.u32 1.1754944e-38, %v2822
      %v2824 = vsel %vm2821, %v2823, %v2819
      %v2825 = vmul.f32 1.0, %v2824
      %v2826 = vrcp.pop %v2752
      %v2827 = vmul.f32 %v2752, %v2826
      %v2828 = vsub.f32 1.0, %v2827
      %v2829 = vmul.f32 %v2826, %v2828
      %v2830 = vadd.f32 %v2826, %v2829
      %vm2831 = vweird.f32 %v2752
      %vm2832 = vweird.f32 %v2826
      %vm2833 = vmor %vm2831, %vm2832
      %v2834 = vsel %vm2833, %v2826, %v2830
      %v2835 = vand.u32 2147483647, %v2752
      %vm2836 = vcmp.eq.f32.partialorder %v2835, 8.507059e+37
      %v2837 = vand.u32 %v2752, 2147483648
      %v2838 = vor.u32 1.1754944e-38, %v2837
      %v2839 = vsel %vm2836, %v2838, %v2834
      %v2840 = vmul.f32 1.0, %v2839
      %v2841 = vrcp.pop %v2753
      %v2842 = vmul.f32 %v2753, %v2841
      %v2843 = vsub.f32 1.0, %v2842
      %v2844 = vmul.f32 %v2841, %v2843
      %v2845 = vadd.f32 %v2841, %v2844
      %vm2846 = vweird.f32 %v2753
      %vm2847 = vweird.f32 %v2841
      %vm2848 = vmor %vm2846, %vm2847
      %v2849 = vsel %vm2848, %v2841, %v2845
      %v2850 = vand.u32 2147483647, %v2753
      %vm2851 = vcmp.eq.f32.partialorder %v2850, 8.507059e+37
      %v2852 = vand.u32 %v2753, 2147483648
      %v2853 = vor.u32 1.1754944e-38, %v2852
      %v2854 = vsel %vm2851, %v2853, %v2849
      %v2855 = vmul.f32 1.0, %v2854
      %v2856 = vrcp.pop %v2754
      %v2857 = vmul.f32 %v2754, %v2856
      %v2858 = vsub.f32 1.0, %v2857
      %v2859 = vmul.f32 %v2856, %v2858
      %v2860 = vadd.f32 %v2856, %v2859
      %vm2861 = vweird.f32 %v2754
      %vm2862 = vweird.f32 %v2856
      %vm2863 = vmor %vm2861, %vm2862
      %v2864 = vsel %vm2863, %v2856, %v2860
      %v2865 = vand.u32 2147483647, %v2754
      %vm2866 = vcmp.eq.f32.partialorder %v2865, 8.507059e+37
      %v2867 = vand.u32 %v2754, 2147483648
      %v2868 = vor.u32 1.1754944e-38, %v2867
      %v2869 = vsel %vm2866, %v2868, %v2864
      %v2870 = vmul.f32 1.0, %v2869
      %v2871 = vrcp.pop %v2755
      %v2872 = vmul.f32 %v2755, %v2871
      %v2873 = vsub.f32 1.0, %v2872
      %v2874 = vmul.f32 %v2871, %v2873
      %v2875 = vadd.f32 %v2871, %v2874
      %vm2876 = vweird.f32 %v2755
      %vm2877 = vweird.f32 %v2871
      %vm2878 = vmor %vm2876, %vm2877
      %v2879 = vsel %vm2878, %v2871, %v2875
      %v2880 = vand.u32 2147483647, %v2755
      %vm2881 = vcmp.eq.f32.partialorder %v2880, 8.507059e+37
      %v2882 = vand.u32 %v2755, 2147483648
      %v2883 = vor.u32 1.1754944e-38, %v2882
      %v2884 = vsel %vm2881, %v2883, %v2879
      %v2885 = vmul.f32 1.0, %v2884
      %v2886 = vrcp.pop %v2756
      %v2887 = vmul.f32 %v2756, %v2886
      %v2888 = vsub.f32 1.0, %v2887
      %v2889 = vmul.f32 %v2886, %v2888
      %v2890 = vadd.f32 %v2886, %v2889
      %vm2891 = vweird.f32 %v2756
      %vm2892 = vweird.f32 %v2886
      %vm2893 = vmor %vm2891, %vm2892
      %v2894 = vsel %vm2893, %v2886, %v2890
      %v2895 = vand.u32 2147483647, %v2756
      %vm2896 = vcmp.eq.f32.partialorder %v2895, 8.507059e+37
      %v2897 = vand.u32 %v2756, 2147483648
      %v2898 = vor.u32 1.1754944e-38, %v2897
      %v2899 = vsel %vm2896, %v2898, %v2894
      %v2900 = vmul.f32 1.0, %v2899
      %v2901 = vrcp.pop %v2757
      %v2902 = vmul.f32 %v2757, %v2901
      %v2903 = vsub.f32 1.0, %v2902
      %v2904 = vmul.f32 %v2901, %v2903
      %v2905 = vadd.f32 %v2901, %v2904
      %vm2906 = vweird.f32 %v2757
      %vm2907 = vweird.f32 %v2901
      %vm2908 = vmor %vm2906, %vm2907
      %v2909 = vsel %vm2908, %v2901, %v2905
      %v2910 = vand.u32 2147483647, %v2757
      %vm2911 = vcmp.eq.f32.partialorder %v2910, 8.507059e+37
      %v2912 = vand.u32 %v2757, 2147483648
      %v2913 = vor.u32 1.1754944e-38, %v2912
      %v2914 = vsel %vm2911, %v2913, %v2909
      %v2915 = vmul.f32 1.0, %v2914
      %v2916 = vrcp.pop %v2758
      %v2917 = vmul.f32 %v2758, %v2916
      %v2918 = vsub.f32 1.0, %v2917
      %v2919 = vmul.f32 %v2916, %v2918
      %v2920 = vadd.f32 %v2916, %v2919
      %vm2921 = vweird.f32 %v2758
      %vm2922 = vweird.f32 %v2916
      %vm2923 = vmor %vm2921, %vm2922
      %v2924 = vsel %vm2923, %v2916, %v2920
      %v2925 = vand.u32 2147483647, %v2758
      %vm2926 = vcmp.eq.f32.partialorder %v2925, 8.507059e+37
      %v2927 = vand.u32 %v2758, 2147483648
      %v2928 = vor.u32 1.1754944e-38, %v2927
      %v2929 = vsel %vm2926, %v2928, %v2924
      %v2930 = vmul.f32 1.0, %v2929
      %v2931 = vrcp.pop %v2759
      %v2932 = vmul.f32 %v2759, %v2931
      %v2933 = vsub.f32 1.0, %v2932
      %v2934 = vmul.f32 %v2931, %v2933
      %v2935 = vadd.f32 %v2931, %v2934
      %vm2936 = vweird.f32 %v2759
      %vm2937 = vweird.f32 %v2931
      %vm2938 = vmor %vm2936, %vm2937
      %v2939 = vsel %vm2938, %v2931, %v2935
      %v2940 = vand.u32 2147483647, %v2759
      %vm2941 = vcmp.eq.f32.partialorder %v2940, 8.507059e+37
      %v2942 = vand.u32 %v2759, 2147483648
      %v2943 = vor.u32 1.1754944e-38, %v2942
      %v2944 = vsel %vm2941, %v2943, %v2939
      %v2945 = vmul.f32 1.0, %v2944
      %v2946 = vrcp.pop %v2760
      %v2947 = vmul.f32 %v2760, %v2946
      %v2948 = vsub.f32 1.0, %v2947
      %v2949 = vmul.f32 %v2946, %v2948
      %v2950 = vadd.f32 %v2946, %v2949
      %vm2951 = vweird.f32 %v2760
      %vm2952 = vweird.f32 %v2946
      %vm2953 = vmor %vm2951, %vm2952
      %v2954 = vsel %vm2953, %v2946, %v2950
      %v2955 = vand.u32 2147483647, %v2760
      %vm2956 = vcmp.eq.f32.partialorder %v2955, 8.507059e+37
      %v2957 = vand.u32 %v2760, 2147483648
      %v2958 = vor.u32 1.1754944e-38, %v2957
      %v2959 = vsel %vm2956, %v2958, %v2954
      %v2960 = vmul.f32 1.0, %v2959
      %v2961 = vrcp.pop %v2761
      %v2962 = vmul.f32 %v2761, %v2961
      %v2963 = vsub.f32 1.0, %v2962
      %v2964 = vmul.f32 %v2961, %v2963
      %v2965 = vadd.f32 %v2961, %v2964
      %vm2966 = vweird.f32 %v2761
      %vm2967 = vweird.f32 %v2961
      %vm2968 = vmor %vm2966, %vm2967
      %v2969 = vsel %vm2968, %v2961, %v2965
      %v2970 = vand.u32 2147483647, %v2761
      %vm2971 = vcmp.eq.f32.partialorder %v2970, 8.507059e+37
      %v2972 = vand.u32 %v2761, 2147483648
      %v2973 = vor.u32 1.1754944e-38, %v2972
      %v2974 = vsel %vm2971, %v2973, %v2969
      %v2975 = vmul.f32 1.0, %v2974
      %v2976 = vrcp.pop %v2762
      %v2977 = vmul.f32 %v2762, %v2976
      %v2978 = vsub.f32 1.0, %v2977
      %v2979 = vmul.f32 %v2976, %v2978
      %v2980 = vadd.f32 %v2976, %v2979
      %vm2981 = vweird.f32 %v2762
      %vm2982 = vweird.f32 %v2976
      %vm2983 = vmor %vm2981, %vm2982
      %v2984 = vsel %vm2983, %v2976, %v2980
      %v2985 = vand.u32 2147483647, %v2762
      %vm2986 = vcmp.eq.f32.partialorder %v2985, 8.507059e+37
      %v2987 = vand.u32 %v2762, 2147483648
      %v2988 = vor.u32 1.1754944e-38, %v2987
      %v2989 = vsel %vm2986, %v2988, %v2984
      %v2990 = vmul.f32 1.0, %v2989
      %v2991 = vrcp.pop %v2763
      %v2992 = vmul.f32 %v2763, %v2991
      %v2993 = vsub.f32 1.0, %v2992
      %v2994 = vmul.f32 %v2991, %v2993
      %v2995 = vadd.f32 %v2991, %v2994
      %vm2996 = vweird.f32 %v2763
      %vm2997 = vweird.f32 %v2991
      %vm2998 = vmor %vm2996, %vm2997
      %v2999 = vsel %vm2998, %v2991, %v2995
      %v3000 = vand.u32 2147483647, %v2763
      %vm3001 = vcmp.eq.f32.partialorder %v3000, 8.507059e+37
      %v3002 = vand.u32 %v2763, 2147483648
      %v3003 = vor.u32 1.1754944e-38, %v3002
      %v3004 = vsel %vm3001, %v3003, %v2999
      %v3005 = vmul.f32 1.0, %v3004
      %v3006 = vrcp.pop %v2764
      %v3007 = vmul.f32 %v2764, %v3006
      %v3008 = vsub.f32 1.0, %v3007
      %v3009 = vmul.f32 %v3006, %v3008
      %v3010 = vadd.f32 %v3006, %v3009
      %vm3011 = vweird.f32 %v2764
      %vm3012 = vweird.f32 %v3006
      %vm3013 = vmor %vm3011, %vm3012
      %v3014 = vsel %vm3013, %v3006, %v3010
      %v3015 = vand.u32 2147483647, %v2764
      %vm3016 = vcmp.eq.f32.partialorder %v3015, 8.507059e+37
      %v3017 = vand.u32 %v2764, 2147483648
      %v3018 = vor.u32 1.1754944e-38, %v3017
      %v3019 = vsel %vm3016, %v3018, %v3014
      %v3020 = vmul.f32 1.0, %v3019
      %v3021 = vrcp.pop %v2765
      %v3022 = vmul.f32 %v2765, %v3021
      %v3023 = vsub.f32 1.0, %v3022
      %v3024 = vmul.f32 %v3021, %v3023
      %v3025 = vadd.f32 %v3021, %v3024
      %vm3026 = vweird.f32 %v2765
      %vm3027 = vweird.f32 %v3021
      %vm3028 = vmor %vm3026, %vm3027
      %v3029 = vsel %vm3028, %v3021, %v3025
      %v3030 = vand.u32 2147483647, %v2765
      %vm3031 = vcmp.eq.f32.partialorder %v3030, 8.507059e+37
      %v3032 = vand.u32 %v2765, 2147483648
      %v3033 = vor.u32 1.1754944e-38, %v3032
      %v3034 = vsel %vm3031, %v3033, %v3029
      %v3035 = vmul.f32 1.0, %v3034
      %v3036 = vrcp.pop %v2766
      %v3037 = vmul.f32 %v2766, %v3036
      %v3038 = vsub.f32 1.0, %v3037
      %v3039 = vmul.f32 %v3036, %v3038
      %v3040 = vadd.f32 %v3036, %v3039
      %vm3041 = vweird.f32 %v2766
      %vm3042 = vweird.f32 %v3036
      %vm3043 = vmor %vm3041, %vm3042
      %v3044 = vsel %vm3043, %v3036, %v3040
      %v3045 = vand.u32 2147483647, %v2766
      %vm3046 = vcmp.eq.f32.partialorder %v3045, 8.507059e+37
      %v3047 = vand.u32 %v2766, 2147483648
      %v3048 = vor.u32 1.1754944e-38, %v3047
      %v3049 = vsel %vm3046, %v3048, %v3044
      %v3050 = vmul.f32 1.0, %v3049
      %v3051 = vrcp.pop %v2767
      %v3052 = vmul.f32 %v2767, %v3051
      %v3053 = vsub.f32 1.0, %v3052
      %v3054 = vmul.f32 %v3051, %v3053
      %v3055 = vadd.f32 %v3051, %v3054
      %vm3056 = vweird.f32 %v2767
      %vm3057 = vweird.f32 %v3051
      %vm3058 = vmor %vm3056, %vm3057
      %v3059 = vsel %vm3058, %v3051, %v3055
      %v3060 = vand.u32 2147483647, %v2767
      %vm3061 = vcmp.eq.f32.partialorder %v3060, 8.507059e+37
      %v3062 = vand.u32 %v2767, 2147483648
      %v3063 = vor.u32 1.1754944e-38, %v3062
      %v3064 = vsel %vm3061, %v3063, %v3059
      %v3065 = vmul.f32 1.0, %v3064
      %v3066 = vrcp.pop %v2768
      %v3067 = vmul.f32 %v2768, %v3066
      %v3068 = vsub.f32 1.0, %v3067
      %v3069 = vmul.f32 %v3066, %v3068
      %v3070 = vadd.f32 %v3066, %v3069
      %vm3071 = vweird.f32 %v2768
      %vm3072 = vweird.f32 %v3066
      %vm3073 = vmor %vm3071, %vm3072
      %v3074 = vsel %vm3073, %v3066, %v3070
      %v3075 = vand.u32 2147483647, %v2768
      %vm3076 = vcmp.eq.f32.partialorder %v3075, 8.507059e+37
      %v3077 = vand.u32 %v2768, 2147483648
      %v3078 = vor.u32 1.1754944e-38, %v3077
      %v3079 = vsel %vm3076, %v3078, %v3074
      %v3080 = vmul.f32 1.0, %v3079
      %v3081 = vrcp.pop %v2769
      %v3082 = vmul.f32 %v2769, %v3081
      %v3083 = vsub.f32 1.0, %v3082
      %v3084 = vmul.f32 %v3081, %v3083
      %v3085 = vadd.f32 %v3081, %v3084
      %vm3086 = vweird.f32 %v2769
      %vm3087 = vweird.f32 %v3081
      %vm3088 = vmor %vm3086, %vm3087
      %v3089 = vsel %vm3088, %v3081, %v3085
      %v3090 = vand.u32 2147483647, %v2769
      %vm3091 = vcmp.eq.f32.partialorder %v3090, 8.507059e+37
      %v3092 = vand.u32 %v2769, 2147483648
      %v3093 = vor.u32 1.1754944e-38, %v3092
      %v3094 = vsel %vm3091, %v3093, %v3089
      %v3095 = vmul.f32 1.0, %v3094
      %v3096 = vrcp.pop %v2770
      %v3097 = vmul.f32 %v2770, %v3096
      %v3098 = vsub.f32 1.0, %v3097
      %v3099 = vmul.f32 %v3096, %v3098
      %v3100 = vadd.f32 %v3096, %v3099
      %vm3101 = vweird.f32 %v2770
      %vm3102 = vweird.f32 %v3096
      %vm3103 = vmor %vm3101, %vm3102
      %v3104 = vsel %vm3103, %v3096, %v3100
      %v3105 = vand.u32 2147483647, %v2770
      %vm3106 = vcmp.eq.f32.partialorder %v3105, 8.507059e+37
      %v3107 = vand.u32 %v2770, 2147483648
      %v3108 = vor.u32 1.1754944e-38, %v3107
      %v3109 = vsel %vm3106, %v3108, %v3104
      %v3110 = vmul.f32 1.0, %v3109
      %v3111 = vrcp.pop %v2771
      %v3112 = vmul.f32 %v2771, %v3111
      %v3113 = vsub.f32 1.0, %v3112
      %v3114 = vmul.f32 %v3111, %v3113
      %v3115 = vadd.f32 %v3111, %v3114
      %vm3116 = vweird.f32 %v2771
      %vm3117 = vweird.f32 %v3111
      %vm3118 = vmor %vm3116, %vm3117
      %v3119 = vsel %vm3118, %v3111, %v3115
      %v3120 = vand.u32 2147483647, %v2771
      %vm3121 = vcmp.eq.f32.partialorder %v3120, 8.507059e+37
      %v3122 = vand.u32 %v2771, 2147483648
      %v3123 = vor.u32 1.1754944e-38, %v3122
      %v3124 = vsel %vm3121, %v3123, %v3119
      %v3125 = vmul.f32 1.0, %v3124
      %v3126 = vrcp.pop %v2772
      %v3127 = vmul.f32 %v2772, %v3126
      %v3128 = vsub.f32 1.0, %v3127
      %v3129 = vmul.f32 %v3126, %v3128
      %v3130 = vadd.f32 %v3126, %v3129
      %vm3131 = vweird.f32 %v2772
      %vm3132 = vweird.f32 %v3126
      %vm3133 = vmor %vm3131, %vm3132
      %v3134 = vsel %vm3133, %v3126, %v3130
      %v3135 = vand.u32 2147483647, %v2772
      %vm3136 = vcmp.eq.f32.partialorder %v3135, 8.507059e+37
      %v3137 = vand.u32 %v2772, 2147483648
      %v3138 = vor.u32 1.1754944e-38, %v3137
      %v3139 = vsel %vm3136, %v3138, %v3134
      %v3140 = vmul.f32 1.0, %v3139
      %v3141 = vrcp.pop %v2773
      %v3142 = vmul.f32 %v2773, %v3141
      %v3143 = vsub.f32 1.0, %v3142
      %v3144 = vmul.f32 %v3141, %v3143
      %v3145 = vadd.f32 %v3141, %v3144
      %vm3146 = vweird.f32 %v2773
      %vm3147 = vweird.f32 %v3141
      %vm3148 = vmor %vm3146, %vm3147
      %v3149 = vsel %vm3148, %v3141, %v3145
      %v3150 = vand.u32 2147483647, %v2773
      %vm3151 = vcmp.eq.f32.partialorder %v3150, 8.507059e+37
      %v3152 = vand.u32 %v2773, 2147483648
      %v3153 = vor.u32 1.1754944e-38, %v3152
      %v3154 = vsel %vm3151, %v3153, %v3149
      %v3155 = vmul.f32 1.0, %v3154
      %v3156 = vrcp.pop %v2774
      %v3157 = vmul.f32 %v2774, %v3156
      %v3158 = vsub.f32 1.0, %v3157
      %v3159 = vmul.f32 %v3156, %v3158
      %v3160 = vadd.f32 %v3156, %v3159
      %vm3161 = vweird.f32 %v2774
      %vm3162 = vweird.f32 %v3156
      %vm3163 = vmor %vm3161, %vm3162
      %v3164 = vsel %vm3163, %v3156, %v3160
      %v3165 = vand.u32 2147483647, %v2774
      %vm3166 = vcmp.eq.f32.partialorder %v3165, 8.507059e+37
      %v3167 = vand.u32 %v2774, 2147483648
      %v3168 = vor.u32 1.1754944e-38, %v3167
      %v3169 = vsel %vm3166, %v3168, %v3164
      %v3170 = vmul.f32 1.0, %v3169
      %v3171 = vrcp.pop %v2775
      %v3172 = vmul.f32 %v2775, %v3171
      %v3173 = vsub.f32 1.0, %v3172
      %v3174 = vmul.f32 %v3171, %v3173
      %v3175 = vadd.f32 %v3171, %v3174
      %vm3176 = vweird.f32 %v2775
      %vm3177 = vweird.f32 %v3171
      %vm3178 = vmor %vm3176, %vm3177
      %v3179 = vsel %vm3178, %v3171, %v3175
      %v3180 = vand.u32 2147483647, %v2775
      %vm3181 = vcmp.eq.f32.partialorder %v3180, 8.507059e+37
      %v3182 = vand.u32 %v2775, 2147483648
      %v3183 = vor.u32 1.1754944e-38, %v3182
      %v3184 = vsel %vm3181, %v3183, %v3179
      %v3185 = vmul.f32 1.0, %v3184
      %v3186 = vrcp.pop %v2776
      %v3187 = vmul.f32 %v2776, %v3186
      %v3188 = vsub.f32 1.0, %v3187
      %v3189 = vmul.f32 %v3186, %v3188
      %v3190 = vadd.f32 %v3186, %v3189
      %vm3191 = vweird.f32 %v2776
      %vm3192 = vweird.f32 %v3186
      %vm3193 = vmor %vm3191, %vm3192
      %v3194 = vsel %vm3193, %v3186, %v3190
      %v3195 = vand.u32 2147483647, %v2776
      %vm3196 = vcmp.eq.f32.partialorder %v3195, 8.507059e+37
      %v3197 = vand.u32 %v2776, 2147483648
      %v3198 = vor.u32 1.1754944e-38, %v3197
      %v3199 = vsel %vm3196, %v3198, %v3194
      %v3200 = vmul.f32 1.0, %v3199
      %v3201 = vrcp.pop %v2777
      %v3202 = vmul.f32 %v2777, %v3201
      %v3203 = vsub.f32 1.0, %v3202
      %v3204 = vmul.f32 %v3201, %v3203
      %v3205 = vadd.f32 %v3201, %v3204
      %vm3206 = vweird.f32 %v2777
      %vm3207 = vweird.f32 %v3201
      %vm3208 = vmor %vm3206, %vm3207
      %v3209 = vsel %vm3208, %v3201, %v3205
      %v3210 = vand.u32 2147483647, %v2777
      %vm3211 = vcmp.eq.f32.partialorder %v3210, 8.507059e+37
      %v3212 = vand.u32 %v2777, 2147483648
      %v3213 = vor.u32 1.1754944e-38, %v3212
      %v3214 = vsel %vm3211, %v3213, %v3209
      %v3215 = vmul.f32 1.0, %v3214
      %v3216 = vrcp.pop %v2778
      %v3217 = vmul.f32 %v2778, %v3216
      %v3218 = vsub.f32 1.0, %v3217
      %v3219 = vmul.f32 %v3216, %v3218
      %v3220 = vadd.f32 %v3216, %v3219
      %vm3221 = vweird.f32 %v2778
      %vm3222 = vweird.f32 %v3216
      %vm3223 = vmor %vm3221, %vm3222
      %v3224 = vsel %vm3223, %v3216, %v3220
      %v3225 = vand.u32 2147483647, %v2778
      %vm3226 = vcmp.eq.f32.partialorder %v3225, 8.507059e+37
      %v3227 = vand.u32 %v2778, 2147483648
      %v3228 = vor.u32 1.1754944e-38, %v3227
      %v3229 = vsel %vm3226, %v3228, %v3224
      %v3230 = vmul.f32 1.0, %v3229
      %v3231 = vrcp.pop %v2779
      %v3232 = vmul.f32 %v2779, %v3231
      %v3233 = vsub.f32 1.0, %v3232
      %v3234 = vmul.f32 %v3231, %v3233
      %v3235 = vadd.f32 %v3231, %v3234
      %vm3236 = vweird.f32 %v2779
      %vm3237 = vweird.f32 %v3231
      %vm3238 = vmor %vm3236, %vm3237
      %v3239 = vsel %vm3238, %v3231, %v3235
      %v3240 = vand.u32 2147483647, %v2779
      %vm3241 = vcmp.eq.f32.partialorder %v3240, 8.507059e+37
      %v3242 = vand.u32 %v2779, 2147483648
      %v3243 = vor.u32 1.1754944e-38, %v3242
      %v3244 = vsel %vm3241, %v3243, %v3239
      %v3245 = vmul.f32 1.0, %v3244
      %v3246 = vrcp.pop %v2780
      %v3247 = vmul.f32 %v2780, %v3246
      %v3248 = vsub.f32 1.0, %v3247
      %v3249 = vmul.f32 %v3246, %v3248
      %v3250 = vadd.f32 %v3246, %v3249
      %vm3251 = vweird.f32 %v2780
      %vm3252 = vweird.f32 %v3246
      %vm3253 = vmor %vm3251, %vm3252
      %v3254 = vsel %vm3253, %v3246, %v3250
      %v3255 = vand.u32 2147483647, %v2780
      %vm3256 = vcmp.eq.f32.partialorder %v3255, 8.507059e+37
      %v3257 = vand.u32 %v2780, 2147483648
      %v3258 = vor.u32 1.1754944e-38, %v3257
      %v3259 = vsel %vm3256, %v3258, %v3254
      %v3260 = vmul.f32 1.0, %v3259
      %vm3261 = vcmask 64512
      %3262 = vst.msk [vmem:[%s248] sm:$0xff] %vm3261, %v2795
      %3263 = vst.msk [vmem:[%s248 + $0x8] sm:$0xff] %vm3261, %v2810
      %3264 = vst.msk [vmem:[%s248 + $0x10] sm:$0xff] %vm3261, %v2825
      %3265 = vst.msk [vmem:[%s248 + $0x18] sm:$0xff] %vm3261, %v2840
      %3266 = vst.msk [vmem:[%s248 + $0x20] sm:$0xff] %vm3261, %v2855
      %3267 = vst.msk [vmem:[%s248 + $0x28] sm:$0xff] %vm3261, %v2870
      %3268 = vst.msk [vmem:[%s248 + $0x30] sm:$0xff] %vm3261, %v2885
      %3269 = vst.msk [vmem:[%s248 + $0x38] sm:$0xff] %vm3261, %v2900
      %3270 = vst.msk [vmem:[%s248 + $0x40] sm:$0xff] %vm3261, %v2915
      %3271 = vst.msk [vmem:[%s248 + $0x48] sm:$0xff] %vm3261, %v2930
      %3272 = vst.msk [vmem:[%s248 + $0x50] sm:$0xff] %vm3261, %v2945
      %3273 = vst.msk [vmem:[%s248 + $0x58] sm:$0xff] %vm3261, %v2960
      %3274 = vst.msk [vmem:[%s248 + $0x60] sm:$0xff] %vm3261, %v2975
      %3275 = vst.msk [vmem:[%s248 + $0x68] sm:$0xff] %vm3261, %v2990
      %3276 = vst.msk [vmem:[%s248 + $0x70] sm:$0xff] %vm3261, %v3005
      %3277 = vst.msk [vmem:[%s248 + $0x78] sm:$0xff] %vm3261, %v3020
      %3278 = vst.msk [vmem:[%s248 + $0x80] sm:$0xff] %vm3261, %v3035
      %3279 = vst.msk [vmem:[%s248 + $0x88] sm:$0xff] %vm3261, %v3050
      %3280 = vst.msk [vmem:[%s248 + $0x90] sm:$0xff] %vm3261, %v3065
      %3281 = vst.msk [vmem:[%s248 + $0x98] sm:$0xff] %vm3261, %v3080
      %3282 = vst.msk [vmem:[%s248 + $0xa0] sm:$0xff] %vm3261, %v3095
      %3283 = vst.msk [vmem:[%s248 + $0xa8] sm:$0xff] %vm3261, %v3110
      %3284 = vst.msk [vmem:[%s248 + $0xb0] sm:$0xff] %vm3261, %v3125
      %3285 = vst.msk [vmem:[%s248 + $0xb8] sm:$0xff] %vm3261, %v3140
      %3286 = vst.msk [vmem:[%s248 + $0xc0] sm:$0xff] %vm3261, %v3155
      %3287 = vst.msk [vmem:[%s248 + $0xc8] sm:$0xff] %vm3261, %v3170
      %3288 = vst.msk [vmem:[%s248 + $0xd0] sm:$0xff] %vm3261, %v3185
      %3289 = vst.msk [vmem:[%s248 + $0xd8] sm:$0xff] %vm3261, %v3200
      %3290 = vst.msk [vmem:[%s248 + $0xe0] sm:$0xff] %vm3261, %v3215
      %3291 = vst.msk [vmem:[%s248 + $0xe8] sm:$0xff] %vm3261, %v3230
      %3292 = vst.msk [vmem:[%s248 + $0xf0] sm:$0xff] %vm3261, %v3245
      %3293 = vst.msk [vmem:[%s248 + $0xf8] sm:$0xff] %vm3261, %v3260
      %s3294 = smul.u32 32, %s16
      %p3295 = scmp.lt.s32.totalorder %s3294, 63
      %s3296 = scalar_select %p3295, %s3294, 63
      %s3297 = smul.addr %s3296, 8
      %s3298 = scalar_lea.vmem %s5, %s3297
      // Predicated region
      $region41: #{tpu_custom_call.1} parent=39 // pred_check
        %p3299 = pneg %p149
      $region42: #{tpu_custom_call.1} parent=39 // pred_check_branch
        %3301 = sbr.rel (%p3299) target = $region44
      $region43: #{tpu_custom_call.1} parent=39 // pred_region
        %s3302 = smul.u32 32, %s16
      $region44: #{tpu_custom_call.1} parent=39 // pred_fallthru
        _
    $region40: #{tpu_custom_call.1} parent=5 // pred_fallthru
      _
    %p3303 = scmp.le.s32.totalorder 2, %s11
    // Predicated region
    $region45: #{tpu_custom_call.1} parent=5 // pred_check
      %p3304 = pneg %p3303
    $region46: #{tpu_custom_call.1} parent=5 // pred_check_branch
      %3306 = sbr.rel (%p3304) target = $region48
    $region47: #{tpu_custom_call.1} parent=5 // pred_region
      %s3307 = ssub.s32 %s11, 2
      // Predicated region
      $region49: #{tpu_custom_call.1} parent=47 // pred_check
        %p3308 = pneg %p155
      $region50: #{tpu_custom_call.1} parent=47 // pred_check_branch
        %3310 = sbr.rel (%p3308) target = $region52
      $region51: #{tpu_custom_call.1} parent=47 // pred_region
        %s3311 = smul.u32 32, %s17
        %p3312 = scmp.lt.s32.totalorder %s3311, 63
        %s3313 = scalar_select %p3312, %s3311, 63
        %s3314 = smul.addr %s3313, 8
        %s3315 = scalar_lea.vmem %s5, %s3314
      $region52: #{tpu_custom_call.1} parent=47 // pred_fallthru
        _
    $region48: #{tpu_custom_call.1} parent=5 // pred_fallthru
      _
  $region6: #{tpu_custom_call.1} parent=0 // loop_footer
    %s15 = sadd.s32 1, %s11
  $region7: #{tpu_custom_call.1} parent=0 // loop_footer_branch
    %10 = sbr.rel target = $region3
  $region8: #{tpu_custom_call.1} parent=0 // loop_exit
    _

</llo_original>
